<compile_context>
chip_gen: v6e
topology: v6e:2x2x1
jax: 0.10.0
libtpu: 0.0.40
codegen_flags: <defaults>
</compile_context>

<pallas_src>
import functools

import jax
import jax.numpy as jnp
from jax.experimental import pallas as pl
from jax.experimental.pallas import tpu as pltpu


def _round_up(x, m):
    return ((x + m - 1) // m) * m


# ----------------------------------------------------------------------------
# Fused bottleneck kernel (one image per grid step)
# ----------------------------------------------------------------------------
def _fused_bottleneck_kernel(H, W, Wp, planes, compute_dtype,
                             x_ref, w1_ref, w2_ref, w3_ref,
                             b1_ref, b2_ref, b3_ref,
                             o_ref, xpad_ref, col_ref):
    # x_ref:   (1, H*W, Cin)       compute_dtype  (Cin == Cout == 4*planes)
    # w1_ref:  (Cin, planes)       compute_dtype  (BN1 scale folded in)
    # w2_ref:  (9*planes, planes)  compute_dtype  (rows tap-major, BN2 scale folded)
    # w3_ref:  (planes, Cout)      compute_dtype  (BN3 scale folded in)
    # b*_ref:  (1, C)              f32            (folded BatchNorm biases)
    # o_ref:   (1, H*W, Cout)      compute_dtype
    # xpad_ref:(H+4, Wp, planes)   compute_dtype  zero-halo padded conv2 input
    # col_ref: (H*Wp, 9*planes)    compute_dtype  im2col patch (one big matmul)
    Hp = H + 4
    M = H * W
    Mw = H * Wp  # "wide" row count keeps the padded width; junk cols dropped later

    x2d = x_ref[0]                                         # (M, Cin), bf16

    # ---- conv1 (1x1) + bn1 + relu (scale pre-folded into w1) ----------------
    h1 = jnp.dot(x2d, w1_ref[...], preferred_element_type=jnp.float32)
    h1 = jnp.maximum(h1 + b1_ref[...], 0.0)

    # ---- zero only the halo, then write conv1 output into the interior ------
    # Halo = top 2 rows, bottom 2 rows, trailing pad columns of the data rows.
    # The interior data region is fully overwritten every grid step.
    xpad_ref[pl.ds(0, 2), :, :] = jnp.zeros((2, Wp, planes), compute_dtype)
    xpad_ref[pl.ds(H + 2, 2), :, :] = jnp.zeros((2, Wp, planes), compute_dtype)
    xpad_ref[pl.ds(2, H), pl.ds(W, Wp - W), :] = jnp.zeros(
        (H, Wp - W, planes), compute_dtype)
    xpad_ref[pl.ds(2, H), pl.ds(0, W), :] = (
        h1.astype(compute_dtype).reshape(H, W, planes))

    # ---- conv2 (3x3, stride=1, pad=1) as ONE im2col matmul ------------------
    # Flatten the padded buffer once; each tap (ky,kx) is a *static* row-offset
    # slice copied (no RMW) into column block t = ky*3+kx of the im2col patch,
    # then a single MXU matmul with K = 9*planes (f32 accumulation on the MXU).
    xflat = xpad_ref[...].reshape(Hp * Wp, planes)
    for t in range(9):
        ky, kx = divmod(t, 3)
        off = (ky + 1) * Wp + kx - 1                       # static, >= Wp - 1
        col_ref[:, t * planes:(t + 1) * planes] = xflat[off:off + Mw, :]

    h2 = jnp.dot(col_ref[...], w2_ref[...], preferred_element_type=jnp.float32)
    # Cast to bf16 BEFORE dropping the junk padded-width columns (halves the
    # relayout bytes), then (H*Wp, planes) -> (H*W, planes).
    h2 = jnp.maximum(h2 + b2_ref[...], 0.0).astype(compute_dtype)
    h2 = h2.reshape(H, Wp, planes)[:, :W, :].reshape(M, planes)

    # ---- conv3 (1x1) + bn3 + residual + relu ---------------------------------
    h3 = jnp.dot(h2, w3_ref[...], preferred_element_type=jnp.float32)
    out = jnp.maximum(h3 + b3_ref[...] + x2d.astype(jnp.float32), 0.0)
    o_ref[0] = out.astype(o_ref.dtype)


# ----------------------------------------------------------------------------
# Wrappers
# ----------------------------------------------------------------------------
def _vmem_limit_bytes():
    # v5e/v6e: 128 MiB physical -> 64 MiB scoped; v7x: 64 MiB physical -> 32 MiB.
    try:
        cap = int(pltpu.get_tpu_info().vmem_capacity_bytes)
    except Exception:
        cap = 64 * 1024 * 1024
    return int(min(64 * 1024 * 1024, cap // 2))


def qsam_bottleneck_forward_nhwc(x_nhwc, p, *, compute_dtype=jnp.bfloat16):
    """Fused bottleneck, NHWC in / NHWC (compute_dtype) out — no transposes."""
    n, h, w, cin = x_nhwc.shape
    planes = p["w1"].shape[1]
    cout = p["w3"].shape[1]
    assert cin == cout, "stride=1 / downsample=None path requires Cin == 4*planes"

    # Padded conv2 width, rounded to a sublane multiple; skip the rounding when
    # the wide-row blow-up would exceed ~50% (e.g. W=7 layers).
    wp = _round_up(w + 2, 8)
    if wp * 2 > (w + 2) * 3:
        wp = w + 2

    # bf16 activation I/O (halves HBM traffic; matmuls still accumulate in f32).
    x2d = x_nhwc.reshape(n, h * w, cin).astype(compute_dtype)

    # Fold the BatchNorm scales into the conv weights host-side (convolution is
    # linear in the weights); only the folded biases remain in-kernel.
    w1 = (p["w1"].astype(jnp.float32) * p["s1"]).astype(compute_dtype)
    w2 = (p["w2"].astype(jnp.float32) * p["s2"].reshape(1, 1, 1, planes))
    w2 = w2.reshape(9 * planes, planes).astype(compute_dtype)
    w3 = (p["w3"].astype(jnp.float32) * p["s3"]).astype(compute_dtype)
    b1 = p["b1"].astype(jnp.float32)
    b2 = p["b2"].astype(jnp.float32)
    b3 = p["b3"].astype(jnp.float32)

    kernel = functools.partial(_fused_bottleneck_kernel, h, w, wp, planes,
                               compute_dtype)

    const2 = lambda i: (0, 0)       # weights / biases: resident, DMA'd once

    out = pl.pallas_call(
        kernel,
        out_shape=jax.ShapeDtypeStruct((n, h * w, cout), compute_dtype),
        grid_spec=pltpu.PrefetchScalarGridSpec(
            num_scalar_prefetch=0,
            grid=(n,),
            in_specs=[
                pl.BlockSpec((1, h * w, cin), lambda i: (i, 0, 0)),
                pl.BlockSpec((cin, planes), const2),
                pl.BlockSpec((9 * planes, planes), const2),
                pl.BlockSpec((planes, cout), const2),
                pl.BlockSpec((1, planes), const2),
                pl.BlockSpec((1, planes), const2),
                pl.BlockSpec((1, cout), const2),
            ],
            out_specs=pl.BlockSpec((1, h * w, cout), lambda i: (i, 0, 0)),
            scratch_shapes=[
                pltpu.VMEM((h + 4, wp, planes), compute_dtype),    # padded conv2 in
                pltpu.VMEM((h * wp, 9 * planes), compute_dtype),   # im2col patch
            ],
        ),
        compiler_params=pltpu.CompilerParams(
            dimension_semantics=("parallel",),            # megacore over batch
            vmem_limit_bytes=_vmem_limit_bytes(),
        ),
    )(x2d, w1, w2, w3, b1, b2, b3)
    return out.reshape(n, h, w, cout)


def qsam_bottleneck_forward(x_nchw, p, *, compute_dtype=jnp.bfloat16):
    """NCHW in / NCHW out (input dtype), matching the PyTorch module interface."""
    x = jnp.transpose(x_nchw, (0, 2, 3, 1))               # boundary transpose only
    out = qsam_bottleneck_forward_nhwc(x, p, compute_dtype=compute_dtype)
    return jnp.transpose(out, (0, 3, 1, 2)).astype(x_nchw.dtype)


# ----------------------------------------------------------------------------
# Deterministic parameter init (shapes implied by QSAMBottleneck.__init__)
# ----------------------------------------------------------------------------
def init_params(key, inplanes, planes, dtype=jnp.float32):
    ks = jax.random.split(key, 16)
    eps = 1e-5

    def bn_fold(kg, kb, km, kv, c):
        gamma = 1.0 + 0.1 * jax.random.normal(kg, (c,), dtype)
        beta = 0.1 * jax.random.normal(kb, (c,), dtype)
        mean = 0.1 * jax.random.normal(km, (c,), dtype)
        var = jnp.abs(jax.random.normal(kv, (c,), dtype)) + 0.5
        scale = gamma / jnp.sqrt(var + eps)
        bias = beta - mean * scale
        return scale.reshape(1, c), bias.reshape(1, c)

    p = {}
    # PyTorch OIHW 1x1 -> (Cin, Cout); 3x3 OIHW -> HWIO
    p["w1"] = 0.1 * jax.random.normal(ks[0], (inplanes, planes), dtype)
    p["w2"] = 0.1 * jax.random.normal(ks[1], (3, 3, planes, planes), dtype)
    p["w3"] = 0.1 * jax.random.normal(ks[2], (planes, planes * 4), dtype)
    p["s1"], p["b1"] = bn_fold(ks[3], ks[4], ks[5], ks[6], planes)
    p["s2"], p["b2"] = bn_fold(ks[7], ks[8], ks[9], ks[10], planes)
    p["s3"], p["b3"] = bn_fold(ks[11], ks[12], ks[13], ks[14], planes * 4)
    return p


# ----------------------------------------------------------------------------
# Pure-JAX f32 reference (sanity check)
# ----------------------------------------------------------------------------
def ref_forward(x_nchw, p):
    x = jnp.transpose(x_nchw, (0, 2, 3, 1))
    dn = ("NHWC", "HWIO", "NHWC")

    def conv(a, w, padding):
        return jax.lax.conv_general_dilated(a, w, (1, 1), padding,
                                            dimension_numbers=dn)

    def bn(a, s, b):
        return a * s.reshape(1, 1, 1, -1) + b.reshape(1, 1, 1, -1)

    out = jnp.maximum(bn(conv(x, p["w1"].reshape(1, 1, *p["w1"].shape), "VALID"),
                         p["s1"], p["b1"]), 0.0)
    out = jnp.maximum(bn(conv(out, p["w2"], "SAME"), p["s2"], p["b2"]), 0.0)
    out = bn(conv(out, p["w3"].reshape(1, 1, *p["w3"].shape), "VALID"),
             p["s3"], p["b3"]) + x
    out = jnp.maximum(out, 0.0)
    return jnp.transpose(out, (0, 3, 1, 2))


# ----------------------------------------------------------------------------
if __name__ == "__main__":
    key = jax.random.PRNGKey(0)
    k_x, k_p = jax.random.split(key)

    # Small config: inplanes must equal planes*4 (downsample=None, stride=1).
    inplanes, planes = 16, 4
    N, H, W = 2, 16, 16
    x = jax.random.normal(k_x, (N, inplanes, H, W), jnp.float32)   # NCHW input

    params = init_params(k_p, inplanes, planes)

    fwd = jax.jit(qsam_bottleneck_forward)
    out = jax.block_until_ready(fwd(x, params))

    ref = ref_forward(x, params)
    assert out.shape == (N, planes * 4, H, W), out.shape
    max_err = float(jnp.max(jnp.abs(out - ref)))
    # bf16 activation I/O (incl. the residual) bounds accuracy to ~1e-2.
    assert jnp.allclose(out, ref, atol=3e-2, rtol=3e-2), max_err

    print("KERNEL_OK")
</pallas_src>

<mosaic_0001>
module attributes {stable_mosaic.version = 11 : i64} {
  func.func @_fused_bottleneck_kernel(%arg0: i32, %arg1: memref<1x256x16xbf16, #tpu.memory_space<vmem>>, %arg2: memref<16x4xbf16, #tpu.memory_space<vmem>>, %arg3: memref<36x4xbf16, #tpu.memory_space<vmem>>, %arg4: memref<4x16xbf16, #tpu.memory_space<vmem>>, %arg5: memref<1x4xf32, #tpu.memory_space<vmem>>, %arg6: memref<1x4xf32, #tpu.memory_space<vmem>>, %arg7: memref<1x16xf32, #tpu.memory_space<vmem>>, %arg8: memref<1x256x16xbf16, #tpu.memory_space<vmem>>, %arg9: memref<20x24x4xbf16, #tpu.memory_space<vmem>>, %arg10: memref<384x36xbf16, #tpu.memory_space<vmem>>) attributes {dimension_semantics = [#tpu.dimension_semantics<parallel>], iteration_bounds = array<i64: 2>, scalar_prefetch = 0 : i64, scratch_operands = 2 : i64, tpu.core_type = #tpu.core_type<tc>, window_params = [{transform_indices = @transform_0, window_bounds = array<i64: 1, 256, 16>}, {pipeline_mode = #tpu.pipeline_mode<synchronous>, transform_indices = @transform_1, window_bounds = array<i64: 16, 4>}, {pipeline_mode = #tpu.pipeline_mode<synchronous>, transform_indices = @transform_2, window_bounds = array<i64: 36, 4>}, {pipeline_mode = #tpu.pipeline_mode<synchronous>, transform_indices = @transform_3, window_bounds = array<i64: 4, 16>}, {pipeline_mode = #tpu.pipeline_mode<synchronous>, transform_indices = @transform_4, window_bounds = array<i64: 1, 4>}, {pipeline_mode = #tpu.pipeline_mode<synchronous>, transform_indices = @transform_5, window_bounds = array<i64: 1, 4>}, {pipeline_mode = #tpu.pipeline_mode<synchronous>, transform_indices = @transform_6, window_bounds = array<i64: 1, 16>}, {transform_indices = @transform_7, window_bounds = array<i64: 1, 256, 16>}]} {
    %c0 = arith.constant 0 : index
    %c0_0 = arith.constant 0 : index
    %c0_1 = arith.constant 0 : index
    %0 = vector.load %arg1[%c0, %c0_0, %c0_1] : memref<1x256x16xbf16, #tpu.memory_space<vmem>>, vector<1x256x16xbf16>
    %1 = vector.shape_cast %0 : vector<1x256x16xbf16> to vector<256x16xbf16>
    %c0_2 = arith.constant 0 : index
    %c0_3 = arith.constant 0 : index
    %2 = vector.load %arg2[%c0_2, %c0_3] : memref<16x4xbf16, #tpu.memory_space<vmem>>, vector<16x4xbf16>
    %cst = arith.constant dense<0.000000e+00> : vector<256x4xf32>
    %3 = tpu.matmul %1, %2, %cst {dimension_numbers = #tpu.dot_dimension_numbers<[1], [0], [0], [1], [0, 0, 1, 1], [], []>} : vector<256x16xbf16>, vector<16x4xbf16>, vector<256x4xf32> -> vector<256x4xf32>
    %c0_4 = arith.constant 0 : index
    %c0_5 = arith.constant 0 : index
    %4 = vector.load %arg5[%c0_4, %c0_5] : memref<1x4xf32, #tpu.memory_space<vmem>>, vector<1x4xf32>
    %5 = vector.broadcast %4 : vector<1x4xf32> to vector<256x4xf32>
    %6 = arith.addf %3, %5 : vector<256x4xf32>
    %cst_6 = arith.constant 0.000000e+00 : f32
    %7 = vector.broadcast %cst_6 : f32 to vector<256x4xf32>
    %8 = arith.maximumf %6, %7 : vector<256x4xf32>
    %cst_7 = arith.constant 0.000000e+00 : bf16
    %9 = vector.broadcast %cst_7 : bf16 to vector<2x24x4xbf16>
    %c0_8 = arith.constant 0 : index
    %c0_9 = arith.constant 0 : index
    %c0_10 = arith.constant 0 : index
    %10 = vector.load %arg9[%c0_8, %c0_9, %c0_10] : memref<20x24x4xbf16, #tpu.memory_space<vmem>>, vector<2x24x4xbf16>
    tpu.vector_store %arg9[%c0_8, %c0_9, %c0_10], %9 {strides = array<i32>} : memref<20x24x4xbf16, #tpu.memory_space<vmem>>, vector<2x24x4xbf16>,
    %cst_11 = arith.constant 0.000000e+00 : bf16
    %11 = vector.broadcast %cst_11 : bf16 to vector<2x24x4xbf16>
    %c18 = arith.constant 18 : index
    %c0_12 = arith.constant 0 : index
    %c0_13 = arith.constant 0 : index
    %12 = vector.load %arg9[%c18, %c0_12, %c0_13] : memref<20x24x4xbf16, #tpu.memory_space<vmem>>, vector<2x24x4xbf16>
    tpu.vector_store %arg9[%c18, %c0_12, %c0_13], %11 {strides = array<i32>} : memref<20x24x4xbf16, #tpu.memory_space<vmem>>, vector<2x24x4xbf16>,
    %cst_14 = arith.constant 0.000000e+00 : bf16
    %13 = vector.broadcast %cst_14 : bf16 to vector<16x8x4xbf16>
    %c2 = arith.constant 2 : index
    %c16 = arith.constant 16 : index
    %c0_15 = arith.constant 0 : index
    %14 = vector.load %arg9[%c2, %c16, %c0_15] : memref<20x24x4xbf16, #tpu.memory_space<vmem>>, vector<16x8x4xbf16>
    tpu.vector_store %arg9[%c2, %c16, %c0_15], %13 {strides = array<i32>} : memref<20x24x4xbf16, #tpu.memory_space<vmem>>, vector<16x8x4xbf16>,
    %15 = arith.truncf %8 : vector<256x4xf32> to vector<256x4xbf16>
    %16 = vector.shape_cast %15 : vector<256x4xbf16> to vector<16x16x4xbf16>
    %c2_16 = arith.constant 2 : index
    %c0_17 = arith.constant 0 : index
    %c0_18 = arith.constant 0 : index
    %17 = vector.load %arg9[%c2_16, %c0_17, %c0_18] : memref<20x24x4xbf16, #tpu.memory_space<vmem>>, vector<16x16x4xbf16>
    tpu.vector_store %arg9[%c2_16, %c0_17, %c0_18], %16 {strides = array<i32>} : memref<20x24x4xbf16, #tpu.memory_space<vmem>>, vector<16x16x4xbf16>,
    %c0_19 = arith.constant 0 : index
    %c0_20 = arith.constant 0 : index
    %c0_21 = arith.constant 0 : index
    %18 = vector.load %arg9[%c0_19, %c0_20, %c0_21] : memref<20x24x4xbf16, #tpu.memory_space<vmem>>, vector<20x24x4xbf16>
    %19 = vector.shape_cast %18 : vector<20x24x4xbf16> to vector<480x4xbf16>
    %20 = vector.extract_strided_slice %19 {offsets = [23, 0], sizes = [384, 4], strides = [1, 1]} : vector<480x4xbf16> to vector<384x4xbf16>
    %c0_22 = arith.constant 0 : index
    %c0_23 = arith.constant 0 : index
    %21 = vector.load %arg10[%c0_22, %c0_23] : memref<384x36xbf16, #tpu.memory_space<vmem>>, vector<384x4xbf16>
    tpu.vector_store %arg10[%c0_22, %c0_23], %20 {strides = array<i32>} : memref<384x36xbf16, #tpu.memory_space<vmem>>, vector<384x4xbf16>,
    %22 = vector.extract_strided_slice %19 {offsets = [24, 0], sizes = [384, 4], strides = [1, 1]} : vector<480x4xbf16> to vector<384x4xbf16>
    %c0_24 = arith.constant 0 : index
    %c4 = arith.constant 4 : index
    %23 = vector.load %arg10[%c0_24, %c4] : memref<384x36xbf16, #tpu.memory_space<vmem>>, vector<384x4xbf16>
    tpu.vector_store %arg10[%c0_24, %c4], %22 {strides = array<i32>} : memref<384x36xbf16, #tpu.memory_space<vmem>>, vector<384x4xbf16>,
    %24 = vector.extract_strided_slice %19 {offsets = [25, 0], sizes = [384, 4], strides = [1, 1]} : vector<480x4xbf16> to vector<384x4xbf16>
    %c0_25 = arith.constant 0 : index
    %c8 = arith.constant 8 : index
    %25 = vector.load %arg10[%c0_25, %c8] : memref<384x36xbf16, #tpu.memory_space<vmem>>, vector<384x4xbf16>
    tpu.vector_store %arg10[%c0_25, %c8], %24 {strides = array<i32>} : memref<384x36xbf16, #tpu.memory_space<vmem>>, vector<384x4xbf16>,
    %26 = vector.extract_strided_slice %19 {offsets = [47, 0], sizes = [384, 4], strides = [1, 1]} : vector<480x4xbf16> to vector<384x4xbf16>
    %c0_26 = arith.constant 0 : index
    %c12 = arith.constant 12 : index
    %27 = vector.load %arg10[%c0_26, %c12] : memref<384x36xbf16, #tpu.memory_space<vmem>>, vector<384x4xbf16>
    tpu.vector_store %arg10[%c0_26, %c12], %26 {strides = array<i32>} : memref<384x36xbf16, #tpu.memory_space<vmem>>, vector<384x4xbf16>,
    %28 = vector.extract_strided_slice %19 {offsets = [48, 0], sizes = [384, 4], strides = [1, 1]} : vector<480x4xbf16> to vector<384x4xbf16>
    %c0_27 = arith.constant 0 : index
    %c16_28 = arith.constant 16 : index
    %29 = vector.load %arg10[%c0_27, %c16_28] : memref<384x36xbf16, #tpu.memory_space<vmem>>, vector<384x4xbf16>
    tpu.vector_store %arg10[%c0_27, %c16_28], %28 {strides = array<i32>} : memref<384x36xbf16, #tpu.memory_space<vmem>>, vector<384x4xbf16>,
    %30 = vector.extract_strided_slice %19 {offsets = [49, 0], sizes = [384, 4], strides = [1, 1]} : vector<480x4xbf16> to vector<384x4xbf16>
    %c0_29 = arith.constant 0 : index
    %c20 = arith.constant 20 : index
    %31 = vector.load %arg10[%c0_29, %c20] : memref<384x36xbf16, #tpu.memory_space<vmem>>, vector<384x4xbf16>
    tpu.vector_store %arg10[%c0_29, %c20], %30 {strides = array<i32>} : memref<384x36xbf16, #tpu.memory_space<vmem>>, vector<384x4xbf16>,
    %32 = vector.extract_strided_slice %19 {offsets = [71, 0], sizes = [384, 4], strides = [1, 1]} : vector<480x4xbf16> to vector<384x4xbf16>
    %c0_30 = arith.constant 0 : index
    %c24 = arith.constant 24 : index
    %33 = vector.load %arg10[%c0_30, %c24] : memref<384x36xbf16, #tpu.memory_space<vmem>>, vector<384x4xbf16>
    tpu.vector_store %arg10[%c0_30, %c24], %32 {strides = array<i32>} : memref<384x36xbf16, #tpu.memory_space<vmem>>, vector<384x4xbf16>,
    %34 = vector.extract_strided_slice %19 {offsets = [72, 0], sizes = [384, 4], strides = [1, 1]} : vector<480x4xbf16> to vector<384x4xbf16>
    %c0_31 = arith.constant 0 : index
    %c28 = arith.constant 28 : index
    %35 = vector.load %arg10[%c0_31, %c28] : memref<384x36xbf16, #tpu.memory_space<vmem>>, vector<384x4xbf16>
    tpu.vector_store %arg10[%c0_31, %c28], %34 {strides = array<i32>} : memref<384x36xbf16, #tpu.memory_space<vmem>>, vector<384x4xbf16>,
    %36 = vector.extract_strided_slice %19 {offsets = [73, 0], sizes = [384, 4], strides = [1, 1]} : vector<480x4xbf16> to vector<384x4xbf16>
    %c0_32 = arith.constant 0 : index
    %c32 = arith.constant 32 : index
    %37 = vector.load %arg10[%c0_32, %c32] : memref<384x36xbf16, #tpu.memory_space<vmem>>, vector<384x4xbf16>
    tpu.vector_store %arg10[%c0_32, %c32], %36 {strides = array<i32>} : memref<384x36xbf16, #tpu.memory_space<vmem>>, vector<384x4xbf16>,
    %c0_33 = arith.constant 0 : index
    %c0_34 = arith.constant 0 : index
    %38 = vector.load %arg10[%c0_33, %c0_34] : memref<384x36xbf16, #tpu.memory_space<vmem>>, vector<384x36xbf16>
    %c0_35 = arith.constant 0 : index
    %c0_36 = arith.constant 0 : index
    %39 = vector.load %arg3[%c0_35, %c0_36] : memref<36x4xbf16, #tpu.memory_space<vmem>>, vector<36x4xbf16>
    %cst_37 = arith.constant dense<0.000000e+00> : vector<384x4xf32>
    %40 = tpu.matmul %38, %39, %cst_37 {dimension_numbers = #tpu.dot_dimension_numbers<[1], [0], [0], [1], [0, 0, 1, 1], [], []>} : vector<384x36xbf16>, vector<36x4xbf16>, vector<384x4xf32> -> vector<384x4xf32>
    %c0_38 = arith.constant 0 : index
    %c0_39 = arith.constant 0 : index
    %41 = vector.load %arg6[%c0_38, %c0_39] : memref<1x4xf32, #tpu.memory_space<vmem>>, vector<1x4xf32>
    %42 = vector.broadcast %41 : vector<1x4xf32> to vector<384x4xf32>
    %43 = arith.addf %40, %42 : vector<384x4xf32>
    %cst_40 = arith.constant 0.000000e+00 : f32
    %44 = vector.broadcast %cst_40 : f32 to vector<384x4xf32>
    %45 = arith.maximumf %43, %44 : vector<384x4xf32>
    %46 = arith.truncf %45 : vector<384x4xf32> to vector<384x4xbf16>
    %47 = vector.shape_cast %46 : vector<384x4xbf16> to vector<16x24x4xbf16>
    %48 = vector.extract_strided_slice %47 {offsets = [0, 0, 0], sizes = [16, 16, 4], strides = [1, 1, 1]} : vector<16x24x4xbf16> to vector<16x16x4xbf16>
    %49 = vector.shape_cast %48 : vector<16x16x4xbf16> to vector<256x4xbf16>
    %c0_41 = arith.constant 0 : index
    %c0_42 = arith.constant 0 : index
    %50 = vector.load %arg4[%c0_41, %c0_42] : memref<4x16xbf16, #tpu.memory_space<vmem>>, vector<4x16xbf16>
    %cst_43 = arith.constant dense<0.000000e+00> : vector<256x16xf32>
    %51 = tpu.matmul %49, %50, %cst_43 {dimension_numbers = #tpu.dot_dimension_numbers<[1], [0], [0], [1], [0, 0, 1, 1], [], []>} : vector<256x4xbf16>, vector<4x16xbf16>, vector<256x16xf32> -> vector<256x16xf32>
    %c0_44 = arith.constant 0 : index
    %c0_45 = arith.constant 0 : index
    %52 = vector.load %arg7[%c0_44, %c0_45] : memref<1x16xf32, #tpu.memory_space<vmem>>, vector<1x16xf32>
    %53 = vector.broadcast %52 : vector<1x16xf32> to vector<256x16xf32>
    %54 = arith.addf %51, %53 : vector<256x16xf32>
    %55 = arith.extf %1 : vector<256x16xbf16> to vector<256x16xf32>
    %56 = arith.addf %54, %55 : vector<256x16xf32>
    %cst_46 = arith.constant 0.000000e+00 : f32
    %57 = vector.broadcast %cst_46 : f32 to vector<256x16xf32>
    %58 = arith.maximumf %56, %57 : vector<256x16xf32>
    %59 = arith.truncf %58 : vector<256x16xf32> to vector<256x16xbf16>
    %c0_47 = arith.constant 0 : index
    %c0_48 = arith.constant 0 : index
    %c0_49 = arith.constant 0 : index
    %60 = vector.load %arg8[%c0_47, %c0_48, %c0_49] : memref<1x256x16xbf16, #tpu.memory_space<vmem>>, vector<1x256x16xbf16>
    %61 = vector.shape_cast %60 : vector<1x256x16xbf16> to vector<256x16xbf16>
    %62 = vector.shape_cast %59 : vector<256x16xbf16> to vector<1x256x16xbf16>
    tpu.vector_store %arg8[%c0_47, %c0_48, %c0_49], %62 {strides = array<i32>} : memref<1x256x16xbf16, #tpu.memory_space<vmem>>, vector<1x256x16xbf16>,
    return
  }
  func.func @transform_0(%arg0: i32) -> (i32, i32, i32) {
    %c0_i32 = arith.constant 0 : i32
    %c0_i32_0 = arith.constant 0 : i32
    %c0_i32_1 = arith.constant 0 : i32
    return %arg0, %c0_i32, %c0_i32_0 : i32, i32, i32
  }
  func.func @transform_1(%arg0: i32) -> (i32, i32) {
    %c0_i32 = arith.constant 0 : i32
    %c0_i32_0 = arith.constant 0 : i32
    %c0_i32_1 = arith.constant 0 : i32
    return %c0_i32, %c0_i32_0 : i32, i32
  }
  func.func @transform_2(%arg0: i32) -> (i32, i32) {
    %c0_i32 = arith.constant 0 : i32
    %c0_i32_0 = arith.constant 0 : i32
    %c0_i32_1 = arith.constant 0 : i32
    return %c0_i32, %c0_i32_0 : i32, i32
  }
  func.func @transform_3(%arg0: i32) -> (i32, i32) {
    %c0_i32 = arith.constant 0 : i32
    %c0_i32_0 = arith.constant 0 : i32
    %c0_i32_1 = arith.constant 0 : i32
    return %c0_i32, %c0_i32_0 : i32, i32
  }
  func.func @transform_4(%arg0: i32) -> (i32, i32) {
    %c0_i32 = arith.constant 0 : i32
    %c0_i32_0 = arith.constant 0 : i32
    %c0_i32_1 = arith.constant 0 : i32
    return %c0_i32, %c0_i32_0 : i32, i32
  }
  func.func @transform_5(%arg0: i32) -> (i32, i32) {
    %c0_i32 = arith.constant 0 : i32
    %c0_i32_0 = arith.constant 0 : i32
    %c0_i32_1 = arith.constant 0 : i32
    return %c0_i32, %c0_i32_0 : i32, i32
  }
  func.func @transform_6(%arg0: i32) -> (i32, i32) {
    %c0_i32 = arith.constant 0 : i32
    %c0_i32_0 = arith.constant 0 : i32
    %c0_i32_1 = arith.constant 0 : i32
    return %c0_i32, %c0_i32_0 : i32, i32
  }
  func.func @transform_7(%arg0: i32) -> (i32, i32, i32) {
    %c0_i32 = arith.constant 0 : i32
    %c0_i32_0 = arith.constant 0 : i32
    %c0_i32_1 = arith.constant 0 : i32
    return %arg0, %c0_i32, %c0_i32_0 : i32, i32, i32
  }
}

</mosaic_0001>

<llo_original>
// kernel: qsam_bottleneck_forward.1
$region0: #{qsam_bottleneck_forward.1}
  #allocation0 [shape = 'u32[]', space=smem, size = 0x4, offset = 0x4, fixed_abs, tag = 'smem constant byte address 0x4 - core index']
  #allocation1 [shape = 'u32[144,128]{1,0:T(1,128)}', space=vmem, size = 0x12000, scoped, tag = 'internal scratch']
  #allocation2 [shape = 'bf16[20,24,4]{2,1,0:T(8,128)(2,1)}', space=vmem, size = 0x1e000, scoped, tag = 'scratch operand']
  #allocation3 [shape = 'bf16[384,36]{1,0:T(8,128)(2,1)}', space=vmem, size = 0x18000, scoped, tag = 'scratch operand']
  %s0 = inlined_call_operand.vmem [shape: bf16[2,256,16], index: 0, kind: input, shape index: {}]
  %s1 = inlined_call_operand.vmem [shape: bf16[16,4], index: 1, kind: input, shape index: {}]
  %s2 = inlined_call_operand.vmem [shape: bf16[36,4], index: 2, kind: input, shape index: {}]
  %s3 = inlined_call_operand.vmem [shape: bf16[4,16], index: 3, kind: input, shape index: {}]
  %s4 = inlined_call_operand.vmem [shape: f32[1,4], index: 4, kind: input, shape index: {}]
  %s5 = inlined_call_operand.vmem [shape: f32[1,4], index: 5, kind: input, shape index: {}]
  %s6 = inlined_call_operand.vmem [shape: f32[1,16], index: 6, kind: input, shape index: {}]
  %s7 = inlined_call_operand.vmem [shape: bf16[2,256,16], index: 7, kind: output, shape index: {}]
  %s8 = sld [smem:[#allocation0]]
  $region61: #{qsam_bottleneck_forward.1} parent=0
    _
  %s10 = ssub.s32 1, %s8
  %s11 = scalar_select 0, %s10, %s8
  loop: start=0, step=1, limit=4
  $region2: #{qsam_bottleneck_forward.1} parent=0 // loop_pre_header
    _
  $region3: #{qsam_bottleneck_forward.1} parent=0 // loop_header
    %s13 = sphi 0, %s17
    %p14 = scmp.ge.s32.totalorder %s13, 4
    %s23 = sphi 0, %s25
    %s26 = sphi 0, %s23
    %s27 = sphi 0, %s26
    %s43 = sphi 0, %s27
    %s47 = sphi 0, %s47
    %s49 = sphi 0, %s47
    %s50 = sphi 0, %s49
    %s64 = sphi 0, %s50
    %s68 = sphi 0, %s68
    %s70 = sphi 0, %s68
    %s71 = sphi 0, %s70
    %s85 = sphi 0, %s71
    %s89 = sphi 0, %s89
    %s91 = sphi 0, %s89
    %s92 = sphi 0, %s91
    %s106 = sphi 0, %s92
    %s110 = sphi 0, %s110
    %s112 = sphi 0, %s110
    %s113 = sphi 0, %s112
    %s127 = sphi 0, %s113
    %s131 = sphi 0, %s131
    %s133 = sphi 0, %s131
    %s134 = sphi 0, %s133
    %s148 = sphi 0, %s134
    %s152 = sphi 0, %s152
    %s154 = sphi 0, %s152
    %s155 = sphi 0, %s154
    %s169 = sphi 0, %s155
    %s175 = sphi 0, %s177
    %s178 = sphi 0, %s175
    %s179 = sphi 0, %s178
    %s195 = sphi 0, %s179
  $region4: #{qsam_bottleneck_forward.1} parent=0 // loop_header_branch
    %16 = sbr.rel (%p14) target = $region8
  $region5: #{qsam_bottleneck_forward.1} parent=0 // loop_body
    %s18 = ssub.s32 %s13, 1
    %s19 = ssub.s32 %s13, 2
    %s20 = sadd.s32 %s13, 1
    %s21 = ssub.s32 %s13, %s20
    %p22 = scmp.eq.s32.totalorder %s21, 0
    %s24 = sadd.s32 %s23, 1
    %s25 = scalar_select %p22, %s23, %s24
    %p28 = pneg %p22
    %p29 = scmp.eq.s32.totalorder %s13, 1
    %p30 = por %p28, %p29
    %p31 = scmp.ne.s32.totalorder %s23, %s26
    %p32 = scmp.eq.s32.totalorder %s13, 0
    %p33 = por %p31, %p32
    %p34 = scmp.ne.s32.totalorder %s23, %s26
    %p35 = scmp.eq.s32.totalorder %s18, 1
    %p36 = por %p34, %p35
    %p37 = scmp.ne.s32.totalorder %s26, %s27
    %p38 = scmp.eq.s32.totalorder %s18, 0
    %p39 = por %p37, %p38
    %p40 = scmp.ne.s32.totalorder %s26, %s27
    %p41 = scmp.eq.s32.totalorder %s19, 1
    %p42 = por %p40, %p41
    %p44 = scmp.ne.s32.totalorder %s27, %s43
    %p45 = scmp.eq.s32.totalorder %s19, 0
    %p46 = por %p44, %p45
    %s48 = sadd.s32 %s47, 1
    %p51 = scmp.eq.s32.totalorder %s13, 1
    %p52 = scmp.ne.s32.totalorder %s47, %s49
    %p53 = scmp.eq.s32.totalorder %s13, 0
    %p54 = por %p52, %p53
    %p55 = scmp.ne.s32.totalorder %s47, %s49
    %p56 = scmp.eq.s32.totalorder %s18, 1
    %p57 = por %p55, %p56
    %p58 = scmp.ne.s32.totalorder %s49, %s50
    %p59 = scmp.eq.s32.totalorder %s18, 0
    %p60 = por %p58, %p59
    %p61 = scmp.ne.s32.totalorder %s49, %s50
    %p62 = scmp.eq.s32.totalorder %s19, 1
    %p63 = por %p61, %p62
    %p65 = scmp.ne.s32.totalorder %s50, %s64
    %p66 = scmp.eq.s32.totalorder %s19, 0
    %p67 = por %p65, %p66
    %s69 = sadd.s32 %s68, 1
    %p72 = scmp.eq.s32.totalorder %s13, 1
    %p73 = scmp.ne.s32.totalorder %s68, %s70
    %p74 = scmp.eq.s32.totalorder %s13, 0
    %p75 = por %p73, %p74
    %p76 = scmp.ne.s32.totalorder %s68, %s70
    %p77 = scmp.eq.s32.totalorder %s18, 1
    %p78 = por %p76, %p77
    %p79 = scmp.ne.s32.totalorder %s70, %s71
    %p80 = scmp.eq.s32.totalorder %s18, 0
    %p81 = por %p79, %p80
    %p82 = scmp.ne.s32.totalorder %s70, %s71
    %p83 = scmp.eq.s32.totalorder %s19, 1
    %p84 = por %p82, %p83
    %p86 = scmp.ne.s32.totalorder %s71, %s85
    %p87 = scmp.eq.s32.totalorder %s19, 0
    %p88 = por %p86, %p87
    %s90 = sadd.s32 %s89, 1
    %p93 = scmp.eq.s32.totalorder %s13, 1
    %p94 = scmp.ne.s32.totalorder %s89, %s91
    %p95 = scmp.eq.s32.totalorder %s13, 0
    %p96 = por %p94, %p95
    %p97 = scmp.ne.s32.totalorder %s89, %s91
    %p98 = scmp.eq.s32.totalorder %s18, 1
    %p99 = por %p97, %p98
    %p100 = scmp.ne.s32.totalorder %s91, %s92
    %p101 = scmp.eq.s32.totalorder %s18, 0
    %p102 = por %p100, %p101
    %p103 = scmp.ne.s32.totalorder %s91, %s92
    %p104 = scmp.eq.s32.totalorder %s19, 1
    %p105 = por %p103, %p104
    %p107 = scmp.ne.s32.totalorder %s92, %s106
    %p108 = scmp.eq.s32.totalorder %s19, 0
    %p109 = por %p107, %p108
    %s111 = sadd.s32 %s110, 1
    %p114 = scmp.eq.s32.totalorder %s13, 1
    %p115 = scmp.ne.s32.totalorder %s110, %s112
    %p116 = scmp.eq.s32.totalorder %s13, 0
    %p117 = por %p115, %p116
    %p118 = scmp.ne.s32.totalorder %s110, %s112
    %p119 = scmp.eq.s32.totalorder %s18, 1
    %p120 = por %p118, %p119
    %p121 = scmp.ne.s32.totalorder %s112, %s113
    %p122 = scmp.eq.s32.totalorder %s18, 0
    %p123 = por %p121, %p122
    %p124 = scmp.ne.s32.totalorder %s112, %s113
    %p125 = scmp.eq.s32.totalorder %s19, 1
    %p126 = por %p124, %p125
    %p128 = scmp.ne.s32.totalorder %s113, %s127
    %p129 = scmp.eq.s32.totalorder %s19, 0
    %p130 = por %p128, %p129
    %s132 = sadd.s32 %s131, 1
    %p135 = scmp.eq.s32.totalorder %s13, 1
    %p136 = scmp.ne.s32.totalorder %s131, %s133
    %p137 = scmp.eq.s32.totalorder %s13, 0
    %p138 = por %p136, %p137
    %p139 = scmp.ne.s32.totalorder %s131, %s133
    %p140 = scmp.eq.s32.totalorder %s18, 1
    %p141 = por %p139, %p140
    %p142 = scmp.ne.s32.totalorder %s133, %s134
    %p143 = scmp.eq.s32.totalorder %s18, 0
    %p144 = por %p142, %p143
    %p145 = scmp.ne.s32.totalorder %s133, %s134
    %p146 = scmp.eq.s32.totalorder %s19, 1
    %p147 = por %p145, %p146
    %p149 = scmp.ne.s32.totalorder %s134, %s148
    %p150 = scmp.eq.s32.totalorder %s19, 0
    %p151 = por %p149, %p150
    %s153 = sadd.s32 %s152, 1
    %p156 = scmp.eq.s32.totalorder %s13, 1
    %p157 = scmp.ne.s32.totalorder %s152, %s154
    %p158 = scmp.eq.s32.totalorder %s13, 0
    %p159 = por %p157, %p158
    %p160 = scmp.ne.s32.totalorder %s152, %s154
    %p161 = scmp.eq.s32.totalorder %s18, 1
    %p162 = por %p160, %p161
    %p163 = scmp.ne.s32.totalorder %s154, %s155
    %p164 = scmp.eq.s32.totalorder %s18, 0
    %p165 = por %p163, %p164
    %p166 = scmp.ne.s32.totalorder %s154, %s155
    %p167 = scmp.eq.s32.totalorder %s19, 1
    %p168 = por %p166, %p167
    %p170 = scmp.ne.s32.totalorder %s155, %s169
    %p171 = scmp.eq.s32.totalorder %s19, 0
    %p172 = por %p170, %p171
    %s173 = ssub.s32 %s13, %s20
    %p174 = scmp.eq.s32.totalorder %s173, 0
    %s176 = sadd.s32 %s175, 1
    %s177 = scalar_select %p174, %s175, %s176
    %p180 = pneg %p174
    %p181 = scmp.eq.s32.totalorder %s13, 1
    %p182 = por %p180, %p181
    %p183 = scmp.ne.s32.totalorder %s175, %s178
    %p184 = scmp.eq.s32.totalorder %s13, 0
    %p185 = por %p183, %p184
    %p186 = scmp.ne.s32.totalorder %s175, %s178
    %p187 = scmp.eq.s32.totalorder %s18, 1
    %p188 = por %p186, %p187
    %p189 = scmp.ne.s32.totalorder %s178, %s179
    %p190 = scmp.eq.s32.totalorder %s18, 0
    %p191 = por %p189, %p190
    %p192 = scmp.ne.s32.totalorder %s178, %s179
    %p193 = scmp.eq.s32.totalorder %s19, 1
    %p194 = por %p192, %p193
    %p196 = scmp.ne.s32.totalorder %s179, %s195
    %p197 = scmp.eq.s32.totalorder %s19, 0
    %p198 = por %p196, %p197
    %p199 = scmp.le.s32.totalorder 1, %s13
    %p200 = scmp.lt.s32.totalorder %s13, 3
    %p201 = pnand %p199, %p200
    %p202 = pneg %p201
    // Predicated region
    $region9: #{qsam_bottleneck_forward.1} parent=5 // pred_check
      _
    $region10: #{qsam_bottleneck_forward.1} parent=5 // pred_check_branch
      %204 = sbr.rel (%p201) target = $region12
    $region11: #{qsam_bottleneck_forward.1} parent=5 // pred_region
      %s205 = ssub.s32 %s13, 1
      // Predicated region
      $region13: #{qsam_bottleneck_forward.1} parent=11 // pred_check
        %p206 = pneg %p60
      $region14: #{qsam_bottleneck_forward.1} parent=11 // pred_check_branch
        %208 = sbr.rel (%p206) target = $region16
      $region15: #{qsam_bottleneck_forward.1} parent=11 // pred_region
        _
      $region16: #{qsam_bottleneck_forward.1} parent=11 // pred_fallthru
        _
      // Predicated region
      $region17: #{qsam_bottleneck_forward.1} parent=11 // pred_check
        %p209 = pneg %p81
      $region18: #{qsam_bottleneck_forward.1} parent=11 // pred_check_branch
        %211 = sbr.rel (%p209) target = $region20
      $region19: #{qsam_bottleneck_forward.1} parent=11 // pred_region
        _
      $region20: #{qsam_bottleneck_forward.1} parent=11 // pred_fallthru
        _
      // Predicated region
      $region21: #{qsam_bottleneck_forward.1} parent=11 // pred_check
        %p212 = pneg %p102
      $region22: #{qsam_bottleneck_forward.1} parent=11 // pred_check_branch
        %214 = sbr.rel (%p212) target = $region24
      $region23: #{qsam_bottleneck_forward.1} parent=11 // pred_region
        _
      $region24: #{qsam_bottleneck_forward.1} parent=11 // pred_fallthru
        _
      // Predicated region
      $region25: #{qsam_bottleneck_forward.1} parent=11 // pred_check
        %p215 = pneg %p123
      $region26: #{qsam_bottleneck_forward.1} parent=11 // pred_check_branch
        %217 = sbr.rel (%p215) target = $region28
      $region27: #{qsam_bottleneck_forward.1} parent=11 // pred_region
        _
      $region28: #{qsam_bottleneck_forward.1} parent=11 // pred_fallthru
        _
      // Predicated region
      $region29: #{qsam_bottleneck_forward.1} parent=11 // pred_check
        %p218 = pneg %p144
      $region30: #{qsam_bottleneck_forward.1} parent=11 // pred_check_branch
        %220 = sbr.rel (%p218) target = $region32
      $region31: #{qsam_bottleneck_forward.1} parent=11 // pred_region
        _
      $region32: #{qsam_bottleneck_forward.1} parent=11 // pred_fallthru
        _
      // Predicated region
      $region33: #{qsam_bottleneck_forward.1} parent=11 // pred_check
        %p221 = pneg %p165
      $region34: #{qsam_bottleneck_forward.1} parent=11 // pred_check_branch
        %223 = sbr.rel (%p221) target = $region36
      $region35: #{qsam_bottleneck_forward.1} parent=11 // pred_region
        _
      $region36: #{qsam_bottleneck_forward.1} parent=11 // pred_fallthru
        _
    $region12: #{qsam_bottleneck_forward.1} parent=5 // pred_fallthru
      _
    %p224 = scmp.lt.s32.totalorder %s13, 2
    // Predicated region
    $region37: #{qsam_bottleneck_forward.1} parent=5 // pred_check
      %p225 = pneg %p224
    $region38: #{qsam_bottleneck_forward.1} parent=5 // pred_check_branch
      %227 = sbr.rel (%p225) target = $region40
    $region39: #{qsam_bottleneck_forward.1} parent=5 // pred_region
      // Predicated region
      $region41: #{qsam_bottleneck_forward.1} parent=39 // pred_check
        %p228 = pneg %p33
      $region42: #{qsam_bottleneck_forward.1} parent=39 // pred_check_branch
        %230 = sbr.rel (%p228) target = $region44
      $region43: #{qsam_bottleneck_forward.1} parent=39 // pred_region
        %p231 = scmp.lt.s32.totalorder %s13, 1
        %s232 = scalar_select %p231, %s13, 1
        %s233 = smul.addr %s232, 32
        %s234 = smul.addr %s233, 4
        %s235 = scalar_lea.vmem %s0, %s234
      $region44: #{qsam_bottleneck_forward.1} parent=39 // pred_fallthru
        _
    $region40: #{qsam_bottleneck_forward.1} parent=5 // pred_fallthru
      _
    %p236 = scmp.le.s32.totalorder 1, %s13
    %p237 = scmp.lt.s32.totalorder %s13, 3
    %p238 = pnand %p236, %p237
    %p239 = pneg %p238
    // Predicated region
    $region45: #{qsam_bottleneck_forward.1} parent=5 // pred_check
      _
    $region46: #{qsam_bottleneck_forward.1} parent=5 // pred_check_branch
      %241 = sbr.rel (%p238) target = $region48
    $region47: #{qsam_bottleneck_forward.1} parent=5 // pred_region
      %s242 = ssub.s32 %s13, 1
      %p243 = scmp.lt.s32.totalorder %s18, 1
      %s244 = scalar_select %p243, %s18, 1
      %s245 = smul.addr %s244, 32
      %s246 = smul.addr %s245, 4
      %s247 = scalar_lea.vmem %s0, %s246
      %p248 = pneg %p39
      %p249 = pneg %p36
      %p250 = pneg %p60
      %p251 = pneg %p57
      %p252 = pneg %p81
      %p253 = pneg %p78
      %p254 = pneg %p102
      %p255 = pneg %p99
      %p256 = pneg %p123
      %p257 = pneg %p120
      %p258 = pneg %p144
      %p259 = pneg %p141
      %p260 = pneg %p165
      %p261 = pneg %p162
      %p262 = pneg %p191
      %p263 = pneg %p188
      %p264 = scmp.lt.s32.totalorder %s18, 1
      %s265 = scalar_select %p264, %s18, 1
      %s266 = smul.addr %s265, 32
      %s267 = smul.addr %s266, 4
      %s268 = scalar_lea.vmem %s7, %s267
      %p269 = scmp.lt.s32.totalorder %s18, 1
      %s270 = scalar_select %p269, %s18, 1
      %s271 = smul.addr %s270, 32
      %s272 = smul.addr %s271, 4
      %s273 = scalar_lea.vmem %s0, %s272
      %p274 = scmp.lt.s32.totalorder %s18, 1
      %s275 = scalar_select %p274, %s18, 1
      %s276 = smul.addr %s275, 32
      %s277 = smul.addr %s276, 4
      %s278 = scalar_lea.vmem %s7, %s277
      %v280 = vld [vmem:[%s273] sm:$0xf]
      %v281 = vld [vmem:[%s273 + $0x4] sm:$0xf]
      %v282 = vld [vmem:[%s273 + $0x8] sm:$0xf]
      %v283 = vld [vmem:[%s273 + $0xc] sm:$0xf]
      %v284 = vld [vmem:[%s273 + $0x10] sm:$0xf]
      %v285 = vld [vmem:[%s273 + $0x14] sm:$0xf]
      %v286 = vld [vmem:[%s273 + $0x18] sm:$0xf]
      %v287 = vld [vmem:[%s273 + $0x1c] sm:$0xf]
      %v288 = vld [vmem:[%s273 + $0x20] sm:$0xf]
      %v289 = vld [vmem:[%s273 + $0x24] sm:$0xf]
      %v290 = vld [vmem:[%s273 + $0x28] sm:$0xf]
      %v291 = vld [vmem:[%s273 + $0x2c] sm:$0xf]
      %v292 = vld [vmem:[%s273 + $0x30] sm:$0xf]
      %v293 = vld [vmem:[%s273 + $0x34] sm:$0xf]
      %v294 = vld [vmem:[%s273 + $0x38] sm:$0xf]
      %v295 = vld [vmem:[%s273 + $0x3c] sm:$0xf]
      %v296 = vld [vmem:[%s273 + $0x40] sm:$0xf]
      %v297 = vld [vmem:[%s273 + $0x44] sm:$0xf]
      %v298 = vld [vmem:[%s273 + $0x48] sm:$0xf]
      %v299 = vld [vmem:[%s273 + $0x4c] sm:$0xf]
      %v300 = vld [vmem:[%s273 + $0x50] sm:$0xf]
      %v301 = vld [vmem:[%s273 + $0x54] sm:$0xf]
      %v302 = vld [vmem:[%s273 + $0x58] sm:$0xf]
      %v303 = vld [vmem:[%s273 + $0x5c] sm:$0xf]
      %v304 = vld [vmem:[%s273 + $0x60] sm:$0xf]
      %v305 = vld [vmem:[%s273 + $0x64] sm:$0xf]
      %v306 = vld [vmem:[%s273 + $0x68] sm:$0xf]
      %v307 = vld [vmem:[%s273 + $0x6c] sm:$0xf]
      %v308 = vld [vmem:[%s273 + $0x70] sm:$0xf]
      %v309 = vld [vmem:[%s273 + $0x74] sm:$0xf]
      %v310 = vld [vmem:[%s273 + $0x78] sm:$0xf]
      %v311 = vld [vmem:[%s273 + $0x7c] sm:$0xf]
      %v312 = vld [vmem:[%s1] sm:$0xf]
      %v313 = vld [vmem:[%s1 + $0x4] sm:$0xf]
      %v314 = vld [vmem:[%s4] sm:$0x1]
      %v316 = vlaneseq
      %v317 = vshrl.u32 %v316, 7
      %v318 = vsub.s32 0, %v317
      %v319 = vrot.slane %v314, %v318
      %v353 = vunpack.c.l.b16 %v280
      %v354 = vunpack.c.l.b16 %v281
      %v355 = vunpack.c.l.b16 %v282
      %v356 = vunpack.c.l.b16 %v283
      %v357 = vunpack.c.l.b16 %v284
      %v358 = vunpack.c.l.b16 %v285
      %v359 = vunpack.c.l.b16 %v286
      %v360 = vunpack.c.l.b16 %v287
      %v361 = vunpack.c.l.b16 %v288
      %v362 = vunpack.c.l.b16 %v289
      %v363 = vunpack.c.l.b16 %v290
      %v364 = vunpack.c.l.b16 %v291
      %v365 = vunpack.c.l.b16 %v292
      %v366 = vunpack.c.l.b16 %v293
      %v367 = vunpack.c.l.b16 %v294
      %v368 = vunpack.c.l.b16 %v295
      %v369 = vunpack.c.l.b16 %v296
      %v370 = vunpack.c.l.b16 %v297
      %v371 = vunpack.c.l.b16 %v298
      %v372 = vunpack.c.l.b16 %v299
      %v373 = vunpack.c.l.b16 %v300
      %v374 = vunpack.c.l.b16 %v301
      %v375 = vunpack.c.l.b16 %v302
      %v376 = vunpack.c.l.b16 %v303
      %v377 = vunpack.c.l.b16 %v304
      %v378 = vunpack.c.l.b16 %v305
      %v379 = vunpack.c.l.b16 %v306
      %v380 = vunpack.c.l.b16 %v307
      %v381 = vunpack.c.l.b16 %v308
      %v382 = vunpack.c.l.b16 %v309
      %v383 = vunpack.c.l.b16 %v310
      %v384 = vunpack.c.l.b16 %v311
      %v385 = vpack.c.b16 %v354, %v353
      %v386 = vpack.c.b16 %v356, %v355
      %v387 = vpack.c.b16 %v358, %v357
      %v388 = vpack.c.b16 %v360, %v359
      %v389 = vpack.c.b16 %v362, %v361
      %v390 = vpack.c.b16 %v364, %v363
      %v391 = vpack.c.b16 %v366, %v365
      %v392 = vpack.c.b16 %v368, %v367
      %v393 = vpack.c.b16 %v370, %v369
      %v394 = vpack.c.b16 %v372, %v371
      %v395 = vpack.c.b16 %v374, %v373
      %v396 = vpack.c.b16 %v376, %v375
      %v397 = vpack.c.b16 %v378, %v377
      %v398 = vpack.c.b16 %v380, %v379
      %v399 = vpack.c.b16 %v382, %v381
      %v400 = vpack.c.b16 %v384, %v383
      %v403 = vunpack.c.l.b16 %v312
      %v404 = vunpack.c.l.b16 %v313
      %v405 = vpack.c.b16 %v404, %v403
      %vm407 = vcmask 130048
      %v409 = vsel %vm407, %v385, 0
      %v412 = vsel %vm407, %v386, 0
      %v415 = vsel %vm407, %v387, 0
      %v418 = vsel %vm407, %v388, 0
      %v421 = vsel %vm407, %v389, 0
      %v424 = vsel %vm407, %v390, 0
      %v427 = vsel %vm407, %v391, 0
      %v430 = vsel %vm407, %v392, 0
      %v433 = vsel %vm407, %v393, 0
      %v436 = vsel %vm407, %v394, 0
      %v439 = vsel %vm407, %v395, 0
      %v442 = vsel %vm407, %v396, 0
      %v445 = vsel %vm407, %v397, 0
      %v448 = vsel %vm407, %v398, 0
      %v451 = vsel %vm407, %v399, 0
      %v454 = vsel %vm407, %v400, 0
      %456 = vmatprep.subr.bf16.mxu0 0
      %457 = vmatpush1.bf16.msra.mxu0 0
      %458 = vmatprep.subr.bf16.mxu0 0
      %459 = vmatpush1.bf16.msra.mxu0 0
      %460 = vmatprep.subr.bf16.mxu0 0
      %461 = vmatpush1.bf16.msra.mxu0 0
      %462 = vmatprep.subr.bf16.mxu0 0
      %463 = vmatpush1.bf16.msra.mxu0 0
      %464 = vmatprep.subr.bf16.mxu0 0
      %465 = vmatpush1.bf16.msra.mxu0 0
      %466 = vmatprep.subr.bf16.mxu0 0
      %467 = vmatpush1.bf16.msra.mxu0 0
      %468 = vmatprep.subr.bf16.mxu0 0
      %469 = vmatpush1.bf16.msra.mxu0 0
      %470 = vmatprep.subr.bf16.mxu0 0
      %471 = vmatpush1.bf16.msra.mxu0 %v405
      %472 = vmatprep.subr.bf16.mxu0 0
      %473 = vmatpush2.bf16.msra.mxu0 0
      %474 = vmatprep.subr.bf16.mxu0 0
      %475 = vmatpush2.bf16.msra.mxu0 0
      %476 = vmatprep.subr.bf16.mxu0 0
      %477 = vmatpush2.bf16.msra.mxu0 0
      %478 = vmatprep.subr.bf16.mxu0 0
      %479 = vmatpush2.bf16.msra.mxu0 0
      %480 = vmatprep.subr.bf16.mxu0 0
      %481 = vmatpush2.bf16.msra.mxu0 0
      %482 = vmatprep.subr.bf16.mxu0 0
      %483 = vmatpush2.bf16.msra.mxu0 0
      %484 = vmatprep.subr.bf16.mxu0 0
      %485 = vmatpush2.bf16.msra.mxu0 0
      %486 = vmatprep.subr.bf16.mxu0 0
      %487 = vmatpush2.bf16.msra.mxu0 0
      %488 = vmatprep.mubr.bf16.mxu0 0
      %489 = vmatmul.mubr.bf16.gmra.mxu0 %v409
      %v490 = vpop.f32.mrf.mxu0
      %v491 = vadd.f32 %v319, %v490
      %v492 = vpop.f32.mrf.mxu0
      %v493 = vpop.f32.mrf.mxu0
      %v494 = vadd.f32 %v319, %v493
      %v495 = vpop.f32.mrf.mxu0
      %496 = vmatprep.mubr.bf16.mxu0 0
      %497 = vmatmul.mubr.bf16.gmra.mxu0 %v412
      %v498 = vpop.f32.mrf.mxu0
      %v499 = vadd.f32 %v319, %v498
      %v500 = vpop.f32.mrf.mxu0
      %v501 = vpop.f32.mrf.mxu0
      %v502 = vadd.f32 %v319, %v501
      %v503 = vpop.f32.mrf.mxu0
      %504 = vmatprep.mubr.bf16.mxu0 0
      %505 = vmatmul.mubr.bf16.gmra.mxu0 %v415
      %v506 = vpop.f32.mrf.mxu0
      %v507 = vadd.f32 %v319, %v506
      %v508 = vpop.f32.mrf.mxu0
      %v509 = vpop.f32.mrf.mxu0
      %v510 = vadd.f32 %v319, %v509
      %v511 = vpop.f32.mrf.mxu0
      %512 = vmatprep.mubr.bf16.mxu0 0
      %513 = vmatmul.mubr.bf16.gmra.mxu0 %v418
      %v514 = vpop.f32.mrf.mxu0
      %v515 = vadd.f32 %v319, %v514
      %v516 = vpop.f32.mrf.mxu0
      %v517 = vpop.f32.mrf.mxu0
      %v518 = vadd.f32 %v319, %v517
      %v519 = vpop.f32.mrf.mxu0
      %520 = vmatprep.mubr.bf16.mxu0 0
      %521 = vmatmul.mubr.bf16.gmra.mxu0 %v421
      %v522 = vpop.f32.mrf.mxu0
      %v523 = vadd.f32 %v319, %v522
      %v524 = vpop.f32.mrf.mxu0
      %v525 = vpop.f32.mrf.mxu0
      %v526 = vadd.f32 %v319, %v525
      %v527 = vpop.f32.mrf.mxu0
      %528 = vmatprep.mubr.bf16.mxu0 0
      %529 = vmatmul.mubr.bf16.gmra.mxu0 %v424
      %v530 = vpop.f32.mrf.mxu0
      %v531 = vadd.f32 %v319, %v530
      %v532 = vpop.f32.mrf.mxu0
      %v533 = vpop.f32.mrf.mxu0
      %v534 = vadd.f32 %v319, %v533
      %v535 = vpop.f32.mrf.mxu0
      %536 = vmatprep.mubr.bf16.mxu0 0
      %537 = vmatmul.mubr.bf16.gmra.mxu0 %v427
      %v538 = vpop.f32.mrf.mxu0
      %v539 = vadd.f32 %v319, %v538
      %v540 = vpop.f32.mrf.mxu0
      %v541 = vpop.f32.mrf.mxu0
      %v542 = vadd.f32 %v319, %v541
      %v543 = vpop.f32.mrf.mxu0
      %544 = vmatprep.mubr.bf16.mxu0 0
      %545 = vmatmul.mubr.bf16.gmra.mxu0 %v430
      %v546 = vpop.f32.mrf.mxu0
      %v547 = vadd.f32 %v319, %v546
      %v548 = vpop.f32.mrf.mxu0
      %v549 = vpop.f32.mrf.mxu0
      %v550 = vadd.f32 %v319, %v549
      %v551 = vpop.f32.mrf.mxu0
      %552 = vmatprep.mubr.bf16.mxu0 0
      %553 = vmatmul.mubr.bf16.gmra.mxu0 %v433
      %v554 = vpop.f32.mrf.mxu0
      %v555 = vadd.f32 %v319, %v554
      %v556 = vpop.f32.mrf.mxu0
      %v557 = vpop.f32.mrf.mxu0
      %v558 = vadd.f32 %v319, %v557
      %v559 = vpop.f32.mrf.mxu0
      %560 = vmatprep.mubr.bf16.mxu0 0
      %561 = vmatmul.mubr.bf16.gmra.mxu0 %v436
      %v562 = vpop.f32.mrf.mxu0
      %v563 = vadd.f32 %v319, %v562
      %v564 = vpop.f32.mrf.mxu0
      %v565 = vpop.f32.mrf.mxu0
      %v566 = vadd.f32 %v319, %v565
      %v567 = vpop.f32.mrf.mxu0
      %568 = vmatprep.mubr.bf16.mxu0 0
      %569 = vmatmul.mubr.bf16.gmra.mxu0 %v439
      %v570 = vpop.f32.mrf.mxu0
      %v571 = vadd.f32 %v319, %v570
      %v572 = vpop.f32.mrf.mxu0
      %v573 = vpop.f32.mrf.mxu0
      %v574 = vadd.f32 %v319, %v573
      %v575 = vpop.f32.mrf.mxu0
      %576 = vmatprep.mubr.bf16.mxu0 0
      %577 = vmatmul.mubr.bf16.gmra.mxu0 %v442
      %v578 = vpop.f32.mrf.mxu0
      %v579 = vadd.f32 %v319, %v578
      %v580 = vpop.f32.mrf.mxu0
      %v581 = vpop.f32.mrf.mxu0
      %v582 = vadd.f32 %v319, %v581
      %v583 = vpop.f32.mrf.mxu0
      %584 = vmatprep.mubr.bf16.mxu0 0
      %585 = vmatmul.mubr.bf16.gmra.mxu0 %v445
      %v586 = vpop.f32.mrf.mxu0
      %v587 = vadd.f32 %v319, %v586
      %v588 = vpop.f32.mrf.mxu0
      %v589 = vpop.f32.mrf.mxu0
      %v590 = vadd.f32 %v319, %v589
      %v591 = vpop.f32.mrf.mxu0
      %592 = vmatprep.mubr.bf16.mxu0 0
      %593 = vmatmul.mubr.bf16.gmra.mxu0 %v448
      %v594 = vpop.f32.mrf.mxu0
      %v595 = vadd.f32 %v319, %v594
      %v596 = vpop.f32.mrf.mxu0
      %v597 = vpop.f32.mrf.mxu0
      %v598 = vadd.f32 %v319, %v597
      %v599 = vpop.f32.mrf.mxu0
      %600 = vmatprep.mubr.bf16.mxu0 0
      %601 = vmatmul.mubr.bf16.gmra.mxu0 %v451
      %v602 = vpop.f32.mrf.mxu0
      %v603 = vadd.f32 %v319, %v602
      %v604 = vpop.f32.mrf.mxu0
      %v605 = vpop.f32.mrf.mxu0
      %v606 = vadd.f32 %v319, %v605
      %v607 = vpop.f32.mrf.mxu0
      %608 = vmatprep.mubr.bf16.mxu0 0
      %609 = vmatmul.mubr.bf16.gmra.mxu0 %v454
      %v610 = vpop.f32.mrf.mxu0
      %v611 = vadd.f32 %v319, %v610
      %v612 = vpop.f32.mrf.mxu0
      %v613 = vpop.f32.mrf.mxu0
      %v614 = vadd.f32 %v319, %v613
      %v615 = vpop.f32.mrf.mxu0
      %616 = vdwg.mxu0
      %v617 = vmax.f32 %v491, 0.0
      %v618 = vmax.f32 %v494, 0.0
      %v619 = vmax.f32 %v499, 0.0
      %v620 = vmax.f32 %v502, 0.0
      %v621 = vmax.f32 %v507, 0.0
      %v622 = vmax.f32 %v510, 0.0
      %v623 = vmax.f32 %v515, 0.0
      %v624 = vmax.f32 %v518, 0.0
      %v625 = vmax.f32 %v523, 0.0
      %v626 = vmax.f32 %v526, 0.0
      %v627 = vmax.f32 %v531, 0.0
      %v628 = vmax.f32 %v534, 0.0
      %v629 = vmax.f32 %v539, 0.0
      %v630 = vmax.f32 %v542, 0.0
      %v631 = vmax.f32 %v547, 0.0
      %v632 = vmax.f32 %v550, 0.0
      %v633 = vmax.f32 %v555, 0.0
      %v634 = vmax.f32 %v558, 0.0
      %v635 = vmax.f32 %v563, 0.0
      %v636 = vmax.f32 %v566, 0.0
      %v637 = vmax.f32 %v571, 0.0
      %v638 = vmax.f32 %v574, 0.0
      %v639 = vmax.f32 %v579, 0.0
      %v640 = vmax.f32 %v582, 0.0
      %v641 = vmax.f32 %v587, 0.0
      %v642 = vmax.f32 %v590, 0.0
      %v643 = vmax.f32 %v595, 0.0
      %v644 = vmax.f32 %v598, 0.0
      %v645 = vmax.f32 %v603, 0.0
      %v646 = vmax.f32 %v606, 0.0
      %v647 = vmax.f32 %v611, 0.0
      %v648 = vmax.f32 %v614, 0.0
      %vm649 = vcmask 27648
      %650 = vst.msk [vmem:[#allocation2] sm:$0xf] %vm649, 0
      %651 = vst.msk [vmem:[#allocation2 + $0x4] sm:$0xf] %vm649, 0
      %652 = vst.msk [vmem:[#allocation2 + $0x8] sm:$0xf] %vm649, 0
      %653 = vst.msk [vmem:[#allocation2 + $0xc] sm:$0xf] %vm649, 0
      %654 = vst.msk [vmem:[#allocation2 + $0x10] sm:$0xf] %vm649, 0
      %655 = vst.msk [vmem:[#allocation2 + $0x14] sm:$0xf] %vm649, 0
      %s656 = scalar_lea.vmem [#allocation2], 216
      %657 = vst.msk [vmem:[%s656] sm:$0xf] %vm649, 0
      %658 = vst.msk [vmem:[%s656 + $0x4] sm:$0xf] %vm649, 0
      %659 = vst.msk [vmem:[%s656 + $0x8] sm:$0xf] %vm649, 0
      %660 = vst.msk [vmem:[%s656 + $0xc] sm:$0xf] %vm649, 0
      %661 = vst.msk [vmem:[%s656 + $0x10] sm:$0xf] %vm649, 0
      %662 = vst.msk [vmem:[%s656 + $0x14] sm:$0xf] %vm649, 0
      %s663 = scalar_lea.vmem [#allocation2], 24
      %664 = vst.msk [vmem:[%s663 + $0x8] sm:$0xf] %vm649, 0
      %665 = vst.msk [vmem:[%s663 + $0x14] sm:$0xf] %vm649, 0
      %666 = vst.msk [vmem:[%s663 + $0x20] sm:$0xf] %vm649, 0
      %667 = vst.msk [vmem:[%s663 + $0x2c] sm:$0xf] %vm649, 0
      %668 = vst.msk [vmem:[%s663 + $0x38] sm:$0xf] %vm649, 0
      %669 = vst.msk [vmem:[%s663 + $0x44] sm:$0xf] %vm649, 0
      %670 = vst.msk [vmem:[%s663 + $0x50] sm:$0xf] %vm649, 0
      %671 = vst.msk [vmem:[%s663 + $0x5c] sm:$0xf] %vm649, 0
      %672 = vst.msk [vmem:[%s663 + $0x68] sm:$0xf] %vm649, 0
      %673 = vst.msk [vmem:[%s663 + $0x74] sm:$0xf] %vm649, 0
      %674 = vst.msk [vmem:[%s663 + $0x80] sm:$0xf] %vm649, 0
      %675 = vst.msk [vmem:[%s663 + $0x8c] sm:$0xf] %vm649, 0
      %676 = vst.msk [vmem:[%s663 + $0x98] sm:$0xf] %vm649, 0
      %677 = vst.msk [vmem:[%s663 + $0xa4] sm:$0xf] %vm649, 0
      %678 = vst.msk [vmem:[%s663 + $0xb0] sm:$0xf] %vm649, 0
      %679 = vst.msk [vmem:[%s663 + $0xbc] sm:$0xf] %vm649, 0
      %v680 = vpack.c.bf16 %v618, %v617
      %v681 = vpack.c.bf16 %v620, %v619
      %v682 = vpack.c.bf16 %v622, %v621
      %v683 = vpack.c.bf16 %v624, %v623
      %v684 = vpack.c.bf16 %v626, %v625
      %v685 = vpack.c.bf16 %v628, %v627
      %v686 = vpack.c.bf16 %v630, %v629
      %v687 = vpack.c.bf16 %v632, %v631
      %v688 = vpack.c.bf16 %v634, %v633
      %v689 = vpack.c.bf16 %v636, %v635
      %v690 = vpack.c.bf16 %v638, %v637
      %v691 = vpack.c.bf16 %v640, %v639
      %v692 = vpack.c.bf16 %v642, %v641
      %v693 = vpack.c.bf16 %v644, %v643
      %v694 = vpack.c.bf16 %v646, %v645
      %v695 = vpack.c.bf16 %v648, %v647
      %v712 = vunpack.c.l.b16 %v680
      %v713 = vunpack.c.h.b16 %v680
      %v714 = vunpack.c.l.b16 %v681
      %v715 = vunpack.c.h.b16 %v681
      %v716 = vunpack.c.l.b16 %v682
      %v717 = vunpack.c.h.b16 %v682
      %v718 = vunpack.c.l.b16 %v683
      %v719 = vunpack.c.h.b16 %v683
      %v720 = vunpack.c.l.b16 %v684
      %v721 = vunpack.c.h.b16 %v684
      %v722 = vunpack.c.l.b16 %v685
      %v723 = vunpack.c.h.b16 %v685
      %v724 = vunpack.c.l.b16 %v686
      %v725 = vunpack.c.h.b16 %v686
      %v726 = vunpack.c.l.b16 %v687
      %v727 = vunpack.c.h.b16 %v687
      %v728 = vunpack.c.l.b16 %v688
      %v729 = vunpack.c.h.b16 %v688
      %v730 = vunpack.c.l.b16 %v689
      %v731 = vunpack.c.h.b16 %v689
      %v732 = vunpack.c.l.b16 %v690
      %v733 = vunpack.c.h.b16 %v690
      %v734 = vunpack.c.l.b16 %v691
      %v735 = vunpack.c.h.b16 %v691
      %v736 = vunpack.c.l.b16 %v692
      %v737 = vunpack.c.h.b16 %v692
      %v738 = vunpack.c.l.b16 %v693
      %v739 = vunpack.c.h.b16 %v693
      %v740 = vunpack.c.l.b16 %v694
      %v741 = vunpack.c.h.b16 %v694
      %v742 = vunpack.c.l.b16 %v695
      %v743 = vunpack.c.h.b16 %v695
      %v744 = vpack.c.b16 %v712, %v712
      %v745 = vpack.c.b16 %v713, %v713
      %v746 = vpack.c.b16 %v714, %v714
      %v747 = vpack.c.b16 %v715, %v715
      %v748 = vpack.c.b16 %v716, %v716
      %v749 = vpack.c.b16 %v717, %v717
      %v750 = vpack.c.b16 %v718, %v718
      %v751 = vpack.c.b16 %v719, %v719
      %v752 = vpack.c.b16 %v720, %v720
      %v753 = vpack.c.b16 %v721, %v721
      %v754 = vpack.c.b16 %v722, %v722
      %v755 = vpack.c.b16 %v723, %v723
      %v756 = vpack.c.b16 %v724, %v724
      %v757 = vpack.c.b16 %v725, %v725
      %v758 = vpack.c.b16 %v726, %v726
      %v759 = vpack.c.b16 %v727, %v727
      %v760 = vpack.c.b16 %v728, %v728
      %v761 = vpack.c.b16 %v729, %v729
      %v762 = vpack.c.b16 %v730, %v730
      %v763 = vpack.c.b16 %v731, %v731
      %v764 = vpack.c.b16 %v732, %v732
      %v765 = vpack.c.b16 %v733, %v733
      %v766 = vpack.c.b16 %v734, %v734
      %v767 = vpack.c.b16 %v735, %v735
      %v768 = vpack.c.b16 %v736, %v736
      %v769 = vpack.c.b16 %v737, %v737
      %v770 = vpack.c.b16 %v738, %v738
      %v771 = vpack.c.b16 %v739, %v739
      %v772 = vpack.c.b16 %v740, %v740
      %v773 = vpack.c.b16 %v741, %v741
      %v774 = vpack.c.b16 %v742, %v742
      %v775 = vpack.c.b16 %v743, %v743
      %808 = vst.msk [vmem:[%s663] sm:$0xf] %vm649, %v744
      %809 = vst.msk [vmem:[%s663 + $0x4] sm:$0xf] %vm649, %v745
      %810 = vst.msk [vmem:[%s663 + $0xc] sm:$0xf] %vm649, %v746
      %811 = vst.msk [vmem:[%s663 + $0x10] sm:$0xf] %vm649, %v747
      %812 = vst.msk [vmem:[%s663 + $0x18] sm:$0xf] %vm649, %v748
      %813 = vst.msk [vmem:[%s663 + $0x1c] sm:$0xf] %vm649, %v749
      %814 = vst.msk [vmem:[%s663 + $0x24] sm:$0xf] %vm649, %v750
      %815 = vst.msk [vmem:[%s663 + $0x28] sm:$0xf] %vm649, %v751
      %816 = vst.msk [vmem:[%s663 + $0x30] sm:$0xf] %vm649, %v752
      %817 = vst.msk [vmem:[%s663 + $0x34] sm:$0xf] %vm649, %v753
      %818 = vst.msk [vmem:[%s663 + $0x3c] sm:$0xf] %vm649, %v754
      %819 = vst.msk [vmem:[%s663 + $0x40] sm:$0xf] %vm649, %v755
      %820 = vst.msk [vmem:[%s663 + $0x48] sm:$0xf] %vm649, %v756
      %821 = vst.msk [vmem:[%s663 + $0x4c] sm:$0xf] %vm649, %v757
      %822 = vst.msk [vmem:[%s663 + $0x54] sm:$0xf] %vm649, %v758
      %823 = vst.msk [vmem:[%s663 + $0x58] sm:$0xf] %vm649, %v759
      %824 = vst.msk [vmem:[%s663 + $0x60] sm:$0xf] %vm649, %v760
      %825 = vst.msk [vmem:[%s663 + $0x64] sm:$0xf] %vm649, %v761
      %826 = vst.msk [vmem:[%s663 + $0x6c] sm:$0xf] %vm649, %v762
      %827 = vst.msk [vmem:[%s663 + $0x70] sm:$0xf] %vm649, %v763
      %828 = vst.msk [vmem:[%s663 + $0x78] sm:$0xf] %vm649, %v764
      %829 = vst.msk [vmem:[%s663 + $0x7c] sm:$0xf] %vm649, %v765
      %830 = vst.msk [vmem:[%s663 + $0x84] sm:$0xf] %vm649, %v766
      %831 = vst.msk [vmem:[%s663 + $0x88] sm:$0xf] %vm649, %v767
      %832 = vst.msk [vmem:[%s663 + $0x90] sm:$0xf] %vm649, %v768
      %833 = vst.msk [vmem:[%s663 + $0x94] sm:$0xf] %vm649, %v769
      %834 = vst.msk [vmem:[%s663 + $0x9c] sm:$0xf] %vm649, %v770
      %835 = vst.msk [vmem:[%s663 + $0xa0] sm:$0xf] %vm649, %v771
      %836 = vst.msk [vmem:[%s663 + $0xa8] sm:$0xf] %vm649, %v772
      %837 = vst.msk [vmem:[%s663 + $0xac] sm:$0xf] %vm649, %v773
      %838 = vst.msk [vmem:[%s663 + $0xb4] sm:$0xf] %vm649, %v774
      %839 = vst.msk [vmem:[%s663 + $0xb8] sm:$0xf] %vm649, %v775
      %v840 = vld [vmem:[#allocation2 + $0x8] sm:$0xf]
      %v841 = vld [vmem:[#allocation2 + $0xc] sm:$0xf]
      %v842 = vld [vmem:[#allocation2 + $0x10] sm:$0xf]
      %v843 = vld [vmem:[#allocation2 + $0x14] sm:$0xf]
      %v844 = vld [vmem:[#allocation2 + $0x18] sm:$0xf]
      %v845 = vld [vmem:[#allocation2 + $0x1c] sm:$0xf]
      %v846 = vld [vmem:[#allocation2 + $0x20] sm:$0xf]
      %v847 = vld [vmem:[#allocation2 + $0x24] sm:$0xf]
      %v848 = vld [vmem:[#allocation2 + $0x28] sm:$0xf]
      %v849 = vld [vmem:[#allocation2 + $0x2c] sm:$0xf]
      %v850 = vld [vmem:[#allocation2 + $0x30] sm:$0xf]
      %v851 = vld [vmem:[#allocation2 + $0x34] sm:$0xf]
      %v852 = vld [vmem:[#allocation2 + $0x38] sm:$0xf]
      %v853 = vld [vmem:[#allocation2 + $0x3c] sm:$0xf]
      %v854 = vld [vmem:[#allocation2 + $0x40] sm:$0xf]
      %v855 = vld [vmem:[#allocation2 + $0x44] sm:$0xf]
      %v856 = vld [vmem:[#allocation2 + $0x48] sm:$0xf]
      %v857 = vld [vmem:[#allocation2 + $0x4c] sm:$0xf]
      %v858 = vld [vmem:[#allocation2 + $0x50] sm:$0xf]
      %v859 = vld [vmem:[#allocation2 + $0x54] sm:$0xf]
      %v860 = vld [vmem:[#allocation2 + $0x58] sm:$0xf]
      %v861 = vld [vmem:[#allocation2 + $0x5c] sm:$0xf]
      %v862 = vld [vmem:[#allocation2 + $0x60] sm:$0xf]
      %v863 = vld [vmem:[#allocation2 + $0x64] sm:$0xf]
      %v864 = vld [vmem:[#allocation2 + $0x68] sm:$0xf]
      %v865 = vld [vmem:[#allocation2 + $0x6c] sm:$0xf]
      %v866 = vld [vmem:[#allocation2 + $0x70] sm:$0xf]
      %v867 = vld [vmem:[#allocation2 + $0x74] sm:$0xf]
      %v868 = vld [vmem:[#allocation2 + $0x78] sm:$0xf]
      %v869 = vld [vmem:[#allocation2 + $0x7c] sm:$0xf]
      %v870 = vld [vmem:[#allocation2 + $0x80] sm:$0xf]
      %v871 = vld [vmem:[#allocation2 + $0x84] sm:$0xf]
      %v872 = vld [vmem:[#allocation2 + $0x88] sm:$0xf]
      %v873 = vld [vmem:[#allocation2 + $0x8c] sm:$0xf]
      %v874 = vld [vmem:[#allocation2 + $0x90] sm:$0xf]
      %v875 = vld [vmem:[#allocation2 + $0x94] sm:$0xf]
      %v876 = vld [vmem:[#allocation2 + $0x98] sm:$0xf]
      %v877 = vld [vmem:[#allocation2 + $0x9c] sm:$0xf]
      %v878 = vld [vmem:[#allocation2 + $0xa0] sm:$0xf]
      %v879 = vld [vmem:[#allocation2 + $0xa4] sm:$0xf]
      %v880 = vld [vmem:[#allocation2 + $0xa8] sm:$0xf]
      %v881 = vld [vmem:[#allocation2 + $0xac] sm:$0xf]
      %v882 = vld [vmem:[#allocation2 + $0xb0] sm:$0xf]
      %v883 = vld [vmem:[#allocation2 + $0xb4] sm:$0xf]
      %v884 = vld [vmem:[#allocation2 + $0xb8] sm:$0xf]
      %v885 = vld [vmem:[#allocation2 + $0xbc] sm:$0xf]
      %v886 = vld [vmem:[#allocation2 + $0xc0] sm:$0xf]
      %v887 = vld [vmem:[#allocation2 + $0xc4] sm:$0xf]
      %v888 = vld [vmem:[#allocation2 + $0xc8] sm:$0xf]
      %v889 = vld [vmem:[#allocation2 + $0xcc] sm:$0xf]
      %v890 = vld [vmem:[#allocation2 + $0xd0] sm:$0xf]
      %v891 = vld [vmem:[#allocation2 + $0xd4] sm:$0xf]
      %v892 = vld [vmem:[#allocation2 + $0xd8] sm:$0xf]
      %v893 = vld [vmem:[#allocation2 + $0xdc] sm:$0xf]
      %v894 = vld [vmem:[#allocation2 + $0xe0] sm:$0xf]
      %v895 = vld [vmem:[#allocation2 + $0xe4] sm:$0xf]
      %vm896 = vsmask.f32 256
      %vm897 = vsmask.f32 4368
      %vm898 = vmor %vm896, %vm897
      %v900 = vshrl.u32 %v840, 16
      %v902 = vrot.slane %v900, 7
      %v903 = vrot.slane %v902, 4
      %v905 = vshrl.u32 %v841, 16
      %v907 = vrot.slane %v905, 7
      %v908 = vshll.u32 %v841, 16
      %v910 = vor.u32 %v907, %v908
      %v911 = vsel %vm898, %v903, %v910
      %v912 = vrot.slane %v907, 4
      %v914 = vshrl.u32 %v842, 16
      %v916 = vrot.slane %v914, 7
      %v917 = vshll.u32 %v842, 16
      %v919 = vor.u32 %v916, %v917
      %v920 = vsel %vm898, %v912, %v919
      %v921 = vrot.slane %v916, 4
      %v923 = vshrl.u32 %v843, 16
      %v925 = vrot.slane %v923, 7
      %v926 = vshll.u32 %v843, 16
      %v928 = vor.u32 %v925, %v926
      %v929 = vsel %vm898, %v921, %v928
      %v930 = vrot.slane %v925, 4
      %v932 = vshrl.u32 %v844, 16
      %v934 = vrot.slane %v932, 7
      %v935 = vshll.u32 %v844, 16
      %v937 = vor.u32 %v934, %v935
      %v938 = vsel %vm898, %v930, %v937
      %v939 = vrot.slane %v934, 4
      %v941 = vshrl.u32 %v845, 16
      %v943 = vrot.slane %v941, 7
      %v944 = vshll.u32 %v845, 16
      %v946 = vor.u32 %v943, %v944
      %v947 = vsel %vm898, %v939, %v946
      %v948 = vrot.slane %v943, 4
      %v950 = vshrl.u32 %v846, 16
      %v952 = vrot.slane %v950, 7
      %v953 = vshll.u32 %v846, 16
      %v955 = vor.u32 %v952, %v953
      %v956 = vsel %vm898, %v948, %v955
      %v957 = vrot.slane %v952, 4
      %v959 = vshrl.u32 %v847, 16
      %v961 = vrot.slane %v959, 7
      %v962 = vshll.u32 %v847, 16
      %v964 = vor.u32 %v961, %v962
      %v965 = vsel %vm898, %v957, %v964
      %v966 = vrot.slane %v961, 4
      %v968 = vshrl.u32 %v848, 16
      %v970 = vrot.slane %v968, 7
      %v971 = vshll.u32 %v848, 16
      %v973 = vor.u32 %v970, %v971
      %v974 = vsel %vm898, %v966, %v973
      %v975 = vrot.slane %v970, 4
      %v977 = vshrl.u32 %v849, 16
      %v979 = vrot.slane %v977, 7
      %v980 = vshll.u32 %v849, 16
      %v982 = vor.u32 %v979, %v980
      %v983 = vsel %vm898, %v975, %v982
      %v984 = vrot.slane %v979, 4
      %v986 = vshrl.u32 %v850, 16
      %v988 = vrot.slane %v986, 7
      %v989 = vshll.u32 %v850, 16
      %v991 = vor.u32 %v988, %v989
      %v992 = vsel %vm898, %v984, %v991
      %v993 = vrot.slane %v988, 4
      %v995 = vshrl.u32 %v851, 16
      %v997 = vrot.slane %v995, 7
      %v998 = vshll.u32 %v851, 16
      %v1000 = vor.u32 %v997, %v998
      %v1001 = vsel %vm898, %v993, %v1000
      %v1002 = vrot.slane %v997, 4
      %v1004 = vshrl.u32 %v852, 16
      %v1006 = vrot.slane %v1004, 7
      %v1007 = vshll.u32 %v852, 16
      %v1009 = vor.u32 %v1006, %v1007
      %v1010 = vsel %vm898, %v1002, %v1009
      %v1011 = vrot.slane %v1006, 4
      %v1013 = vshrl.u32 %v853, 16
      %v1015 = vrot.slane %v1013, 7
      %v1016 = vshll.u32 %v853, 16
      %v1018 = vor.u32 %v1015, %v1016
      %v1019 = vsel %vm898, %v1011, %v1018
      %v1020 = vrot.slane %v1015, 4
      %v1022 = vshrl.u32 %v854, 16
      %v1024 = vrot.slane %v1022, 7
      %v1025 = vshll.u32 %v854, 16
      %v1027 = vor.u32 %v1024, %v1025
      %v1028 = vsel %vm898, %v1020, %v1027
      %v1029 = vrot.slane %v1024, 4
      %v1031 = vshrl.u32 %v855, 16
      %v1033 = vrot.slane %v1031, 7
      %v1034 = vshll.u32 %v855, 16
      %v1036 = vor.u32 %v1033, %v1034
      %v1037 = vsel %vm898, %v1029, %v1036
      %v1038 = vrot.slane %v1033, 4
      %v1040 = vshrl.u32 %v856, 16
      %v1042 = vrot.slane %v1040, 7
      %v1043 = vshll.u32 %v856, 16
      %v1045 = vor.u32 %v1042, %v1043
      %v1046 = vsel %vm898, %v1038, %v1045
      %v1047 = vrot.slane %v1042, 4
      %v1049 = vshrl.u32 %v857, 16
      %v1051 = vrot.slane %v1049, 7
      %v1052 = vshll.u32 %v857, 16
      %v1054 = vor.u32 %v1051, %v1052
      %v1055 = vsel %vm898, %v1047, %v1054
      %v1056 = vrot.slane %v1051, 4
      %v1058 = vshrl.u32 %v858, 16
      %v1060 = vrot.slane %v1058, 7
      %v1061 = vshll.u32 %v858, 16
      %v1063 = vor.u32 %v1060, %v1061
      %v1064 = vsel %vm898, %v1056, %v1063
      %v1065 = vrot.slane %v1060, 4
      %v1067 = vshrl.u32 %v859, 16
      %v1069 = vrot.slane %v1067, 7
      %v1070 = vshll.u32 %v859, 16
      %v1072 = vor.u32 %v1069, %v1070
      %v1073 = vsel %vm898, %v1065, %v1072
      %v1074 = vrot.slane %v1069, 4
      %v1076 = vshrl.u32 %v860, 16
      %v1078 = vrot.slane %v1076, 7
      %v1079 = vshll.u32 %v860, 16
      %v1081 = vor.u32 %v1078, %v1079
      %v1082 = vsel %vm898, %v1074, %v1081
      %v1083 = vrot.slane %v1078, 4
      %v1085 = vshrl.u32 %v861, 16
      %v1087 = vrot.slane %v1085, 7
      %v1088 = vshll.u32 %v861, 16
      %v1090 = vor.u32 %v1087, %v1088
      %v1091 = vsel %vm898, %v1083, %v1090
      %v1092 = vrot.slane %v1087, 4
      %v1094 = vshrl.u32 %v862, 16
      %v1096 = vrot.slane %v1094, 7
      %v1097 = vshll.u32 %v862, 16
      %v1099 = vor.u32 %v1096, %v1097
      %v1100 = vsel %vm898, %v1092, %v1099
      %v1101 = vrot.slane %v1096, 4
      %v1103 = vshrl.u32 %v863, 16
      %v1105 = vrot.slane %v1103, 7
      %v1106 = vshll.u32 %v863, 16
      %v1108 = vor.u32 %v1105, %v1106
      %v1109 = vsel %vm898, %v1101, %v1108
      %v1110 = vrot.slane %v1105, 4
      %v1112 = vshrl.u32 %v864, 16
      %v1114 = vrot.slane %v1112, 7
      %v1115 = vshll.u32 %v864, 16
      %v1117 = vor.u32 %v1114, %v1115
      %v1118 = vsel %vm898, %v1110, %v1117
      %v1119 = vrot.slane %v1114, 4
      %v1121 = vshrl.u32 %v865, 16
      %v1123 = vrot.slane %v1121, 7
      %v1124 = vshll.u32 %v865, 16
      %v1126 = vor.u32 %v1123, %v1124
      %v1127 = vsel %vm898, %v1119, %v1126
      %v1128 = vrot.slane %v1123, 4
      %v1130 = vshrl.u32 %v866, 16
      %v1132 = vrot.slane %v1130, 7
      %v1133 = vshll.u32 %v866, 16
      %v1135 = vor.u32 %v1132, %v1133
      %v1136 = vsel %vm898, %v1128, %v1135
      %v1137 = vrot.slane %v1132, 4
      %v1139 = vshrl.u32 %v867, 16
      %v1141 = vrot.slane %v1139, 7
      %v1142 = vshll.u32 %v867, 16
      %v1144 = vor.u32 %v1141, %v1142
      %v1145 = vsel %vm898, %v1137, %v1144
      %v1146 = vrot.slane %v1141, 4
      %v1148 = vshrl.u32 %v868, 16
      %v1150 = vrot.slane %v1148, 7
      %v1151 = vshll.u32 %v868, 16
      %v1153 = vor.u32 %v1150, %v1151
      %v1154 = vsel %vm898, %v1146, %v1153
      %v1155 = vrot.slane %v1150, 4
      %v1157 = vshrl.u32 %v869, 16
      %v1159 = vrot.slane %v1157, 7
      %v1160 = vshll.u32 %v869, 16
      %v1162 = vor.u32 %v1159, %v1160
      %v1163 = vsel %vm898, %v1155, %v1162
      %v1164 = vrot.slane %v1159, 4
      %v1166 = vshrl.u32 %v870, 16
      %v1168 = vrot.slane %v1166, 7
      %v1169 = vshll.u32 %v870, 16
      %v1171 = vor.u32 %v1168, %v1169
      %v1172 = vsel %vm898, %v1164, %v1171
      %v1173 = vrot.slane %v1168, 4
      %v1175 = vshrl.u32 %v871, 16
      %v1177 = vrot.slane %v1175, 7
      %v1178 = vshll.u32 %v871, 16
      %v1180 = vor.u32 %v1177, %v1178
      %v1181 = vsel %vm898, %v1173, %v1180
      %v1182 = vrot.slane %v1177, 4
      %v1184 = vshrl.u32 %v872, 16
      %v1186 = vrot.slane %v1184, 7
      %v1187 = vshll.u32 %v872, 16
      %v1189 = vor.u32 %v1186, %v1187
      %v1190 = vsel %vm898, %v1182, %v1189
      %v1191 = vrot.slane %v1186, 4
      %v1193 = vshrl.u32 %v873, 16
      %v1195 = vrot.slane %v1193, 7
      %v1196 = vshll.u32 %v873, 16
      %v1198 = vor.u32 %v1195, %v1196
      %v1199 = vsel %vm898, %v1191, %v1198
      %v1200 = vrot.slane %v1195, 4
      %v1202 = vshrl.u32 %v874, 16
      %v1204 = vrot.slane %v1202, 7
      %v1205 = vshll.u32 %v874, 16
      %v1207 = vor.u32 %v1204, %v1205
      %v1208 = vsel %vm898, %v1200, %v1207
      %v1209 = vrot.slane %v1204, 4
      %v1211 = vshrl.u32 %v875, 16
      %v1213 = vrot.slane %v1211, 7
      %v1214 = vshll.u32 %v875, 16
      %v1216 = vor.u32 %v1213, %v1214
      %v1217 = vsel %vm898, %v1209, %v1216
      %v1218 = vrot.slane %v1213, 4
      %v1220 = vshrl.u32 %v876, 16
      %v1222 = vrot.slane %v1220, 7
      %v1223 = vshll.u32 %v876, 16
      %v1225 = vor.u32 %v1222, %v1223
      %v1226 = vsel %vm898, %v1218, %v1225
      %v1227 = vrot.slane %v1222, 4
      %v1229 = vshrl.u32 %v877, 16
      %v1231 = vrot.slane %v1229, 7
      %v1232 = vshll.u32 %v877, 16
      %v1234 = vor.u32 %v1231, %v1232
      %v1235 = vsel %vm898, %v1227, %v1234
      %v1236 = vrot.slane %v1231, 4
      %v1238 = vshrl.u32 %v878, 16
      %v1240 = vrot.slane %v1238, 7
      %v1241 = vshll.u32 %v878, 16
      %v1243 = vor.u32 %v1240, %v1241
      %v1244 = vsel %vm898, %v1236, %v1243
      %v1245 = vrot.slane %v1240, 4
      %v1247 = vshrl.u32 %v879, 16
      %v1249 = vrot.slane %v1247, 7
      %v1250 = vshll.u32 %v879, 16
      %v1252 = vor.u32 %v1249, %v1250
      %v1253 = vsel %vm898, %v1245, %v1252
      %v1254 = vrot.slane %v1249, 4
      %v1256 = vshrl.u32 %v880, 16
      %v1258 = vrot.slane %v1256, 7
      %v1259 = vshll.u32 %v880, 16
      %v1261 = vor.u32 %v1258, %v1259
      %v1262 = vsel %vm898, %v1254, %v1261
      %v1263 = vrot.slane %v1258, 4
      %v1265 = vshrl.u32 %v881, 16
      %v1267 = vrot.slane %v1265, 7
      %v1268 = vshll.u32 %v881, 16
      %v1270 = vor.u32 %v1267, %v1268
      %v1271 = vsel %vm898, %v1263, %v1270
      %v1272 = vrot.slane %v1267, 4
      %v1274 = vshrl.u32 %v882, 16
      %v1276 = vrot.slane %v1274, 7
      %v1277 = vshll.u32 %v882, 16
      %v1279 = vor.u32 %v1276, %v1277
      %v1280 = vsel %vm898, %v1272, %v1279
      %v1281 = vrot.slane %v1276, 4
      %v1283 = vshrl.u32 %v883, 16
      %v1285 = vrot.slane %v1283, 7
      %v1286 = vshll.u32 %v883, 16
      %v1288 = vor.u32 %v1285, %v1286
      %v1289 = vsel %vm898, %v1281, %v1288
      %v1290 = vrot.slane %v1285, 4
      %v1292 = vshrl.u32 %v884, 16
      %v1294 = vrot.slane %v1292, 7
      %v1295 = vshll.u32 %v884, 16
      %v1297 = vor.u32 %v1294, %v1295
      %v1298 = vsel %vm898, %v1290, %v1297
      %v1299 = vrot.slane %v1294, 4
      %v1301 = vshrl.u32 %v885, 16
      %v1303 = vrot.slane %v1301, 7
      %v1304 = vshll.u32 %v885, 16
      %v1306 = vor.u32 %v1303, %v1304
      %v1307 = vsel %vm898, %v1299, %v1306
      %v1308 = vrot.slane %v1303, 4
      %v1310 = vshrl.u32 %v886, 16
      %v1312 = vrot.slane %v1310, 7
      %v1313 = vshll.u32 %v886, 16
      %v1315 = vor.u32 %v1312, %v1313
      %v1316 = vsel %vm898, %v1308, %v1315
      %v1317 = vrot.slane %v1312, 4
      %v1319 = vshrl.u32 %v887, 16
      %v1321 = vrot.slane %v1319, 7
      %v1322 = vshll.u32 %v887, 16
      %v1324 = vor.u32 %v1321, %v1322
      %v1325 = vsel %vm898, %v1317, %v1324
      %v1326 = vrot.slane %v1321, 4
      %v1328 = vshrl.u32 %v888, 16
      %v1330 = vrot.slane %v1328, 7
      %v1331 = vshll.u32 %v888, 16
      %v1333 = vor.u32 %v1330, %v1331
      %v1334 = vsel %vm898, %v1326, %v1333
      %1383 = vst.msk [vmem:[#allocation3] sm:$0xf] %vm649, %v911
      %1384 = vst.msk [vmem:[#allocation3 + $0x4] sm:$0xf] %vm649, %v920
      %1385 = vst.msk [vmem:[#allocation3 + $0x8] sm:$0xf] %vm649, %v929
      %1386 = vst.msk [vmem:[#allocation3 + $0xc] sm:$0xf] %vm649, %v938
      %1387 = vst.msk [vmem:[#allocation3 + $0x10] sm:$0xf] %vm649, %v947
      %1388 = vst.msk [vmem:[#allocation3 + $0x14] sm:$0xf] %vm649, %v956
      %1389 = vst.msk [vmem:[#allocation3 + $0x18] sm:$0xf] %vm649, %v965
      %1390 = vst.msk [vmem:[#allocation3 + $0x1c] sm:$0xf] %vm649, %v974
      %1391 = vst.msk [vmem:[#allocation3 + $0x20] sm:$0xf] %vm649, %v983
      %1392 = vst.msk [vmem:[#allocation3 + $0x24] sm:$0xf] %vm649, %v992
      %1393 = vst.msk [vmem:[#allocation3 + $0x28] sm:$0xf] %vm649, %v1001
      %1394 = vst.msk [vmem:[#allocation3 + $0x2c] sm:$0xf] %vm649, %v1010
      %1395 = vst.msk [vmem:[#allocation3 + $0x30] sm:$0xf] %vm649, %v1019
      %1396 = vst.msk [vmem:[#allocation3 + $0x34] sm:$0xf] %vm649, %v1028
      %1397 = vst.msk [vmem:[#allocation3 + $0x38] sm:$0xf] %vm649, %v1037
      %1398 = vst.msk [vmem:[#allocation3 + $0x3c] sm:$0xf] %vm649, %v1046
      %1399 = vst.msk [vmem:[#allocation3 + $0x40] sm:$0xf] %vm649, %v1055
      %1400 = vst.msk [vmem:[#allocation3 + $0x44] sm:$0xf] %vm649, %v1064
      %1401 = vst.msk [vmem:[#allocation3 + $0x48] sm:$0xf] %vm649, %v1073
      %1402 = vst.msk [vmem:[#allocation3 + $0x4c] sm:$0xf] %vm649, %v1082
      %1403 = vst.msk [vmem:[#allocation3 + $0x50] sm:$0xf] %vm649, %v1091
      %1404 = vst.msk [vmem:[#allocation3 + $0x54] sm:$0xf] %vm649, %v1100
      %1405 = vst.msk [vmem:[#allocation3 + $0x58] sm:$0xf] %vm649, %v1109
      %1406 = vst.msk [vmem:[#allocation3 + $0x5c] sm:$0xf] %vm649, %v1118
      %1407 = vst.msk [vmem:[#allocation3 + $0x60] sm:$0xf] %vm649, %v1127
      %1408 = vst.msk [vmem:[#allocation3 + $0x64] sm:$0xf] %vm649, %v1136
      %1409 = vst.msk [vmem:[#allocation3 + $0x68] sm:$0xf] %vm649, %v1145
      %1410 = vst.msk [vmem:[#allocation3 + $0x6c] sm:$0xf] %vm649, %v1154
      %1411 = vst.msk [vmem:[#allocation3 + $0x70] sm:$0xf] %vm649, %v1163
      %1412 = vst.msk [vmem:[#allocation3 + $0x74] sm:$0xf] %vm649, %v1172
      %1413 = vst.msk [vmem:[#allocation3 + $0x78] sm:$0xf] %vm649, %v1181
      %1414 = vst.msk [vmem:[#allocation3 + $0x7c] sm:$0xf] %vm649, %v1190
      %1415 = vst.msk [vmem:[#allocation3 + $0x80] sm:$0xf] %vm649, %v1199
      %1416 = vst.msk [vmem:[#allocation3 + $0x84] sm:$0xf] %vm649, %v1208
      %1417 = vst.msk [vmem:[#allocation3 + $0x88] sm:$0xf] %vm649, %v1217
      %1418 = vst.msk [vmem:[#allocation3 + $0x8c] sm:$0xf] %vm649, %v1226
      %1419 = vst.msk [vmem:[#allocation3 + $0x90] sm:$0xf] %vm649, %v1235
      %1420 = vst.msk [vmem:[#allocation3 + $0x94] sm:$0xf] %vm649, %v1244
      %1421 = vst.msk [vmem:[#allocation3 + $0x98] sm:$0xf] %vm649, %v1253
      %1422 = vst.msk [vmem:[#allocation3 + $0x9c] sm:$0xf] %vm649, %v1262
      %1423 = vst.msk [vmem:[#allocation3 + $0xa0] sm:$0xf] %vm649, %v1271
      %1424 = vst.msk [vmem:[#allocation3 + $0xa4] sm:$0xf] %vm649, %v1280
      %1425 = vst.msk [vmem:[#allocation3 + $0xa8] sm:$0xf] %vm649, %v1289
      %1426 = vst.msk [vmem:[#allocation3 + $0xac] sm:$0xf] %vm649, %v1298
      %1427 = vst.msk [vmem:[#allocation3 + $0xb0] sm:$0xf] %vm649, %v1307
      %1428 = vst.msk [vmem:[#allocation3 + $0xb4] sm:$0xf] %vm649, %v1316
      %1429 = vst.msk [vmem:[#allocation3 + $0xb8] sm:$0xf] %vm649, %v1325
      %1430 = vst.msk [vmem:[#allocation3 + $0xbc] sm:$0xf] %vm649, %v1334
      %1479 = vrot.lane.b32.xlu0 %v841, 4
      %v1480 = vpop.permute.xlu0 %1479
      %1481 = vrot.lane.b32.xlu0 %v842, 4
      %v1482 = vpop.permute.xlu0 %1481
      %1483 = vrot.lane.b32.xlu0 %v843, 4
      %v1484 = vpop.permute.xlu0 %1483
      %1485 = vrot.lane.b32.xlu0 %v844, 4
      %v1486 = vpop.permute.xlu0 %1485
      %1487 = vrot.lane.b32.xlu0 %v845, 4
      %v1488 = vpop.permute.xlu0 %1487
      %1489 = vrot.lane.b32.xlu0 %v846, 4
      %v1490 = vpop.permute.xlu0 %1489
      %1491 = vrot.lane.b32.xlu0 %v847, 4
      %v1492 = vpop.permute.xlu0 %1491
      %1493 = vrot.lane.b32.xlu0 %v848, 4
      %v1494 = vpop.permute.xlu0 %1493
      %1495 = vrot.lane.b32.xlu0 %v849, 4
      %v1496 = vpop.permute.xlu0 %1495
      %1497 = vrot.lane.b32.xlu0 %v850, 4
      %v1498 = vpop.permute.xlu0 %1497
      %1499 = vrot.lane.b32.xlu0 %v851, 4
      %v1500 = vpop.permute.xlu0 %1499
      %1501 = vrot.lane.b32.xlu0 %v852, 4
      %v1502 = vpop.permute.xlu0 %1501
      %1503 = vrot.lane.b32.xlu0 %v853, 4
      %v1504 = vpop.permute.xlu0 %1503
      %1505 = vrot.lane.b32.xlu0 %v854, 4
      %v1506 = vpop.permute.xlu0 %1505
      %1507 = vrot.lane.b32.xlu0 %v855, 4
      %v1508 = vpop.permute.xlu0 %1507
      %1509 = vrot.lane.b32.xlu0 %v856, 4
      %v1510 = vpop.permute.xlu0 %1509
      %1511 = vrot.lane.b32.xlu0 %v857, 4
      %v1512 = vpop.permute.xlu0 %1511
      %1513 = vrot.lane.b32.xlu0 %v858, 4
      %v1514 = vpop.permute.xlu0 %1513
      %1515 = vrot.lane.b32.xlu0 %v859, 4
      %v1516 = vpop.permute.xlu0 %1515
      %1517 = vrot.lane.b32.xlu0 %v860, 4
      %v1518 = vpop.permute.xlu0 %1517
      %1519 = vrot.lane.b32.xlu0 %v861, 4
      %v1520 = vpop.permute.xlu0 %1519
      %1521 = vrot.lane.b32.xlu0 %v862, 4
      %v1522 = vpop.permute.xlu0 %1521
      %1523 = vrot.lane.b32.xlu0 %v863, 4
      %v1524 = vpop.permute.xlu0 %1523
      %1525 = vrot.lane.b32.xlu0 %v864, 4
      %v1526 = vpop.permute.xlu0 %1525
      %1527 = vrot.lane.b32.xlu0 %v865, 4
      %v1528 = vpop.permute.xlu0 %1527
      %1529 = vrot.lane.b32.xlu0 %v866, 4
      %v1530 = vpop.permute.xlu0 %1529
      %1531 = vrot.lane.b32.xlu0 %v867, 4
      %v1532 = vpop.permute.xlu0 %1531
      %1533 = vrot.lane.b32.xlu0 %v868, 4
      %v1534 = vpop.permute.xlu0 %1533
      %1535 = vrot.lane.b32.xlu0 %v869, 4
      %v1536 = vpop.permute.xlu0 %1535
      %1537 = vrot.lane.b32.xlu0 %v870, 4
      %v1538 = vpop.permute.xlu0 %1537
      %1539 = vrot.lane.b32.xlu0 %v871, 4
      %v1540 = vpop.permute.xlu0 %1539
      %1541 = vrot.lane.b32.xlu0 %v872, 4
      %v1542 = vpop.permute.xlu0 %1541
      %1543 = vrot.lane.b32.xlu0 %v873, 4
      %v1544 = vpop.permute.xlu0 %1543
      %1545 = vrot.lane.b32.xlu0 %v874, 4
      %v1546 = vpop.permute.xlu0 %1545
      %1547 = vrot.lane.b32.xlu0 %v875, 4
      %v1548 = vpop.permute.xlu0 %1547
      %1549 = vrot.lane.b32.xlu0 %v876, 4
      %v1550 = vpop.permute.xlu0 %1549
      %1551 = vrot.lane.b32.xlu0 %v877, 4
      %v1552 = vpop.permute.xlu0 %1551
      %1553 = vrot.lane.b32.xlu0 %v878, 4
      %v1554 = vpop.permute.xlu0 %1553
      %1555 = vrot.lane.b32.xlu0 %v879, 4
      %v1556 = vpop.permute.xlu0 %1555
      %1557 = vrot.lane.b32.xlu0 %v880, 4
      %v1558 = vpop.permute.xlu0 %1557
      %1559 = vrot.lane.b32.xlu0 %v881, 4
      %v1560 = vpop.permute.xlu0 %1559
      %1561 = vrot.lane.b32.xlu0 %v882, 4
      %v1562 = vpop.permute.xlu0 %1561
      %1563 = vrot.lane.b32.xlu0 %v883, 4
      %v1564 = vpop.permute.xlu0 %1563
      %1565 = vrot.lane.b32.xlu0 %v884, 4
      %v1566 = vpop.permute.xlu0 %1565
      %1567 = vrot.lane.b32.xlu0 %v885, 4
      %v1568 = vpop.permute.xlu0 %1567
      %1569 = vrot.lane.b32.xlu0 %v886, 4
      %v1570 = vpop.permute.xlu0 %1569
      %1571 = vrot.lane.b32.xlu0 %v887, 4
      %v1572 = vpop.permute.xlu0 %1571
      %1573 = vrot.lane.b32.xlu0 %v888, 4
      %v1574 = vpop.permute.xlu0 %1573
      %vm1623 = vcmask 60448
      %1624 = vst.msk [vmem:[#allocation3] sm:$0xf] %vm1623, %v1480
      %1625 = vst.msk [vmem:[#allocation3 + $0x4] sm:$0xf] %vm1623, %v1482
      %1626 = vst.msk [vmem:[#allocation3 + $0x8] sm:$0xf] %vm1623, %v1484
      %1627 = vst.msk [vmem:[#allocation3 + $0xc] sm:$0xf] %vm1623, %v1486
      %1628 = vst.msk [vmem:[#allocation3 + $0x10] sm:$0xf] %vm1623, %v1488
      %1629 = vst.msk [vmem:[#allocation3 + $0x14] sm:$0xf] %vm1623, %v1490
      %1630 = vst.msk [vmem:[#allocation3 + $0x18] sm:$0xf] %vm1623, %v1492
      %1631 = vst.msk [vmem:[#allocation3 + $0x1c] sm:$0xf] %vm1623, %v1494
      %1632 = vst.msk [vmem:[#allocation3 + $0x20] sm:$0xf] %vm1623, %v1496
      %1633 = vst.msk [vmem:[#allocation3 + $0x24] sm:$0xf] %vm1623, %v1498
      %1634 = vst.msk [vmem:[#allocation3 + $0x28] sm:$0xf] %vm1623, %v1500
      %1635 = vst.msk [vmem:[#allocation3 + $0x2c] sm:$0xf] %vm1623, %v1502
      %1636 = vst.msk [vmem:[#allocation3 + $0x30] sm:$0xf] %vm1623, %v1504
      %1637 = vst.msk [vmem:[#allocation3 + $0x34] sm:$0xf] %vm1623, %v1506
      %1638 = vst.msk [vmem:[#allocation3 + $0x38] sm:$0xf] %vm1623, %v1508
      %1639 = vst.msk [vmem:[#allocation3 + $0x3c] sm:$0xf] %vm1623, %v1510
      %1640 = vst.msk [vmem:[#allocation3 + $0x40] sm:$0xf] %vm1623, %v1512
      %1641 = vst.msk [vmem:[#allocation3 + $0x44] sm:$0xf] %vm1623, %v1514
      %1642 = vst.msk [vmem:[#allocation3 + $0x48] sm:$0xf] %vm1623, %v1516
      %1643 = vst.msk [vmem:[#allocation3 + $0x4c] sm:$0xf] %vm1623, %v1518
      %1644 = vst.msk [vmem:[#allocation3 + $0x50] sm:$0xf] %vm1623, %v1520
      %1645 = vst.msk [vmem:[#allocation3 + $0x54] sm:$0xf] %vm1623, %v1522
      %1646 = vst.msk [vmem:[#allocation3 + $0x58] sm:$0xf] %vm1623, %v1524
      %1647 = vst.msk [vmem:[#allocation3 + $0x5c] sm:$0xf] %vm1623, %v1526
      %1648 = vst.msk [vmem:[#allocation3 + $0x60] sm:$0xf] %vm1623, %v1528
      %1649 = vst.msk [vmem:[#allocation3 + $0x64] sm:$0xf] %vm1623, %v1530
      %1650 = vst.msk [vmem:[#allocation3 + $0x68] sm:$0xf] %vm1623, %v1532
      %1651 = vst.msk [vmem:[#allocation3 + $0x6c] sm:$0xf] %vm1623, %v1534
      %1652 = vst.msk [vmem:[#allocation3 + $0x70] sm:$0xf] %vm1623, %v1536
      %1653 = vst.msk [vmem:[#allocation3 + $0x74] sm:$0xf] %vm1623, %v1538
      %1654 = vst.msk [vmem:[#allocation3 + $0x78] sm:$0xf] %vm1623, %v1540
      %1655 = vst.msk [vmem:[#allocation3 + $0x7c] sm:$0xf] %vm1623, %v1542
      %1656 = vst.msk [vmem:[#allocation3 + $0x80] sm:$0xf] %vm1623, %v1544
      %1657 = vst.msk [vmem:[#allocation3 + $0x84] sm:$0xf] %vm1623, %v1546
      %1658 = vst.msk [vmem:[#allocation3 + $0x88] sm:$0xf] %vm1623, %v1548
      %1659 = vst.msk [vmem:[#allocation3 + $0x8c] sm:$0xf] %vm1623, %v1550
      %1660 = vst.msk [vmem:[#allocation3 + $0x90] sm:$0xf] %vm1623, %v1552
      %1661 = vst.msk [vmem:[#allocation3 + $0x94] sm:$0xf] %vm1623, %v1554
      %1662 = vst.msk [vmem:[#allocation3 + $0x98] sm:$0xf] %vm1623, %v1556
      %1663 = vst.msk [vmem:[#allocation3 + $0x9c] sm:$0xf] %vm1623, %v1558
      %1664 = vst.msk [vmem:[#allocation3 + $0xa0] sm:$0xf] %vm1623, %v1560
      %1665 = vst.msk [vmem:[#allocation3 + $0xa4] sm:$0xf] %vm1623, %v1562
      %1666 = vst.msk [vmem:[#allocation3 + $0xa8] sm:$0xf] %vm1623, %v1564
      %1667 = vst.msk [vmem:[#allocation3 + $0xac] sm:$0xf] %vm1623, %v1566
      %1668 = vst.msk [vmem:[#allocation3 + $0xb0] sm:$0xf] %vm1623, %v1568
      %1669 = vst.msk [vmem:[#allocation3 + $0xb4] sm:$0xf] %vm1623, %v1570
      %1670 = vst.msk [vmem:[#allocation3 + $0xb8] sm:$0xf] %vm1623, %v1572
      %1671 = vst.msk [vmem:[#allocation3 + $0xbc] sm:$0xf] %vm1623, %v1574
      %vm1672 = vsmask.f32 3328
      %vm1673 = vsmask.f32 7440
      %vm1674 = vmor %vm1672, %vm1673
      %v1675 = vrot.slane %v905, 4
      %v1676 = vrot.slane %v908, 5
      %v1677 = vor.u32 %v1675, %v1676
      %v1678 = vrot.slane %v1677, 4
      %v1679 = vrot.slane %v917, 5
      %v1680 = vsel %vm1674, %v1678, %v1679
      %v1681 = vrot.slane %v914, 4
      %v1682 = vor.u32 %v1681, %v1679
      %v1683 = vrot.slane %v1682, 4
      %v1684 = vrot.slane %v926, 5
      %v1685 = vsel %vm1674, %v1683, %v1684
      %v1686 = vrot.slane %v923, 4
      %v1687 = vor.u32 %v1686, %v1684
      %v1688 = vrot.slane %v1687, 4
      %v1689 = vrot.slane %v935, 5
      %v1690 = vsel %vm1674, %v1688, %v1689
      %v1691 = vrot.slane %v932, 4
      %v1692 = vor.u32 %v1691, %v1689
      %v1693 = vrot.slane %v1692, 4
      %v1694 = vrot.slane %v944, 5
      %v1695 = vsel %vm1674, %v1693, %v1694
      %v1696 = vrot.slane %v941, 4
      %v1697 = vor.u32 %v1696, %v1694
      %v1698 = vrot.slane %v1697, 4
      %v1699 = vrot.slane %v953, 5
      %v1700 = vsel %vm1674, %v1698, %v1699
      %v1701 = vrot.slane %v950, 4
      %v1702 = vor.u32 %v1701, %v1699
      %v1703 = vrot.slane %v1702, 4
      %v1704 = vrot.slane %v962, 5
      %v1705 = vsel %vm1674, %v1703, %v1704
      %v1706 = vrot.slane %v959, 4
      %v1707 = vor.u32 %v1706, %v1704
      %v1708 = vrot.slane %v1707, 4
      %v1709 = vrot.slane %v971, 5
      %v1710 = vsel %vm1674, %v1708, %v1709
      %v1711 = vrot.slane %v968, 4
      %v1712 = vor.u32 %v1711, %v1709
      %v1713 = vrot.slane %v1712, 4
      %v1714 = vrot.slane %v980, 5
      %v1715 = vsel %vm1674, %v1713, %v1714
      %v1716 = vrot.slane %v977, 4
      %v1717 = vor.u32 %v1716, %v1714
      %v1718 = vrot.slane %v1717, 4
      %v1719 = vrot.slane %v989, 5
      %v1720 = vsel %vm1674, %v1718, %v1719
      %v1721 = vrot.slane %v986, 4
      %v1722 = vor.u32 %v1721, %v1719
      %v1723 = vrot.slane %v1722, 4
      %v1724 = vrot.slane %v998, 5
      %v1725 = vsel %vm1674, %v1723, %v1724
      %v1726 = vrot.slane %v995, 4
      %v1727 = vor.u32 %v1726, %v1724
      %v1728 = vrot.slane %v1727, 4
      %v1729 = vrot.slane %v1007, 5
      %v1730 = vsel %vm1674, %v1728, %v1729
      %v1731 = vrot.slane %v1004, 4
      %v1732 = vor.u32 %v1731, %v1729
      %v1733 = vrot.slane %v1732, 4
      %v1734 = vrot.slane %v1016, 5
      %v1735 = vsel %vm1674, %v1733, %v1734
      %v1736 = vrot.slane %v1013, 4
      %v1737 = vor.u32 %v1736, %v1734
      %v1738 = vrot.slane %v1737, 4
      %v1739 = vrot.slane %v1025, 5
      %v1740 = vsel %vm1674, %v1738, %v1739
      %v1741 = vrot.slane %v1022, 4
      %v1742 = vor.u32 %v1741, %v1739
      %v1743 = vrot.slane %v1742, 4
      %v1744 = vrot.slane %v1034, 5
      %v1745 = vsel %vm1674, %v1743, %v1744
      %v1746 = vrot.slane %v1031, 4
      %v1747 = vor.u32 %v1746, %v1744
      %v1748 = vrot.slane %v1747, 4
      %v1749 = vrot.slane %v1043, 5
      %v1750 = vsel %vm1674, %v1748, %v1749
      %v1751 = vrot.slane %v1040, 4
      %v1752 = vor.u32 %v1751, %v1749
      %v1753 = vrot.slane %v1752, 4
      %v1754 = vrot.slane %v1052, 5
      %v1755 = vsel %vm1674, %v1753, %v1754
      %v1756 = vrot.slane %v1049, 4
      %v1757 = vor.u32 %v1756, %v1754
      %v1758 = vrot.slane %v1757, 4
      %v1759 = vrot.slane %v1061, 5
      %v1760 = vsel %vm1674, %v1758, %v1759
      %v1761 = vrot.slane %v1058, 4
      %v1762 = vor.u32 %v1761, %v1759
      %v1763 = vrot.slane %v1762, 4
      %v1764 = vrot.slane %v1070, 5
      %v1765 = vsel %vm1674, %v1763, %v1764
      %v1766 = vrot.slane %v1067, 4
      %v1767 = vor.u32 %v1766, %v1764
      %v1768 = vrot.slane %v1767, 4
      %v1769 = vrot.slane %v1079, 5
      %v1770 = vsel %vm1674, %v1768, %v1769
      %v1771 = vrot.slane %v1076, 4
      %v1772 = vor.u32 %v1771, %v1769
      %v1773 = vrot.slane %v1772, 4
      %v1774 = vrot.slane %v1088, 5
      %v1775 = vsel %vm1674, %v1773, %v1774
      %v1776 = vrot.slane %v1085, 4
      %v1777 = vor.u32 %v1776, %v1774
      %v1778 = vrot.slane %v1777, 4
      %v1779 = vrot.slane %v1097, 5
      %v1780 = vsel %vm1674, %v1778, %v1779
      %v1781 = vrot.slane %v1094, 4
      %v1782 = vor.u32 %v1781, %v1779
      %v1783 = vrot.slane %v1782, 4
      %v1784 = vrot.slane %v1106, 5
      %v1785 = vsel %vm1674, %v1783, %v1784
      %v1786 = vrot.slane %v1103, 4
      %v1787 = vor.u32 %v1786, %v1784
      %v1788 = vrot.slane %v1787, 4
      %v1789 = vrot.slane %v1115, 5
      %v1790 = vsel %vm1674, %v1788, %v1789
      %v1791 = vrot.slane %v1112, 4
      %v1792 = vor.u32 %v1791, %v1789
      %v1793 = vrot.slane %v1792, 4
      %v1794 = vrot.slane %v1124, 5
      %v1795 = vsel %vm1674, %v1793, %v1794
      %v1796 = vrot.slane %v1121, 4
      %v1797 = vor.u32 %v1796, %v1794
      %v1798 = vrot.slane %v1797, 4
      %v1799 = vrot.slane %v1133, 5
      %v1800 = vsel %vm1674, %v1798, %v1799
      %v1801 = vrot.slane %v1130, 4
      %v1802 = vor.u32 %v1801, %v1799
      %v1803 = vrot.slane %v1802, 4
      %v1804 = vrot.slane %v1142, 5
      %v1805 = vsel %vm1674, %v1803, %v1804
      %v1806 = vrot.slane %v1139, 4
      %v1807 = vor.u32 %v1806, %v1804
      %v1808 = vrot.slane %v1807, 4
      %v1809 = vrot.slane %v1151, 5
      %v1810 = vsel %vm1674, %v1808, %v1809
      %v1811 = vrot.slane %v1148, 4
      %v1812 = vor.u32 %v1811, %v1809
      %v1813 = vrot.slane %v1812, 4
      %v1814 = vrot.slane %v1160, 5
      %v1815 = vsel %vm1674, %v1813, %v1814
      %v1816 = vrot.slane %v1157, 4
      %v1817 = vor.u32 %v1816, %v1814
      %v1818 = vrot.slane %v1817, 4
      %v1819 = vrot.slane %v1169, 5
      %v1820 = vsel %vm1674, %v1818, %v1819
      %v1821 = vrot.slane %v1166, 4
      %v1822 = vor.u32 %v1821, %v1819
      %v1823 = vrot.slane %v1822, 4
      %v1824 = vrot.slane %v1178, 5
      %v1825 = vsel %vm1674, %v1823, %v1824
      %v1826 = vrot.slane %v1175, 4
      %v1827 = vor.u32 %v1826, %v1824
      %v1828 = vrot.slane %v1827, 4
      %v1829 = vrot.slane %v1187, 5
      %v1830 = vsel %vm1674, %v1828, %v1829
      %v1831 = vrot.slane %v1184, 4
      %v1832 = vor.u32 %v1831, %v1829
      %v1833 = vrot.slane %v1832, 4
      %v1834 = vrot.slane %v1196, 5
      %v1835 = vsel %vm1674, %v1833, %v1834
      %v1836 = vrot.slane %v1193, 4
      %v1837 = vor.u32 %v1836, %v1834
      %v1838 = vrot.slane %v1837, 4
      %v1839 = vrot.slane %v1205, 5
      %v1840 = vsel %vm1674, %v1838, %v1839
      %v1841 = vrot.slane %v1202, 4
      %v1842 = vor.u32 %v1841, %v1839
      %v1843 = vrot.slane %v1842, 4
      %v1844 = vrot.slane %v1214, 5
      %v1845 = vsel %vm1674, %v1843, %v1844
      %v1846 = vrot.slane %v1211, 4
      %v1847 = vor.u32 %v1846, %v1844
      %v1848 = vrot.slane %v1847, 4
      %v1849 = vrot.slane %v1223, 5
      %v1850 = vsel %vm1674, %v1848, %v1849
      %v1851 = vrot.slane %v1220, 4
      %v1852 = vor.u32 %v1851, %v1849
      %v1853 = vrot.slane %v1852, 4
      %v1854 = vrot.slane %v1232, 5
      %v1855 = vsel %vm1674, %v1853, %v1854
      %v1856 = vrot.slane %v1229, 4
      %v1857 = vor.u32 %v1856, %v1854
      %v1858 = vrot.slane %v1857, 4
      %v1859 = vrot.slane %v1241, 5
      %v1860 = vsel %vm1674, %v1858, %v1859
      %v1861 = vrot.slane %v1238, 4
      %v1862 = vor.u32 %v1861, %v1859
      %v1863 = vrot.slane %v1862, 4
      %v1864 = vrot.slane %v1250, 5
      %v1865 = vsel %vm1674, %v1863, %v1864
      %v1866 = vrot.slane %v1247, 4
      %v1867 = vor.u32 %v1866, %v1864
      %v1868 = vrot.slane %v1867, 4
      %v1869 = vrot.slane %v1259, 5
      %v1870 = vsel %vm1674, %v1868, %v1869
      %v1871 = vrot.slane %v1256, 4
      %v1872 = vor.u32 %v1871, %v1869
      %v1873 = vrot.slane %v1872, 4
      %v1874 = vrot.slane %v1268, 5
      %v1875 = vsel %vm1674, %v1873, %v1874
      %v1876 = vrot.slane %v1265, 4
      %v1877 = vor.u32 %v1876, %v1874
      %v1878 = vrot.slane %v1877, 4
      %v1879 = vrot.slane %v1277, 5
      %v1880 = vsel %vm1674, %v1878, %v1879
      %v1881 = vrot.slane %v1274, 4
      %v1882 = vor.u32 %v1881, %v1879
      %v1883 = vrot.slane %v1882, 4
      %v1884 = vrot.slane %v1286, 5
      %v1885 = vsel %vm1674, %v1883, %v1884
      %v1886 = vrot.slane %v1283, 4
      %v1887 = vor.u32 %v1886, %v1884
      %v1888 = vrot.slane %v1887, 4
      %v1889 = vrot.slane %v1295, 5
      %v1890 = vsel %vm1674, %v1888, %v1889
      %v1891 = vrot.slane %v1292, 4
      %v1892 = vor.u32 %v1891, %v1889
      %v1893 = vrot.slane %v1892, 4
      %v1894 = vrot.slane %v1304, 5
      %v1895 = vsel %vm1674, %v1893, %v1894
      %v1896 = vrot.slane %v1301, 4
      %v1897 = vor.u32 %v1896, %v1894
      %v1898 = vrot.slane %v1897, 4
      %v1899 = vrot.slane %v1313, 5
      %v1900 = vsel %vm1674, %v1898, %v1899
      %v1901 = vrot.slane %v1310, 4
      %v1902 = vor.u32 %v1901, %v1899
      %v1903 = vrot.slane %v1902, 4
      %v1904 = vrot.slane %v1322, 5
      %v1905 = vsel %vm1674, %v1903, %v1904
      %v1906 = vrot.slane %v1319, 4
      %v1907 = vor.u32 %v1906, %v1904
      %v1908 = vrot.slane %v1907, 4
      %v1909 = vrot.slane %v1331, 5
      %v1910 = vsel %vm1674, %v1908, %v1909
      %v1911 = vrot.slane %v1328, 4
      %v1912 = vor.u32 %v1911, %v1909
      %v1913 = vrot.slane %v1912, 4
      %v1915 = vshll.u32 %v889, 16
      %v1917 = vrot.slane %v1915, 5
      %v1918 = vsel %vm1674, %v1913, %v1917
      %1919 = vrot.lane.b32.xlu0 %v1680, 8
      %v1920 = vpop.permute.xlu0 %1919
      %1921 = vrot.lane.b32.xlu0 %v1685, 8
      %v1922 = vpop.permute.xlu0 %1921
      %1923 = vrot.lane.b32.xlu0 %v1690, 8
      %v1924 = vpop.permute.xlu0 %1923
      %1925 = vrot.lane.b32.xlu0 %v1695, 8
      %v1926 = vpop.permute.xlu0 %1925
      %1927 = vrot.lane.b32.xlu0 %v1700, 8
      %v1928 = vpop.permute.xlu0 %1927
      %1929 = vrot.lane.b32.xlu0 %v1705, 8
      %v1930 = vpop.permute.xlu0 %1929
      %1931 = vrot.lane.b32.xlu0 %v1710, 8
      %v1932 = vpop.permute.xlu0 %1931
      %1933 = vrot.lane.b32.xlu0 %v1715, 8
      %v1934 = vpop.permute.xlu0 %1933
      %1935 = vrot.lane.b32.xlu0 %v1720, 8
      %v1936 = vpop.permute.xlu0 %1935
      %1937 = vrot.lane.b32.xlu0 %v1725, 8
      %v1938 = vpop.permute.xlu0 %1937
      %1939 = vrot.lane.b32.xlu0 %v1730, 8
      %v1940 = vpop.permute.xlu0 %1939
      %1941 = vrot.lane.b32.xlu0 %v1735, 8
      %v1942 = vpop.permute.xlu0 %1941
      %1943 = vrot.lane.b32.xlu0 %v1740, 8
      %v1944 = vpop.permute.xlu0 %1943
      %1945 = vrot.lane.b32.xlu0 %v1745, 8
      %v1946 = vpop.permute.xlu0 %1945
      %1947 = vrot.lane.b32.xlu0 %v1750, 8
      %v1948 = vpop.permute.xlu0 %1947
      %1949 = vrot.lane.b32.xlu0 %v1755, 8
      %v1950 = vpop.permute.xlu0 %1949
      %1951 = vrot.lane.b32.xlu0 %v1760, 8
      %v1952 = vpop.permute.xlu0 %1951
      %1953 = vrot.lane.b32.xlu0 %v1765, 8
      %v1954 = vpop.permute.xlu0 %1953
      %1955 = vrot.lane.b32.xlu0 %v1770, 8
      %v1956 = vpop.permute.xlu0 %1955
      %1957 = vrot.lane.b32.xlu0 %v1775, 8
      %v1958 = vpop.permute.xlu0 %1957
      %1959 = vrot.lane.b32.xlu0 %v1780, 8
      %v1960 = vpop.permute.xlu0 %1959
      %1961 = vrot.lane.b32.xlu0 %v1785, 8
      %v1962 = vpop.permute.xlu0 %1961
      %1963 = vrot.lane.b32.xlu0 %v1790, 8
      %v1964 = vpop.permute.xlu0 %1963
      %1965 = vrot.lane.b32.xlu0 %v1795, 8
      %v1966 = vpop.permute.xlu0 %1965
      %1967 = vrot.lane.b32.xlu0 %v1800, 8
      %v1968 = vpop.permute.xlu0 %1967
      %1969 = vrot.lane.b32.xlu0 %v1805, 8
      %v1970 = vpop.permute.xlu0 %1969
      %1971 = vrot.lane.b32.xlu0 %v1810, 8
      %v1972 = vpop.permute.xlu0 %1971
      %1973 = vrot.lane.b32.xlu0 %v1815, 8
      %v1974 = vpop.permute.xlu0 %1973
      %1975 = vrot.lane.b32.xlu0 %v1820, 8
      %v1976 = vpop.permute.xlu0 %1975
      %1977 = vrot.lane.b32.xlu0 %v1825, 8
      %v1978 = vpop.permute.xlu0 %1977
      %1979 = vrot.lane.b32.xlu0 %v1830, 8
      %v1980 = vpop.permute.xlu0 %1979
      %1981 = vrot.lane.b32.xlu0 %v1835, 8
      %v1982 = vpop.permute.xlu0 %1981
      %1983 = vrot.lane.b32.xlu0 %v1840, 8
      %v1984 = vpop.permute.xlu0 %1983
      %1985 = vrot.lane.b32.xlu0 %v1845, 8
      %v1986 = vpop.permute.xlu0 %1985
      %1987 = vrot.lane.b32.xlu0 %v1850, 8
      %v1988 = vpop.permute.xlu0 %1987
      %1989 = vrot.lane.b32.xlu0 %v1855, 8
      %v1990 = vpop.permute.xlu0 %1989
      %1991 = vrot.lane.b32.xlu0 %v1860, 8
      %v1992 = vpop.permute.xlu0 %1991
      %1993 = vrot.lane.b32.xlu0 %v1865, 8
      %v1994 = vpop.permute.xlu0 %1993
      %1995 = vrot.lane.b32.xlu0 %v1870, 8
      %v1996 = vpop.permute.xlu0 %1995
      %1997 = vrot.lane.b32.xlu0 %v1875, 8
      %v1998 = vpop.permute.xlu0 %1997
      %1999 = vrot.lane.b32.xlu0 %v1880, 8
      %v2000 = vpop.permute.xlu0 %1999
      %2001 = vrot.lane.b32.xlu0 %v1885, 8
      %v2002 = vpop.permute.xlu0 %2001
      %2003 = vrot.lane.b32.xlu0 %v1890, 8
      %v2004 = vpop.permute.xlu0 %2003
      %2005 = vrot.lane.b32.xlu0 %v1895, 8
      %v2006 = vpop.permute.xlu0 %2005
      %2007 = vrot.lane.b32.xlu0 %v1900, 8
      %v2008 = vpop.permute.xlu0 %2007
      %2009 = vrot.lane.b32.xlu0 %v1905, 8
      %v2010 = vpop.permute.xlu0 %2009
      %2011 = vrot.lane.b32.xlu0 %v1910, 8
      %v2012 = vpop.permute.xlu0 %2011
      %2013 = vrot.lane.b32.xlu0 %v1918, 8
      %v2014 = vpop.permute.xlu0 %2013
      %vm2063 = vcmask 93248
      %2064 = vst.msk [vmem:[#allocation3] sm:$0xf] %vm2063, %v1920
      %2065 = vst.msk [vmem:[#allocation3 + $0x4] sm:$0xf] %vm2063, %v1922
      %2066 = vst.msk [vmem:[#allocation3 + $0x8] sm:$0xf] %vm2063, %v1924
      %2067 = vst.msk [vmem:[#allocation3 + $0xc] sm:$0xf] %vm2063, %v1926
      %2068 = vst.msk [vmem:[#allocation3 + $0x10] sm:$0xf] %vm2063, %v1928
      %2069 = vst.msk [vmem:[#allocation3 + $0x14] sm:$0xf] %vm2063, %v1930
      %2070 = vst.msk [vmem:[#allocation3 + $0x18] sm:$0xf] %vm2063, %v1932
      %2071 = vst.msk [vmem:[#allocation3 + $0x1c] sm:$0xf] %vm2063, %v1934
      %2072 = vst.msk [vmem:[#allocation3 + $0x20] sm:$0xf] %vm2063, %v1936
      %2073 = vst.msk [vmem:[#allocation3 + $0x24] sm:$0xf] %vm2063, %v1938
      %2074 = vst.msk [vmem:[#allocation3 + $0x28] sm:$0xf] %vm2063, %v1940
      %2075 = vst.msk [vmem:[#allocation3 + $0x2c] sm:$0xf] %vm2063, %v1942
      %2076 = vst.msk [vmem:[#allocation3 + $0x30] sm:$0xf] %vm2063, %v1944
      %2077 = vst.msk [vmem:[#allocation3 + $0x34] sm:$0xf] %vm2063, %v1946
      %2078 = vst.msk [vmem:[#allocation3 + $0x38] sm:$0xf] %vm2063, %v1948
      %2079 = vst.msk [vmem:[#allocation3 + $0x3c] sm:$0xf] %vm2063, %v1950
      %2080 = vst.msk [vmem:[#allocation3 + $0x40] sm:$0xf] %vm2063, %v1952
      %2081 = vst.msk [vmem:[#allocation3 + $0x44] sm:$0xf] %vm2063, %v1954
      %2082 = vst.msk [vmem:[#allocation3 + $0x48] sm:$0xf] %vm2063, %v1956
      %2083 = vst.msk [vmem:[#allocation3 + $0x4c] sm:$0xf] %vm2063, %v1958
      %2084 = vst.msk [vmem:[#allocation3 + $0x50] sm:$0xf] %vm2063, %v1960
      %2085 = vst.msk [vmem:[#allocation3 + $0x54] sm:$0xf] %vm2063, %v1962
      %2086 = vst.msk [vmem:[#allocation3 + $0x58] sm:$0xf] %vm2063, %v1964
      %2087 = vst.msk [vmem:[#allocation3 + $0x5c] sm:$0xf] %vm2063, %v1966
      %2088 = vst.msk [vmem:[#allocation3 + $0x60] sm:$0xf] %vm2063, %v1968
      %2089 = vst.msk [vmem:[#allocation3 + $0x64] sm:$0xf] %vm2063, %v1970
      %2090 = vst.msk [vmem:[#allocation3 + $0x68] sm:$0xf] %vm2063, %v1972
      %2091 = vst.msk [vmem:[#allocation3 + $0x6c] sm:$0xf] %vm2063, %v1974
      %2092 = vst.msk [vmem:[#allocation3 + $0x70] sm:$0xf] %vm2063, %v1976
      %2093 = vst.msk [vmem:[#allocation3 + $0x74] sm:$0xf] %vm2063, %v1978
      %2094 = vst.msk [vmem:[#allocation3 + $0x78] sm:$0xf] %vm2063, %v1980
      %2095 = vst.msk [vmem:[#allocation3 + $0x7c] sm:$0xf] %vm2063, %v1982
      %2096 = vst.msk [vmem:[#allocation3 + $0x80] sm:$0xf] %vm2063, %v1984
      %2097 = vst.msk [vmem:[#allocation3 + $0x84] sm:$0xf] %vm2063, %v1986
      %2098 = vst.msk [vmem:[#allocation3 + $0x88] sm:$0xf] %vm2063, %v1988
      %2099 = vst.msk [vmem:[#allocation3 + $0x8c] sm:$0xf] %vm2063, %v1990
      %2100 = vst.msk [vmem:[#allocation3 + $0x90] sm:$0xf] %vm2063, %v1992
      %2101 = vst.msk [vmem:[#allocation3 + $0x94] sm:$0xf] %vm2063, %v1994
      %2102 = vst.msk [vmem:[#allocation3 + $0x98] sm:$0xf] %vm2063, %v1996
      %2103 = vst.msk [vmem:[#allocation3 + $0x9c] sm:$0xf] %vm2063, %v1998
      %2104 = vst.msk [vmem:[#allocation3 + $0xa0] sm:$0xf] %vm2063, %v2000
      %2105 = vst.msk [vmem:[#allocation3 + $0xa4] sm:$0xf] %vm2063, %v2002
      %2106 = vst.msk [vmem:[#allocation3 + $0xa8] sm:$0xf] %vm2063, %v2004
      %2107 = vst.msk [vmem:[#allocation3 + $0xac] sm:$0xf] %vm2063, %v2006
      %2108 = vst.msk [vmem:[#allocation3 + $0xb0] sm:$0xf] %vm2063, %v2008
      %2109 = vst.msk [vmem:[#allocation3 + $0xb4] sm:$0xf] %vm2063, %v2010
      %2110 = vst.msk [vmem:[#allocation3 + $0xb8] sm:$0xf] %vm2063, %v2012
      %2111 = vst.msk [vmem:[#allocation3 + $0xbc] sm:$0xf] %vm2063, %v2014
      %v2112 = vrot.slane %v1330, 4
      %v2113 = vshrl.u32 %v889, 16
      %v2115 = vrot.slane %v2113, 7
      %v2116 = vor.u32 %v2115, %v1915
      %v2117 = vsel %vm898, %v2112, %v2116
      %v2118 = vrot.slane %v2115, 4
      %v2120 = vshrl.u32 %v890, 16
      %v2122 = vrot.slane %v2120, 7
      %v2123 = vshll.u32 %v890, 16
      %v2125 = vor.u32 %v2122, %v2123
      %v2126 = vsel %vm898, %v2118, %v2125
      %v2127 = vrot.slane %v2122, 4
      %v2129 = vshrl.u32 %v891, 16
      %v2131 = vrot.slane %v2129, 7
      %v2132 = vshll.u32 %v891, 16
      %v2134 = vor.u32 %v2131, %v2132
      %v2135 = vsel %vm898, %v2127, %v2134
      %2136 = vrot.lane.b32.xlu0 %v938, 12
      %v2137 = vpop.permute.xlu0 %2136
      %2138 = vrot.lane.b32.xlu0 %v947, 12
      %v2139 = vpop.permute.xlu0 %2138
      %2140 = vrot.lane.b32.xlu0 %v956, 12
      %v2141 = vpop.permute.xlu0 %2140
      %2142 = vrot.lane.b32.xlu0 %v965, 12
      %v2143 = vpop.permute.xlu0 %2142
      %2144 = vrot.lane.b32.xlu0 %v974, 12
      %v2145 = vpop.permute.xlu0 %2144
      %2146 = vrot.lane.b32.xlu0 %v983, 12
      %v2147 = vpop.permute.xlu0 %2146
      %2148 = vrot.lane.b32.xlu0 %v992, 12
      %v2149 = vpop.permute.xlu0 %2148
      %2150 = vrot.lane.b32.xlu0 %v1001, 12
      %v2151 = vpop.permute.xlu0 %2150
      %2152 = vrot.lane.b32.xlu0 %v1010, 12
      %v2153 = vpop.permute.xlu0 %2152
      %2154 = vrot.lane.b32.xlu0 %v1019, 12
      %v2155 = vpop.permute.xlu0 %2154
      %2156 = vrot.lane.b32.xlu0 %v1028, 12
      %v2157 = vpop.permute.xlu0 %2156
      %2158 = vrot.lane.b32.xlu0 %v1037, 12
      %v2159 = vpop.permute.xlu0 %2158
      %2160 = vrot.lane.b32.xlu0 %v1046, 12
      %v2161 = vpop.permute.xlu0 %2160
      %2162 = vrot.lane.b32.xlu0 %v1055, 12
      %v2163 = vpop.permute.xlu0 %2162
      %2164 = vrot.lane.b32.xlu0 %v1064, 12
      %v2165 = vpop.permute.xlu0 %2164
      %2166 = vrot.lane.b32.xlu0 %v1073, 12
      %v2167 = vpop.permute.xlu0 %2166
      %2168 = vrot.lane.b32.xlu0 %v1082, 12
      %v2169 = vpop.permute.xlu0 %2168
      %2170 = vrot.lane.b32.xlu0 %v1091, 12
      %v2171 = vpop.permute.xlu0 %2170
      %2172 = vrot.lane.b32.xlu0 %v1100, 12
      %v2173 = vpop.permute.xlu0 %2172
      %2174 = vrot.lane.b32.xlu0 %v1109, 12
      %v2175 = vpop.permute.xlu0 %2174
      %2176 = vrot.lane.b32.xlu0 %v1118, 12
      %v2177 = vpop.permute.xlu0 %2176
      %2178 = vrot.lane.b32.xlu0 %v1127, 12
      %v2179 = vpop.permute.xlu0 %2178
      %2180 = vrot.lane.b32.xlu0 %v1136, 12
      %v2181 = vpop.permute.xlu0 %2180
      %2182 = vrot.lane.b32.xlu0 %v1145, 12
      %v2183 = vpop.permute.xlu0 %2182
      %2184 = vrot.lane.b32.xlu0 %v1154, 12
      %v2185 = vpop.permute.xlu0 %2184
      %2186 = vrot.lane.b32.xlu0 %v1163, 12
      %v2187 = vpop.permute.xlu0 %2186
      %2188 = vrot.lane.b32.xlu0 %v1172, 12
      %v2189 = vpop.permute.xlu0 %2188
      %2190 = vrot.lane.b32.xlu0 %v1181, 12
      %v2191 = vpop.permute.xlu0 %2190
      %2192 = vrot.lane.b32.xlu0 %v1190, 12
      %v2193 = vpop.permute.xlu0 %2192
      %2194 = vrot.lane.b32.xlu0 %v1199, 12
      %v2195 = vpop.permute.xlu0 %2194
      %2196 = vrot.lane.b32.xlu0 %v1208, 12
      %v2197 = vpop.permute.xlu0 %2196
      %2198 = vrot.lane.b32.xlu0 %v1217, 12
      %v2199 = vpop.permute.xlu0 %2198
      %2200 = vrot.lane.b32.xlu0 %v1226, 12
      %v2201 = vpop.permute.xlu0 %2200
      %2202 = vrot.lane.b32.xlu0 %v1235, 12
      %v2203 = vpop.permute.xlu0 %2202
      %2204 = vrot.lane.b32.xlu0 %v1244, 12
      %v2205 = vpop.permute.xlu0 %2204
      %2206 = vrot.lane.b32.xlu0 %v1253, 12
      %v2207 = vpop.permute.xlu0 %2206
      %2208 = vrot.lane.b32.xlu0 %v1262, 12
      %v2209 = vpop.permute.xlu0 %2208
      %2210 = vrot.lane.b32.xlu0 %v1271, 12
      %v2211 = vpop.permute.xlu0 %2210
      %2212 = vrot.lane.b32.xlu0 %v1280, 12
      %v2213 = vpop.permute.xlu0 %2212
      %2214 = vrot.lane.b32.xlu0 %v1289, 12
      %v2215 = vpop.permute.xlu0 %2214
      %2216 = vrot.lane.b32.xlu0 %v1298, 12
      %v2217 = vpop.permute.xlu0 %2216
      %2218 = vrot.lane.b32.xlu0 %v1307, 12
      %v2219 = vpop.permute.xlu0 %2218
      %2220 = vrot.lane.b32.xlu0 %v1316, 12
      %v2221 = vpop.permute.xlu0 %2220
      %2222 = vrot.lane.b32.xlu0 %v1325, 12
      %v2223 = vpop.permute.xlu0 %2222
      %2224 = vrot.lane.b32.xlu0 %v1334, 12
      %v2225 = vpop.permute.xlu0 %2224
      %2226 = vrot.lane.b32.xlu0 %v2117, 12
      %v2227 = vpop.permute.xlu0 %2226
      %2228 = vrot.lane.b32.xlu0 %v2126, 12
      %v2229 = vpop.permute.xlu0 %2228
      %2230 = vrot.lane.b32.xlu0 %v2135, 12
      %v2231 = vpop.permute.xlu0 %2230
      %vm2280 = vcmask 126048
      %2281 = vst.msk [vmem:[#allocation3] sm:$0xf] %vm2280, %v2137
      %2282 = vst.msk [vmem:[#allocation3 + $0x4] sm:$0xf] %vm2280, %v2139
      %2283 = vst.msk [vmem:[#allocation3 + $0x8] sm:$0xf] %vm2280, %v2141
      %2284 = vst.msk [vmem:[#allocation3 + $0xc] sm:$0xf] %vm2280, %v2143
      %2285 = vst.msk [vmem:[#allocation3 + $0x10] sm:$0xf] %vm2280, %v2145
      %2286 = vst.msk [vmem:[#allocation3 + $0x14] sm:$0xf] %vm2280, %v2147
      %2287 = vst.msk [vmem:[#allocation3 + $0x18] sm:$0xf] %vm2280, %v2149
      %2288 = vst.msk [vmem:[#allocation3 + $0x1c] sm:$0xf] %vm2280, %v2151
      %2289 = vst.msk [vmem:[#allocation3 + $0x20] sm:$0xf] %vm2280, %v2153
      %2290 = vst.msk [vmem:[#allocation3 + $0x24] sm:$0xf] %vm2280, %v2155
      %2291 = vst.msk [vmem:[#allocation3 + $0x28] sm:$0xf] %vm2280, %v2157
      %2292 = vst.msk [vmem:[#allocation3 + $0x2c] sm:$0xf] %vm2280, %v2159
      %2293 = vst.msk [vmem:[#allocation3 + $0x30] sm:$0xf] %vm2280, %v2161
      %2294 = vst.msk [vmem:[#allocation3 + $0x34] sm:$0xf] %vm2280, %v2163
      %2295 = vst.msk [vmem:[#allocation3 + $0x38] sm:$0xf] %vm2280, %v2165
      %2296 = vst.msk [vmem:[#allocation3 + $0x3c] sm:$0xf] %vm2280, %v2167
      %2297 = vst.msk [vmem:[#allocation3 + $0x40] sm:$0xf] %vm2280, %v2169
      %2298 = vst.msk [vmem:[#allocation3 + $0x44] sm:$0xf] %vm2280, %v2171
      %2299 = vst.msk [vmem:[#allocation3 + $0x48] sm:$0xf] %vm2280, %v2173
      %2300 = vst.msk [vmem:[#allocation3 + $0x4c] sm:$0xf] %vm2280, %v2175
      %2301 = vst.msk [vmem:[#allocation3 + $0x50] sm:$0xf] %vm2280, %v2177
      %2302 = vst.msk [vmem:[#allocation3 + $0x54] sm:$0xf] %vm2280, %v2179
      %2303 = vst.msk [vmem:[#allocation3 + $0x58] sm:$0xf] %vm2280, %v2181
      %2304 = vst.msk [vmem:[#allocation3 + $0x5c] sm:$0xf] %vm2280, %v2183
      %2305 = vst.msk [vmem:[#allocation3 + $0x60] sm:$0xf] %vm2280, %v2185
      %2306 = vst.msk [vmem:[#allocation3 + $0x64] sm:$0xf] %vm2280, %v2187
      %2307 = vst.msk [vmem:[#allocation3 + $0x68] sm:$0xf] %vm2280, %v2189
      %2308 = vst.msk [vmem:[#allocation3 + $0x6c] sm:$0xf] %vm2280, %v2191
      %2309 = vst.msk [vmem:[#allocation3 + $0x70] sm:$0xf] %vm2280, %v2193
      %2310 = vst.msk [vmem:[#allocation3 + $0x74] sm:$0xf] %vm2280, %v2195
      %2311 = vst.msk [vmem:[#allocation3 + $0x78] sm:$0xf] %vm2280, %v2197
      %2312 = vst.msk [vmem:[#allocation3 + $0x7c] sm:$0xf] %vm2280, %v2199
      %2313 = vst.msk [vmem:[#allocation3 + $0x80] sm:$0xf] %vm2280, %v2201
      %2314 = vst.msk [vmem:[#allocation3 + $0x84] sm:$0xf] %vm2280, %v2203
      %2315 = vst.msk [vmem:[#allocation3 + $0x88] sm:$0xf] %vm2280, %v2205
      %2316 = vst.msk [vmem:[#allocation3 + $0x8c] sm:$0xf] %vm2280, %v2207
      %2317 = vst.msk [vmem:[#allocation3 + $0x90] sm:$0xf] %vm2280, %v2209
      %2318 = vst.msk [vmem:[#allocation3 + $0x94] sm:$0xf] %vm2280, %v2211
      %2319 = vst.msk [vmem:[#allocation3 + $0x98] sm:$0xf] %vm2280, %v2213
      %2320 = vst.msk [vmem:[#allocation3 + $0x9c] sm:$0xf] %vm2280, %v2215
      %2321 = vst.msk [vmem:[#allocation3 + $0xa0] sm:$0xf] %vm2280, %v2217
      %2322 = vst.msk [vmem:[#allocation3 + $0xa4] sm:$0xf] %vm2280, %v2219
      %2323 = vst.msk [vmem:[#allocation3 + $0xa8] sm:$0xf] %vm2280, %v2221
      %2324 = vst.msk [vmem:[#allocation3 + $0xac] sm:$0xf] %vm2280, %v2223
      %2325 = vst.msk [vmem:[#allocation3 + $0xb0] sm:$0xf] %vm2280, %v2225
      %2326 = vst.msk [vmem:[#allocation3 + $0xb4] sm:$0xf] %vm2280, %v2227
      %2327 = vst.msk [vmem:[#allocation3 + $0xb8] sm:$0xf] %vm2280, %v2229
      %2328 = vst.msk [vmem:[#allocation3 + $0xbc] sm:$0xf] %vm2280, %v2231
      %2332 = vrot.lane.b32.xlu0 %v844, 16
      %v2333 = vpop.permute.xlu0 %2332
      %2334 = vrot.lane.b32.xlu0 %v845, 16
      %v2335 = vpop.permute.xlu0 %2334
      %2336 = vrot.lane.b32.xlu0 %v846, 16
      %v2337 = vpop.permute.xlu0 %2336
      %2338 = vrot.lane.b32.xlu0 %v847, 16
      %v2339 = vpop.permute.xlu0 %2338
      %2340 = vrot.lane.b32.xlu0 %v848, 16
      %v2341 = vpop.permute.xlu0 %2340
      %2342 = vrot.lane.b32.xlu0 %v849, 16
      %v2343 = vpop.permute.xlu0 %2342
      %2344 = vrot.lane.b32.xlu0 %v850, 16
      %v2345 = vpop.permute.xlu0 %2344
      %2346 = vrot.lane.b32.xlu0 %v851, 16
      %v2347 = vpop.permute.xlu0 %2346
      %2348 = vrot.lane.b32.xlu0 %v852, 16
      %v2349 = vpop.permute.xlu0 %2348
      %2350 = vrot.lane.b32.xlu0 %v853, 16
      %v2351 = vpop.permute.xlu0 %2350
      %2352 = vrot.lane.b32.xlu0 %v854, 16
      %v2353 = vpop.permute.xlu0 %2352
      %2354 = vrot.lane.b32.xlu0 %v855, 16
      %v2355 = vpop.permute.xlu0 %2354
      %2356 = vrot.lane.b32.xlu0 %v856, 16
      %v2357 = vpop.permute.xlu0 %2356
      %2358 = vrot.lane.b32.xlu0 %v857, 16
      %v2359 = vpop.permute.xlu0 %2358
      %2360 = vrot.lane.b32.xlu0 %v858, 16
      %v2361 = vpop.permute.xlu0 %2360
      %2362 = vrot.lane.b32.xlu0 %v859, 16
      %v2363 = vpop.permute.xlu0 %2362
      %2364 = vrot.lane.b32.xlu0 %v860, 16
      %v2365 = vpop.permute.xlu0 %2364
      %2366 = vrot.lane.b32.xlu0 %v861, 16
      %v2367 = vpop.permute.xlu0 %2366
      %2368 = vrot.lane.b32.xlu0 %v862, 16
      %v2369 = vpop.permute.xlu0 %2368
      %2370 = vrot.lane.b32.xlu0 %v863, 16
      %v2371 = vpop.permute.xlu0 %2370
      %2372 = vrot.lane.b32.xlu0 %v864, 16
      %v2373 = vpop.permute.xlu0 %2372
      %2374 = vrot.lane.b32.xlu0 %v865, 16
      %v2375 = vpop.permute.xlu0 %2374
      %2376 = vrot.lane.b32.xlu0 %v866, 16
      %v2377 = vpop.permute.xlu0 %2376
      %2378 = vrot.lane.b32.xlu0 %v867, 16
      %v2379 = vpop.permute.xlu0 %2378
      %2380 = vrot.lane.b32.xlu0 %v868, 16
      %v2381 = vpop.permute.xlu0 %2380
      %2382 = vrot.lane.b32.xlu0 %v869, 16
      %v2383 = vpop.permute.xlu0 %2382
      %2384 = vrot.lane.b32.xlu0 %v870, 16
      %v2385 = vpop.permute.xlu0 %2384
      %2386 = vrot.lane.b32.xlu0 %v871, 16
      %v2387 = vpop.permute.xlu0 %2386
      %2388 = vrot.lane.b32.xlu0 %v872, 16
      %v2389 = vpop.permute.xlu0 %2388
      %2390 = vrot.lane.b32.xlu0 %v873, 16
      %v2391 = vpop.permute.xlu0 %2390
      %2392 = vrot.lane.b32.xlu0 %v874, 16
      %v2393 = vpop.permute.xlu0 %2392
      %2394 = vrot.lane.b32.xlu0 %v875, 16
      %v2395 = vpop.permute.xlu0 %2394
      %2396 = vrot.lane.b32.xlu0 %v876, 16
      %v2397 = vpop.permute.xlu0 %2396
      %2398 = vrot.lane.b32.xlu0 %v877, 16
      %v2399 = vpop.permute.xlu0 %2398
      %2400 = vrot.lane.b32.xlu0 %v878, 16
      %v2401 = vpop.permute.xlu0 %2400
      %2402 = vrot.lane.b32.xlu0 %v879, 16
      %v2403 = vpop.permute.xlu0 %2402
      %2404 = vrot.lane.b32.xlu0 %v880, 16
      %v2405 = vpop.permute.xlu0 %2404
      %2406 = vrot.lane.b32.xlu0 %v881, 16
      %v2407 = vpop.permute.xlu0 %2406
      %2408 = vrot.lane.b32.xlu0 %v882, 16
      %v2409 = vpop.permute.xlu0 %2408
      %2410 = vrot.lane.b32.xlu0 %v883, 16
      %v2411 = vpop.permute.xlu0 %2410
      %2412 = vrot.lane.b32.xlu0 %v884, 16
      %v2413 = vpop.permute.xlu0 %2412
      %2414 = vrot.lane.b32.xlu0 %v885, 16
      %v2415 = vpop.permute.xlu0 %2414
      %2416 = vrot.lane.b32.xlu0 %v886, 16
      %v2417 = vpop.permute.xlu0 %2416
      %2418 = vrot.lane.b32.xlu0 %v887, 16
      %v2419 = vpop.permute.xlu0 %2418
      %2420 = vrot.lane.b32.xlu0 %v888, 16
      %v2421 = vpop.permute.xlu0 %2420
      %2422 = vrot.lane.b32.xlu0 %v889, 16
      %v2423 = vpop.permute.xlu0 %2422
      %2424 = vrot.lane.b32.xlu0 %v890, 16
      %v2425 = vpop.permute.xlu0 %2424
      %2426 = vrot.lane.b32.xlu0 %v891, 16
      %v2427 = vpop.permute.xlu0 %2426
      %vm2476 = vcmask 158848
      %2477 = vst.msk [vmem:[#allocation3] sm:$0xf] %vm2476, %v2333
      %2478 = vst.msk [vmem:[#allocation3 + $0x4] sm:$0xf] %vm2476, %v2335
      %2479 = vst.msk [vmem:[#allocation3 + $0x8] sm:$0xf] %vm2476, %v2337
      %2480 = vst.msk [vmem:[#allocation3 + $0xc] sm:$0xf] %vm2476, %v2339
      %2481 = vst.msk [vmem:[#allocation3 + $0x10] sm:$0xf] %vm2476, %v2341
      %2482 = vst.msk [vmem:[#allocation3 + $0x14] sm:$0xf] %vm2476, %v2343
      %2483 = vst.msk [vmem:[#allocation3 + $0x18] sm:$0xf] %vm2476, %v2345
      %2484 = vst.msk [vmem:[#allocation3 + $0x1c] sm:$0xf] %vm2476, %v2347
      %2485 = vst.msk [vmem:[#allocation3 + $0x20] sm:$0xf] %vm2476, %v2349
      %2486 = vst.msk [vmem:[#allocation3 + $0x24] sm:$0xf] %vm2476, %v2351
      %2487 = vst.msk [vmem:[#allocation3 + $0x28] sm:$0xf] %vm2476, %v2353
      %2488 = vst.msk [vmem:[#allocation3 + $0x2c] sm:$0xf] %vm2476, %v2355
      %2489 = vst.msk [vmem:[#allocation3 + $0x30] sm:$0xf] %vm2476, %v2357
      %2490 = vst.msk [vmem:[#allocation3 + $0x34] sm:$0xf] %vm2476, %v2359
      %2491 = vst.msk [vmem:[#allocation3 + $0x38] sm:$0xf] %vm2476, %v2361
      %2492 = vst.msk [vmem:[#allocation3 + $0x3c] sm:$0xf] %vm2476, %v2363
      %2493 = vst.msk [vmem:[#allocation3 + $0x40] sm:$0xf] %vm2476, %v2365
      %2494 = vst.msk [vmem:[#allocation3 + $0x44] sm:$0xf] %vm2476, %v2367
      %2495 = vst.msk [vmem:[#allocation3 + $0x48] sm:$0xf] %vm2476, %v2369
      %2496 = vst.msk [vmem:[#allocation3 + $0x4c] sm:$0xf] %vm2476, %v2371
      %2497 = vst.msk [vmem:[#allocation3 + $0x50] sm:$0xf] %vm2476, %v2373
      %2498 = vst.msk [vmem:[#allocation3 + $0x54] sm:$0xf] %vm2476, %v2375
      %2499 = vst.msk [vmem:[#allocation3 + $0x58] sm:$0xf] %vm2476, %v2377
      %2500 = vst.msk [vmem:[#allocation3 + $0x5c] sm:$0xf] %vm2476, %v2379
      %2501 = vst.msk [vmem:[#allocation3 + $0x60] sm:$0xf] %vm2476, %v2381
      %2502 = vst.msk [vmem:[#allocation3 + $0x64] sm:$0xf] %vm2476, %v2383
      %2503 = vst.msk [vmem:[#allocation3 + $0x68] sm:$0xf] %vm2476, %v2385
      %2504 = vst.msk [vmem:[#allocation3 + $0x6c] sm:$0xf] %vm2476, %v2387
      %2505 = vst.msk [vmem:[#allocation3 + $0x70] sm:$0xf] %vm2476, %v2389
      %2506 = vst.msk [vmem:[#allocation3 + $0x74] sm:$0xf] %vm2476, %v2391
      %2507 = vst.msk [vmem:[#allocation3 + $0x78] sm:$0xf] %vm2476, %v2393
      %2508 = vst.msk [vmem:[#allocation3 + $0x7c] sm:$0xf] %vm2476, %v2395
      %2509 = vst.msk [vmem:[#allocation3 + $0x80] sm:$0xf] %vm2476, %v2397
      %2510 = vst.msk [vmem:[#allocation3 + $0x84] sm:$0xf] %vm2476, %v2399
      %2511 = vst.msk [vmem:[#allocation3 + $0x88] sm:$0xf] %vm2476, %v2401
      %2512 = vst.msk [vmem:[#allocation3 + $0x8c] sm:$0xf] %vm2476, %v2403
      %2513 = vst.msk [vmem:[#allocation3 + $0x90] sm:$0xf] %vm2476, %v2405
      %2514 = vst.msk [vmem:[#allocation3 + $0x94] sm:$0xf] %vm2476, %v2407
      %2515 = vst.msk [vmem:[#allocation3 + $0x98] sm:$0xf] %vm2476, %v2409
      %2516 = vst.msk [vmem:[#allocation3 + $0x9c] sm:$0xf] %vm2476, %v2411
      %2517 = vst.msk [vmem:[#allocation3 + $0xa0] sm:$0xf] %vm2476, %v2413
      %2518 = vst.msk [vmem:[#allocation3 + $0xa4] sm:$0xf] %vm2476, %v2415
      %2519 = vst.msk [vmem:[#allocation3 + $0xa8] sm:$0xf] %vm2476, %v2417
      %2520 = vst.msk [vmem:[#allocation3 + $0xac] sm:$0xf] %vm2476, %v2419
      %2521 = vst.msk [vmem:[#allocation3 + $0xb0] sm:$0xf] %vm2476, %v2421
      %2522 = vst.msk [vmem:[#allocation3 + $0xb4] sm:$0xf] %vm2476, %v2423
      %2523 = vst.msk [vmem:[#allocation3 + $0xb8] sm:$0xf] %vm2476, %v2425
      %2524 = vst.msk [vmem:[#allocation3 + $0xbc] sm:$0xf] %vm2476, %v2427
      %v2525 = vrot.slane %v2113, 4
      %v2526 = vor.u32 %v2525, %v1917
      %v2527 = vrot.slane %v2526, 4
      %v2528 = vrot.slane %v2123, 5
      %v2529 = vsel %vm1674, %v2527, %v2528
      %v2530 = vrot.slane %v2120, 4
      %v2531 = vor.u32 %v2530, %v2528
      %v2532 = vrot.slane %v2531, 4
      %v2533 = vrot.slane %v2132, 5
      %v2534 = vsel %vm1674, %v2532, %v2533
      %v2535 = vrot.slane %v2129, 4
      %v2536 = vor.u32 %v2535, %v2533
      %v2537 = vrot.slane %v2536, 4
      %v2539 = vshll.u32 %v892, 16
      %v2541 = vrot.slane %v2539, 5
      %v2542 = vsel %vm1674, %v2537, %v2541
      %2543 = vrot.lane.b32.xlu0 %v1695, 20
      %v2544 = vpop.permute.xlu0 %2543
      %2545 = vrot.lane.b32.xlu0 %v1700, 20
      %v2546 = vpop.permute.xlu0 %2545
      %2547 = vrot.lane.b32.xlu0 %v1705, 20
      %v2548 = vpop.permute.xlu0 %2547
      %2549 = vrot.lane.b32.xlu0 %v1710, 20
      %v2550 = vpop.permute.xlu0 %2549
      %2551 = vrot.lane.b32.xlu0 %v1715, 20
      %v2552 = vpop.permute.xlu0 %2551
      %2553 = vrot.lane.b32.xlu0 %v1720, 20
      %v2554 = vpop.permute.xlu0 %2553
      %2555 = vrot.lane.b32.xlu0 %v1725, 20
      %v2556 = vpop.permute.xlu0 %2555
      %2557 = vrot.lane.b32.xlu0 %v1730, 20
      %v2558 = vpop.permute.xlu0 %2557
      %2559 = vrot.lane.b32.xlu0 %v1735, 20
      %v2560 = vpop.permute.xlu0 %2559
      %2561 = vrot.lane.b32.xlu0 %v1740, 20
      %v2562 = vpop.permute.xlu0 %2561
      %2563 = vrot.lane.b32.xlu0 %v1745, 20
      %v2564 = vpop.permute.xlu0 %2563
      %2565 = vrot.lane.b32.xlu0 %v1750, 20
      %v2566 = vpop.permute.xlu0 %2565
      %2567 = vrot.lane.b32.xlu0 %v1755, 20
      %v2568 = vpop.permute.xlu0 %2567
      %2569 = vrot.lane.b32.xlu0 %v1760, 20
      %v2570 = vpop.permute.xlu0 %2569
      %2571 = vrot.lane.b32.xlu0 %v1765, 20
      %v2572 = vpop.permute.xlu0 %2571
      %2573 = vrot.lane.b32.xlu0 %v1770, 20
      %v2574 = vpop.permute.xlu0 %2573
      %2575 = vrot.lane.b32.xlu0 %v1775, 20
      %v2576 = vpop.permute.xlu0 %2575
      %2577 = vrot.lane.b32.xlu0 %v1780, 20
      %v2578 = vpop.permute.xlu0 %2577
      %2579 = vrot.lane.b32.xlu0 %v1785, 20
      %v2580 = vpop.permute.xlu0 %2579
      %2581 = vrot.lane.b32.xlu0 %v1790, 20
      %v2582 = vpop.permute.xlu0 %2581
      %2583 = vrot.lane.b32.xlu0 %v1795, 20
      %v2584 = vpop.permute.xlu0 %2583
      %2585 = vrot.lane.b32.xlu0 %v1800, 20
      %v2586 = vpop.permute.xlu0 %2585
      %2587 = vrot.lane.b32.xlu0 %v1805, 20
      %v2588 = vpop.permute.xlu0 %2587
      %2589 = vrot.lane.b32.xlu0 %v1810, 20
      %v2590 = vpop.permute.xlu0 %2589
      %2591 = vrot.lane.b32.xlu0 %v1815, 20
      %v2592 = vpop.permute.xlu0 %2591
      %2593 = vrot.lane.b32.xlu0 %v1820, 20
      %v2594 = vpop.permute.xlu0 %2593
      %2595 = vrot.lane.b32.xlu0 %v1825, 20
      %v2596 = vpop.permute.xlu0 %2595
      %2597 = vrot.lane.b32.xlu0 %v1830, 20
      %v2598 = vpop.permute.xlu0 %2597
      %2599 = vrot.lane.b32.xlu0 %v1835, 20
      %v2600 = vpop.permute.xlu0 %2599
      %2601 = vrot.lane.b32.xlu0 %v1840, 20
      %v2602 = vpop.permute.xlu0 %2601
      %2603 = vrot.lane.b32.xlu0 %v1845, 20
      %v2604 = vpop.permute.xlu0 %2603
      %2605 = vrot.lane.b32.xlu0 %v1850, 20
      %v2606 = vpop.permute.xlu0 %2605
      %2607 = vrot.lane.b32.xlu0 %v1855, 20
      %v2608 = vpop.permute.xlu0 %2607
      %2609 = vrot.lane.b32.xlu0 %v1860, 20
      %v2610 = vpop.permute.xlu0 %2609
      %2611 = vrot.lane.b32.xlu0 %v1865, 20
      %v2612 = vpop.permute.xlu0 %2611
      %2613 = vrot.lane.b32.xlu0 %v1870, 20
      %v2614 = vpop.permute.xlu0 %2613
      %2615 = vrot.lane.b32.xlu0 %v1875, 20
      %v2616 = vpop.permute.xlu0 %2615
      %2617 = vrot.lane.b32.xlu0 %v1880, 20
      %v2618 = vpop.permute.xlu0 %2617
      %2619 = vrot.lane.b32.xlu0 %v1885, 20
      %v2620 = vpop.permute.xlu0 %2619
      %2621 = vrot.lane.b32.xlu0 %v1890, 20
      %v2622 = vpop.permute.xlu0 %2621
      %2623 = vrot.lane.b32.xlu0 %v1895, 20
      %v2624 = vpop.permute.xlu0 %2623
      %2625 = vrot.lane.b32.xlu0 %v1900, 20
      %v2626 = vpop.permute.xlu0 %2625
      %2627 = vrot.lane.b32.xlu0 %v1905, 20
      %v2628 = vpop.permute.xlu0 %2627
      %2629 = vrot.lane.b32.xlu0 %v1910, 20
      %v2630 = vpop.permute.xlu0 %2629
      %2631 = vrot.lane.b32.xlu0 %v1918, 20
      %v2632 = vpop.permute.xlu0 %2631
      %2633 = vrot.lane.b32.xlu0 %v2529, 20
      %v2634 = vpop.permute.xlu0 %2633
      %2635 = vrot.lane.b32.xlu0 %v2534, 20
      %v2636 = vpop.permute.xlu0 %2635
      %2637 = vrot.lane.b32.xlu0 %v2542, 20
      %v2638 = vpop.permute.xlu0 %2637
      %vm2687 = vcmask 191648
      %2688 = vst.msk [vmem:[#allocation3] sm:$0xf] %vm2687, %v2544
      %2689 = vst.msk [vmem:[#allocation3 + $0x4] sm:$0xf] %vm2687, %v2546
      %2690 = vst.msk [vmem:[#allocation3 + $0x8] sm:$0xf] %vm2687, %v2548
      %2691 = vst.msk [vmem:[#allocation3 + $0xc] sm:$0xf] %vm2687, %v2550
      %2692 = vst.msk [vmem:[#allocation3 + $0x10] sm:$0xf] %vm2687, %v2552
      %2693 = vst.msk [vmem:[#allocation3 + $0x14] sm:$0xf] %vm2687, %v2554
      %2694 = vst.msk [vmem:[#allocation3 + $0x18] sm:$0xf] %vm2687, %v2556
      %2695 = vst.msk [vmem:[#allocation3 + $0x1c] sm:$0xf] %vm2687, %v2558
      %2696 = vst.msk [vmem:[#allocation3 + $0x20] sm:$0xf] %vm2687, %v2560
      %2697 = vst.msk [vmem:[#allocation3 + $0x24] sm:$0xf] %vm2687, %v2562
      %2698 = vst.msk [vmem:[#allocation3 + $0x28] sm:$0xf] %vm2687, %v2564
      %2699 = vst.msk [vmem:[#allocation3 + $0x2c] sm:$0xf] %vm2687, %v2566
      %2700 = vst.msk [vmem:[#allocation3 + $0x30] sm:$0xf] %vm2687, %v2568
      %2701 = vst.msk [vmem:[#allocation3 + $0x34] sm:$0xf] %vm2687, %v2570
      %2702 = vst.msk [vmem:[#allocation3 + $0x38] sm:$0xf] %vm2687, %v2572
      %2703 = vst.msk [vmem:[#allocation3 + $0x3c] sm:$0xf] %vm2687, %v2574
      %2704 = vst.msk [vmem:[#allocation3 + $0x40] sm:$0xf] %vm2687, %v2576
      %2705 = vst.msk [vmem:[#allocation3 + $0x44] sm:$0xf] %vm2687, %v2578
      %2706 = vst.msk [vmem:[#allocation3 + $0x48] sm:$0xf] %vm2687, %v2580
      %2707 = vst.msk [vmem:[#allocation3 + $0x4c] sm:$0xf] %vm2687, %v2582
      %2708 = vst.msk [vmem:[#allocation3 + $0x50] sm:$0xf] %vm2687, %v2584
      %2709 = vst.msk [vmem:[#allocation3 + $0x54] sm:$0xf] %vm2687, %v2586
      %2710 = vst.msk [vmem:[#allocation3 + $0x58] sm:$0xf] %vm2687, %v2588
      %2711 = vst.msk [vmem:[#allocation3 + $0x5c] sm:$0xf] %vm2687, %v2590
      %2712 = vst.msk [vmem:[#allocation3 + $0x60] sm:$0xf] %vm2687, %v2592
      %2713 = vst.msk [vmem:[#allocation3 + $0x64] sm:$0xf] %vm2687, %v2594
      %2714 = vst.msk [vmem:[#allocation3 + $0x68] sm:$0xf] %vm2687, %v2596
      %2715 = vst.msk [vmem:[#allocation3 + $0x6c] sm:$0xf] %vm2687, %v2598
      %2716 = vst.msk [vmem:[#allocation3 + $0x70] sm:$0xf] %vm2687, %v2600
      %2717 = vst.msk [vmem:[#allocation3 + $0x74] sm:$0xf] %vm2687, %v2602
      %2718 = vst.msk [vmem:[#allocation3 + $0x78] sm:$0xf] %vm2687, %v2604
      %2719 = vst.msk [vmem:[#allocation3 + $0x7c] sm:$0xf] %vm2687, %v2606
      %2720 = vst.msk [vmem:[#allocation3 + $0x80] sm:$0xf] %vm2687, %v2608
      %2721 = vst.msk [vmem:[#allocation3 + $0x84] sm:$0xf] %vm2687, %v2610
      %2722 = vst.msk [vmem:[#allocation3 + $0x88] sm:$0xf] %vm2687, %v2612
      %2723 = vst.msk [vmem:[#allocation3 + $0x8c] sm:$0xf] %vm2687, %v2614
      %2724 = vst.msk [vmem:[#allocation3 + $0x90] sm:$0xf] %vm2687, %v2616
      %2725 = vst.msk [vmem:[#allocation3 + $0x94] sm:$0xf] %vm2687, %v2618
      %2726 = vst.msk [vmem:[#allocation3 + $0x98] sm:$0xf] %vm2687, %v2620
      %2727 = vst.msk [vmem:[#allocation3 + $0x9c] sm:$0xf] %vm2687, %v2622
      %2728 = vst.msk [vmem:[#allocation3 + $0xa0] sm:$0xf] %vm2687, %v2624
      %2729 = vst.msk [vmem:[#allocation3 + $0xa4] sm:$0xf] %vm2687, %v2626
      %2730 = vst.msk [vmem:[#allocation3 + $0xa8] sm:$0xf] %vm2687, %v2628
      %2731 = vst.msk [vmem:[#allocation3 + $0xac] sm:$0xf] %vm2687, %v2630
      %2732 = vst.msk [vmem:[#allocation3 + $0xb0] sm:$0xf] %vm2687, %v2632
      %2733 = vst.msk [vmem:[#allocation3 + $0xb4] sm:$0xf] %vm2687, %v2634
      %2734 = vst.msk [vmem:[#allocation3 + $0xb8] sm:$0xf] %vm2687, %v2636
      %2735 = vst.msk [vmem:[#allocation3 + $0xbc] sm:$0xf] %vm2687, %v2638
      %v2736 = vrot.slane %v2131, 4
      %v2737 = vshrl.u32 %v892, 16
      %v2739 = vrot.slane %v2737, 7
      %v2740 = vor.u32 %v2739, %v2539
      %v2741 = vsel %vm898, %v2736, %v2740
      %v2742 = vrot.slane %v2739, 4
      %v2744 = vshrl.u32 %v893, 16
      %v2746 = vrot.slane %v2744, 7
      %v2747 = vshll.u32 %v893, 16
      %v2749 = vor.u32 %v2746, %v2747
      %v2750 = vsel %vm898, %v2742, %v2749
      %v2751 = vrot.slane %v2746, 4
      %v2753 = vshrl.u32 %v894, 16
      %v2755 = vrot.slane %v2753, 7
      %v2756 = vshll.u32 %v894, 16
      %v2758 = vor.u32 %v2755, %v2756
      %v2759 = vsel %vm898, %v2751, %v2758
      %2760 = vrot.lane.b32.xlu0 %v965, 24
      %v2761 = vpop.permute.xlu0 %2760
      %2762 = vrot.lane.b32.xlu0 %v974, 24
      %v2763 = vpop.permute.xlu0 %2762
      %2764 = vrot.lane.b32.xlu0 %v983, 24
      %v2765 = vpop.permute.xlu0 %2764
      %2766 = vrot.lane.b32.xlu0 %v992, 24
      %v2767 = vpop.permute.xlu0 %2766
      %2768 = vrot.lane.b32.xlu0 %v1001, 24
      %v2769 = vpop.permute.xlu0 %2768
      %2770 = vrot.lane.b32.xlu0 %v1010, 24
      %v2771 = vpop.permute.xlu0 %2770
      %2772 = vrot.lane.b32.xlu0 %v1019, 24
      %v2773 = vpop.permute.xlu0 %2772
      %2774 = vrot.lane.b32.xlu0 %v1028, 24
      %v2775 = vpop.permute.xlu0 %2774
      %2776 = vrot.lane.b32.xlu0 %v1037, 24
      %v2777 = vpop.permute.xlu0 %2776
      %2778 = vrot.lane.b32.xlu0 %v1046, 24
      %v2779 = vpop.permute.xlu0 %2778
      %2780 = vrot.lane.b32.xlu0 %v1055, 24
      %v2781 = vpop.permute.xlu0 %2780
      %2782 = vrot.lane.b32.xlu0 %v1064, 24
      %v2783 = vpop.permute.xlu0 %2782
      %2784 = vrot.lane.b32.xlu0 %v1073, 24
      %v2785 = vpop.permute.xlu0 %2784
      %2786 = vrot.lane.b32.xlu0 %v1082, 24
      %v2787 = vpop.permute.xlu0 %2786
      %2788 = vrot.lane.b32.xlu0 %v1091, 24
      %v2789 = vpop.permute.xlu0 %2788
      %2790 = vrot.lane.b32.xlu0 %v1100, 24
      %v2791 = vpop.permute.xlu0 %2790
      %2792 = vrot.lane.b32.xlu0 %v1109, 24
      %v2793 = vpop.permute.xlu0 %2792
      %2794 = vrot.lane.b32.xlu0 %v1118, 24
      %v2795 = vpop.permute.xlu0 %2794
      %2796 = vrot.lane.b32.xlu0 %v1127, 24
      %v2797 = vpop.permute.xlu0 %2796
      %2798 = vrot.lane.b32.xlu0 %v1136, 24
      %v2799 = vpop.permute.xlu0 %2798
      %2800 = vrot.lane.b32.xlu0 %v1145, 24
      %v2801 = vpop.permute.xlu0 %2800
      %2802 = vrot.lane.b32.xlu0 %v1154, 24
      %v2803 = vpop.permute.xlu0 %2802
      %2804 = vrot.lane.b32.xlu0 %v1163, 24
      %v2805 = vpop.permute.xlu0 %2804
      %2806 = vrot.lane.b32.xlu0 %v1172, 24
      %v2807 = vpop.permute.xlu0 %2806
      %2808 = vrot.lane.b32.xlu0 %v1181, 24
      %v2809 = vpop.permute.xlu0 %2808
      %2810 = vrot.lane.b32.xlu0 %v1190, 24
      %v2811 = vpop.permute.xlu0 %2810
      %2812 = vrot.lane.b32.xlu0 %v1199, 24
      %v2813 = vpop.permute.xlu0 %2812
      %2814 = vrot.lane.b32.xlu0 %v1208, 24
      %v2815 = vpop.permute.xlu0 %2814
      %2816 = vrot.lane.b32.xlu0 %v1217, 24
      %v2817 = vpop.permute.xlu0 %2816
      %2818 = vrot.lane.b32.xlu0 %v1226, 24
      %v2819 = vpop.permute.xlu0 %2818
      %2820 = vrot.lane.b32.xlu0 %v1235, 24
      %v2821 = vpop.permute.xlu0 %2820
      %2822 = vrot.lane.b32.xlu0 %v1244, 24
      %v2823 = vpop.permute.xlu0 %2822
      %2824 = vrot.lane.b32.xlu0 %v1253, 24
      %v2825 = vpop.permute.xlu0 %2824
      %2826 = vrot.lane.b32.xlu0 %v1262, 24
      %v2827 = vpop.permute.xlu0 %2826
      %2828 = vrot.lane.b32.xlu0 %v1271, 24
      %v2829 = vpop.permute.xlu0 %2828
      %2830 = vrot.lane.b32.xlu0 %v1280, 24
      %v2831 = vpop.permute.xlu0 %2830
      %2832 = vrot.lane.b32.xlu0 %v1289, 24
      %v2833 = vpop.permute.xlu0 %2832
      %2834 = vrot.lane.b32.xlu0 %v1298, 24
      %v2835 = vpop.permute.xlu0 %2834
      %2836 = vrot.lane.b32.xlu0 %v1307, 24
      %v2837 = vpop.permute.xlu0 %2836
      %2838 = vrot.lane.b32.xlu0 %v1316, 24
      %v2839 = vpop.permute.xlu0 %2838
      %2840 = vrot.lane.b32.xlu0 %v1325, 24
      %v2841 = vpop.permute.xlu0 %2840
      %2842 = vrot.lane.b32.xlu0 %v1334, 24
      %v2843 = vpop.permute.xlu0 %2842
      %2844 = vrot.lane.b32.xlu0 %v2117, 24
      %v2845 = vpop.permute.xlu0 %2844
      %2846 = vrot.lane.b32.xlu0 %v2126, 24
      %v2847 = vpop.permute.xlu0 %2846
      %2848 = vrot.lane.b32.xlu0 %v2135, 24
      %v2849 = vpop.permute.xlu0 %2848
      %2850 = vrot.lane.b32.xlu0 %v2741, 24
      %v2851 = vpop.permute.xlu0 %2850
      %2852 = vrot.lane.b32.xlu0 %v2750, 24
      %v2853 = vpop.permute.xlu0 %2852
      %2854 = vrot.lane.b32.xlu0 %v2759, 24
      %v2855 = vpop.permute.xlu0 %2854
      %vm2904 = vcmask 224448
      %2905 = vst.msk [vmem:[#allocation3] sm:$0xf] %vm2904, %v2761
      %2906 = vst.msk [vmem:[#allocation3 + $0x4] sm:$0xf] %vm2904, %v2763
      %2907 = vst.msk [vmem:[#allocation3 + $0x8] sm:$0xf] %vm2904, %v2765
      %2908 = vst.msk [vmem:[#allocation3 + $0xc] sm:$0xf] %vm2904, %v2767
      %2909 = vst.msk [vmem:[#allocation3 + $0x10] sm:$0xf] %vm2904, %v2769
      %2910 = vst.msk [vmem:[#allocation3 + $0x14] sm:$0xf] %vm2904, %v2771
      %2911 = vst.msk [vmem:[#allocation3 + $0x18] sm:$0xf] %vm2904, %v2773
      %2912 = vst.msk [vmem:[#allocation3 + $0x1c] sm:$0xf] %vm2904, %v2775
      %2913 = vst.msk [vmem:[#allocation3 + $0x20] sm:$0xf] %vm2904, %v2777
      %2914 = vst.msk [vmem:[#allocation3 + $0x24] sm:$0xf] %vm2904, %v2779
      %2915 = vst.msk [vmem:[#allocation3 + $0x28] sm:$0xf] %vm2904, %v2781
      %2916 = vst.msk [vmem:[#allocation3 + $0x2c] sm:$0xf] %vm2904, %v2783
      %2917 = vst.msk [vmem:[#allocation3 + $0x30] sm:$0xf] %vm2904, %v2785
      %2918 = vst.msk [vmem:[#allocation3 + $0x34] sm:$0xf] %vm2904, %v2787
      %2919 = vst.msk [vmem:[#allocation3 + $0x38] sm:$0xf] %vm2904, %v2789
      %2920 = vst.msk [vmem:[#allocation3 + $0x3c] sm:$0xf] %vm2904, %v2791
      %2921 = vst.msk [vmem:[#allocation3 + $0x40] sm:$0xf] %vm2904, %v2793
      %2922 = vst.msk [vmem:[#allocation3 + $0x44] sm:$0xf] %vm2904, %v2795
      %2923 = vst.msk [vmem:[#allocation3 + $0x48] sm:$0xf] %vm2904, %v2797
      %2924 = vst.msk [vmem:[#allocation3 + $0x4c] sm:$0xf] %vm2904, %v2799
      %2925 = vst.msk [vmem:[#allocation3 + $0x50] sm:$0xf] %vm2904, %v2801
      %2926 = vst.msk [vmem:[#allocation3 + $0x54] sm:$0xf] %vm2904, %v2803
      %2927 = vst.msk [vmem:[#allocation3 + $0x58] sm:$0xf] %vm2904, %v2805
      %2928 = vst.msk [vmem:[#allocation3 + $0x5c] sm:$0xf] %vm2904, %v2807
      %2929 = vst.msk [vmem:[#allocation3 + $0x60] sm:$0xf] %vm2904, %v2809
      %2930 = vst.msk [vmem:[#allocation3 + $0x64] sm:$0xf] %vm2904, %v2811
      %2931 = vst.msk [vmem:[#allocation3 + $0x68] sm:$0xf] %vm2904, %v2813
      %2932 = vst.msk [vmem:[#allocation3 + $0x6c] sm:$0xf] %vm2904, %v2815
      %2933 = vst.msk [vmem:[#allocation3 + $0x70] sm:$0xf] %vm2904, %v2817
      %2934 = vst.msk [vmem:[#allocation3 + $0x74] sm:$0xf] %vm2904, %v2819
      %2935 = vst.msk [vmem:[#allocation3 + $0x78] sm:$0xf] %vm2904, %v2821
      %2936 = vst.msk [vmem:[#allocation3 + $0x7c] sm:$0xf] %vm2904, %v2823
      %2937 = vst.msk [vmem:[#allocation3 + $0x80] sm:$0xf] %vm2904, %v2825
      %2938 = vst.msk [vmem:[#allocation3 + $0x84] sm:$0xf] %vm2904, %v2827
      %2939 = vst.msk [vmem:[#allocation3 + $0x88] sm:$0xf] %vm2904, %v2829
      %2940 = vst.msk [vmem:[#allocation3 + $0x8c] sm:$0xf] %vm2904, %v2831
      %2941 = vst.msk [vmem:[#allocation3 + $0x90] sm:$0xf] %vm2904, %v2833
      %2942 = vst.msk [vmem:[#allocation3 + $0x94] sm:$0xf] %vm2904, %v2835
      %2943 = vst.msk [vmem:[#allocation3 + $0x98] sm:$0xf] %vm2904, %v2837
      %2944 = vst.msk [vmem:[#allocation3 + $0x9c] sm:$0xf] %vm2904, %v2839
      %2945 = vst.msk [vmem:[#allocation3 + $0xa0] sm:$0xf] %vm2904, %v2841
      %2946 = vst.msk [vmem:[#allocation3 + $0xa4] sm:$0xf] %vm2904, %v2843
      %2947 = vst.msk [vmem:[#allocation3 + $0xa8] sm:$0xf] %vm2904, %v2845
      %2948 = vst.msk [vmem:[#allocation3 + $0xac] sm:$0xf] %vm2904, %v2847
      %2949 = vst.msk [vmem:[#allocation3 + $0xb0] sm:$0xf] %vm2904, %v2849
      %2950 = vst.msk [vmem:[#allocation3 + $0xb4] sm:$0xf] %vm2904, %v2851
      %2951 = vst.msk [vmem:[#allocation3 + $0xb8] sm:$0xf] %vm2904, %v2853
      %2952 = vst.msk [vmem:[#allocation3 + $0xbc] sm:$0xf] %vm2904, %v2855
      %2956 = vrot.lane.b32.xlu0 %v847, 28
      %v2957 = vpop.permute.xlu0 %2956
      %2958 = vrot.lane.b32.xlu0 %v848, 28
      %v2959 = vpop.permute.xlu0 %2958
      %2960 = vrot.lane.b32.xlu0 %v849, 28
      %v2961 = vpop.permute.xlu0 %2960
      %2962 = vrot.lane.b32.xlu0 %v850, 28
      %v2963 = vpop.permute.xlu0 %2962
      %2964 = vrot.lane.b32.xlu0 %v851, 28
      %v2965 = vpop.permute.xlu0 %2964
      %2966 = vrot.lane.b32.xlu0 %v852, 28
      %v2967 = vpop.permute.xlu0 %2966
      %2968 = vrot.lane.b32.xlu0 %v853, 28
      %v2969 = vpop.permute.xlu0 %2968
      %2970 = vrot.lane.b32.xlu0 %v854, 28
      %v2971 = vpop.permute.xlu0 %2970
      %2972 = vrot.lane.b32.xlu0 %v855, 28
      %v2973 = vpop.permute.xlu0 %2972
      %2974 = vrot.lane.b32.xlu0 %v856, 28
      %v2975 = vpop.permute.xlu0 %2974
      %2976 = vrot.lane.b32.xlu0 %v857, 28
      %v2977 = vpop.permute.xlu0 %2976
      %2978 = vrot.lane.b32.xlu0 %v858, 28
      %v2979 = vpop.permute.xlu0 %2978
      %2980 = vrot.lane.b32.xlu0 %v859, 28
      %v2981 = vpop.permute.xlu0 %2980
      %2982 = vrot.lane.b32.xlu0 %v860, 28
      %v2983 = vpop.permute.xlu0 %2982
      %2984 = vrot.lane.b32.xlu0 %v861, 28
      %v2985 = vpop.permute.xlu0 %2984
      %2986 = vrot.lane.b32.xlu0 %v862, 28
      %v2987 = vpop.permute.xlu0 %2986
      %2988 = vrot.lane.b32.xlu0 %v863, 28
      %v2989 = vpop.permute.xlu0 %2988
      %2990 = vrot.lane.b32.xlu0 %v864, 28
      %v2991 = vpop.permute.xlu0 %2990
      %2992 = vrot.lane.b32.xlu0 %v865, 28
      %v2993 = vpop.permute.xlu0 %2992
      %2994 = vrot.lane.b32.xlu0 %v866, 28
      %v2995 = vpop.permute.xlu0 %2994
      %2996 = vrot.lane.b32.xlu0 %v867, 28
      %v2997 = vpop.permute.xlu0 %2996
      %2998 = vrot.lane.b32.xlu0 %v868, 28
      %v2999 = vpop.permute.xlu0 %2998
      %3000 = vrot.lane.b32.xlu0 %v869, 28
      %v3001 = vpop.permute.xlu0 %3000
      %3002 = vrot.lane.b32.xlu0 %v870, 28
      %v3003 = vpop.permute.xlu0 %3002
      %3004 = vrot.lane.b32.xlu0 %v871, 28
      %v3005 = vpop.permute.xlu0 %3004
      %3006 = vrot.lane.b32.xlu0 %v872, 28
      %v3007 = vpop.permute.xlu0 %3006
      %3008 = vrot.lane.b32.xlu0 %v873, 28
      %v3009 = vpop.permute.xlu0 %3008
      %3010 = vrot.lane.b32.xlu0 %v874, 28
      %v3011 = vpop.permute.xlu0 %3010
      %3012 = vrot.lane.b32.xlu0 %v875, 28
      %v3013 = vpop.permute.xlu0 %3012
      %3014 = vrot.lane.b32.xlu0 %v876, 28
      %v3015 = vpop.permute.xlu0 %3014
      %3016 = vrot.lane.b32.xlu0 %v877, 28
      %v3017 = vpop.permute.xlu0 %3016
      %3018 = vrot.lane.b32.xlu0 %v878, 28
      %v3019 = vpop.permute.xlu0 %3018
      %3020 = vrot.lane.b32.xlu0 %v879, 28
      %v3021 = vpop.permute.xlu0 %3020
      %3022 = vrot.lane.b32.xlu0 %v880, 28
      %v3023 = vpop.permute.xlu0 %3022
      %3024 = vrot.lane.b32.xlu0 %v881, 28
      %v3025 = vpop.permute.xlu0 %3024
      %3026 = vrot.lane.b32.xlu0 %v882, 28
      %v3027 = vpop.permute.xlu0 %3026
      %3028 = vrot.lane.b32.xlu0 %v883, 28
      %v3029 = vpop.permute.xlu0 %3028
      %3030 = vrot.lane.b32.xlu0 %v884, 28
      %v3031 = vpop.permute.xlu0 %3030
      %3032 = vrot.lane.b32.xlu0 %v885, 28
      %v3033 = vpop.permute.xlu0 %3032
      %3034 = vrot.lane.b32.xlu0 %v886, 28
      %v3035 = vpop.permute.xlu0 %3034
      %3036 = vrot.lane.b32.xlu0 %v887, 28
      %v3037 = vpop.permute.xlu0 %3036
      %3038 = vrot.lane.b32.xlu0 %v888, 28
      %v3039 = vpop.permute.xlu0 %3038
      %3040 = vrot.lane.b32.xlu0 %v889, 28
      %v3041 = vpop.permute.xlu0 %3040
      %3042 = vrot.lane.b32.xlu0 %v890, 28
      %v3043 = vpop.permute.xlu0 %3042
      %3044 = vrot.lane.b32.xlu0 %v891, 28
      %v3045 = vpop.permute.xlu0 %3044
      %3046 = vrot.lane.b32.xlu0 %v892, 28
      %v3047 = vpop.permute.xlu0 %3046
      %3048 = vrot.lane.b32.xlu0 %v893, 28
      %v3049 = vpop.permute.xlu0 %3048
      %3050 = vrot.lane.b32.xlu0 %v894, 28
      %v3051 = vpop.permute.xlu0 %3050
      %vm3100 = vcmask 257248
      %3101 = vst.msk [vmem:[#allocation3] sm:$0xf] %vm3100, %v2957
      %3102 = vst.msk [vmem:[#allocation3 + $0x4] sm:$0xf] %vm3100, %v2959
      %3103 = vst.msk [vmem:[#allocation3 + $0x8] sm:$0xf] %vm3100, %v2961
      %3104 = vst.msk [vmem:[#allocation3 + $0xc] sm:$0xf] %vm3100, %v2963
      %3105 = vst.msk [vmem:[#allocation3 + $0x10] sm:$0xf] %vm3100, %v2965
      %3106 = vst.msk [vmem:[#allocation3 + $0x14] sm:$0xf] %vm3100, %v2967
      %3107 = vst.msk [vmem:[#allocation3 + $0x18] sm:$0xf] %vm3100, %v2969
      %3108 = vst.msk [vmem:[#allocation3 + $0x1c] sm:$0xf] %vm3100, %v2971
      %3109 = vst.msk [vmem:[#allocation3 + $0x20] sm:$0xf] %vm3100, %v2973
      %3110 = vst.msk [vmem:[#allocation3 + $0x24] sm:$0xf] %vm3100, %v2975
      %3111 = vst.msk [vmem:[#allocation3 + $0x28] sm:$0xf] %vm3100, %v2977
      %3112 = vst.msk [vmem:[#allocation3 + $0x2c] sm:$0xf] %vm3100, %v2979
      %3113 = vst.msk [vmem:[#allocation3 + $0x30] sm:$0xf] %vm3100, %v2981
      %3114 = vst.msk [vmem:[#allocation3 + $0x34] sm:$0xf] %vm3100, %v2983
      %3115 = vst.msk [vmem:[#allocation3 + $0x38] sm:$0xf] %vm3100, %v2985
      %3116 = vst.msk [vmem:[#allocation3 + $0x3c] sm:$0xf] %vm3100, %v2987
      %3117 = vst.msk [vmem:[#allocation3 + $0x40] sm:$0xf] %vm3100, %v2989
      %3118 = vst.msk [vmem:[#allocation3 + $0x44] sm:$0xf] %vm3100, %v2991
      %3119 = vst.msk [vmem:[#allocation3 + $0x48] sm:$0xf] %vm3100, %v2993
      %3120 = vst.msk [vmem:[#allocation3 + $0x4c] sm:$0xf] %vm3100, %v2995
      %3121 = vst.msk [vmem:[#allocation3 + $0x50] sm:$0xf] %vm3100, %v2997
      %3122 = vst.msk [vmem:[#allocation3 + $0x54] sm:$0xf] %vm3100, %v2999
      %3123 = vst.msk [vmem:[#allocation3 + $0x58] sm:$0xf] %vm3100, %v3001
      %3124 = vst.msk [vmem:[#allocation3 + $0x5c] sm:$0xf] %vm3100, %v3003
      %3125 = vst.msk [vmem:[#allocation3 + $0x60] sm:$0xf] %vm3100, %v3005
      %3126 = vst.msk [vmem:[#allocation3 + $0x64] sm:$0xf] %vm3100, %v3007
      %3127 = vst.msk [vmem:[#allocation3 + $0x68] sm:$0xf] %vm3100, %v3009
      %3128 = vst.msk [vmem:[#allocation3 + $0x6c] sm:$0xf] %vm3100, %v3011
      %3129 = vst.msk [vmem:[#allocation3 + $0x70] sm:$0xf] %vm3100, %v3013
      %3130 = vst.msk [vmem:[#allocation3 + $0x74] sm:$0xf] %vm3100, %v3015
      %3131 = vst.msk [vmem:[#allocation3 + $0x78] sm:$0xf] %vm3100, %v3017
      %3132 = vst.msk [vmem:[#allocation3 + $0x7c] sm:$0xf] %vm3100, %v3019
      %3133 = vst.msk [vmem:[#allocation3 + $0x80] sm:$0xf] %vm3100, %v3021
      %3134 = vst.msk [vmem:[#allocation3 + $0x84] sm:$0xf] %vm3100, %v3023
      %3135 = vst.msk [vmem:[#allocation3 + $0x88] sm:$0xf] %vm3100, %v3025
      %3136 = vst.msk [vmem:[#allocation3 + $0x8c] sm:$0xf] %vm3100, %v3027
      %3137 = vst.msk [vmem:[#allocation3 + $0x90] sm:$0xf] %vm3100, %v3029
      %3138 = vst.msk [vmem:[#allocation3 + $0x94] sm:$0xf] %vm3100, %v3031
      %3139 = vst.msk [vmem:[#allocation3 + $0x98] sm:$0xf] %vm3100, %v3033
      %3140 = vst.msk [vmem:[#allocation3 + $0x9c] sm:$0xf] %vm3100, %v3035
      %3141 = vst.msk [vmem:[#allocation3 + $0xa0] sm:$0xf] %vm3100, %v3037
      %3142 = vst.msk [vmem:[#allocation3 + $0xa4] sm:$0xf] %vm3100, %v3039
      %3143 = vst.msk [vmem:[#allocation3 + $0xa8] sm:$0xf] %vm3100, %v3041
      %3144 = vst.msk [vmem:[#allocation3 + $0xac] sm:$0xf] %vm3100, %v3043
      %3145 = vst.msk [vmem:[#allocation3 + $0xb0] sm:$0xf] %vm3100, %v3045
      %3146 = vst.msk [vmem:[#allocation3 + $0xb4] sm:$0xf] %vm3100, %v3047
      %3147 = vst.msk [vmem:[#allocation3 + $0xb8] sm:$0xf] %vm3100, %v3049
      %3148 = vst.msk [vmem:[#allocation3 + $0xbc] sm:$0xf] %vm3100, %v3051
      %v3149 = vrot.slane %v2737, 4
      %v3150 = vor.u32 %v3149, %v2541
      %v3151 = vrot.slane %v3150, 4
      %v3152 = vrot.slane %v2747, 5
      %v3153 = vsel %vm1674, %v3151, %v3152
      %v3154 = vrot.slane %v2744, 4
      %v3155 = vor.u32 %v3154, %v3152
      %v3156 = vrot.slane %v3155, 4
      %v3157 = vrot.slane %v2756, 5
      %v3158 = vsel %vm1674, %v3156, %v3157
      %v3159 = vrot.slane %v2753, 4
      %v3160 = vor.u32 %v3159, %v3157
      %v3161 = vrot.slane %v3160, 4
      %v3163 = vshll.u32 %v895, 16
      %v3165 = vrot.slane %v3163, 5
      %v3166 = vsel %vm1674, %v3161, %v3165
      %3167 = vrot.lane.b32.xlu0 %v1710, 32
      %v3168 = vpop.permute.xlu0 %3167
      %3169 = vrot.lane.b32.xlu0 %v1715, 32
      %v3170 = vpop.permute.xlu0 %3169
      %3171 = vrot.lane.b32.xlu0 %v1720, 32
      %v3172 = vpop.permute.xlu0 %3171
      %3173 = vrot.lane.b32.xlu0 %v1725, 32
      %v3174 = vpop.permute.xlu0 %3173
      %3175 = vrot.lane.b32.xlu0 %v1730, 32
      %v3176 = vpop.permute.xlu0 %3175
      %3177 = vrot.lane.b32.xlu0 %v1735, 32
      %v3178 = vpop.permute.xlu0 %3177
      %3179 = vrot.lane.b32.xlu0 %v1740, 32
      %v3180 = vpop.permute.xlu0 %3179
      %3181 = vrot.lane.b32.xlu0 %v1745, 32
      %v3182 = vpop.permute.xlu0 %3181
      %3183 = vrot.lane.b32.xlu0 %v1750, 32
      %v3184 = vpop.permute.xlu0 %3183
      %3185 = vrot.lane.b32.xlu0 %v1755, 32
      %v3186 = vpop.permute.xlu0 %3185
      %3187 = vrot.lane.b32.xlu0 %v1760, 32
      %v3188 = vpop.permute.xlu0 %3187
      %3189 = vrot.lane.b32.xlu0 %v1765, 32
      %v3190 = vpop.permute.xlu0 %3189
      %3191 = vrot.lane.b32.xlu0 %v1770, 32
      %v3192 = vpop.permute.xlu0 %3191
      %3193 = vrot.lane.b32.xlu0 %v1775, 32
      %v3194 = vpop.permute.xlu0 %3193
      %3195 = vrot.lane.b32.xlu0 %v1780, 32
      %v3196 = vpop.permute.xlu0 %3195
      %3197 = vrot.lane.b32.xlu0 %v1785, 32
      %v3198 = vpop.permute.xlu0 %3197
      %3199 = vrot.lane.b32.xlu0 %v1790, 32
      %v3200 = vpop.permute.xlu0 %3199
      %3201 = vrot.lane.b32.xlu0 %v1795, 32
      %v3202 = vpop.permute.xlu0 %3201
      %3203 = vrot.lane.b32.xlu0 %v1800, 32
      %v3204 = vpop.permute.xlu0 %3203
      %3205 = vrot.lane.b32.xlu0 %v1805, 32
      %v3206 = vpop.permute.xlu0 %3205
      %3207 = vrot.lane.b32.xlu0 %v1810, 32
      %v3208 = vpop.permute.xlu0 %3207
      %3209 = vrot.lane.b32.xlu0 %v1815, 32
      %v3210 = vpop.permute.xlu0 %3209
      %3211 = vrot.lane.b32.xlu0 %v1820, 32
      %v3212 = vpop.permute.xlu0 %3211
      %3213 = vrot.lane.b32.xlu0 %v1825, 32
      %v3214 = vpop.permute.xlu0 %3213
      %3215 = vrot.lane.b32.xlu0 %v1830, 32
      %v3216 = vpop.permute.xlu0 %3215
      %3217 = vrot.lane.b32.xlu0 %v1835, 32
      %v3218 = vpop.permute.xlu0 %3217
      %3219 = vrot.lane.b32.xlu0 %v1840, 32
      %v3220 = vpop.permute.xlu0 %3219
      %3221 = vrot.lane.b32.xlu0 %v1845, 32
      %v3222 = vpop.permute.xlu0 %3221
      %3223 = vrot.lane.b32.xlu0 %v1850, 32
      %v3224 = vpop.permute.xlu0 %3223
      %3225 = vrot.lane.b32.xlu0 %v1855, 32
      %v3226 = vpop.permute.xlu0 %3225
      %3227 = vrot.lane.b32.xlu0 %v1860, 32
      %v3228 = vpop.permute.xlu0 %3227
      %3229 = vrot.lane.b32.xlu0 %v1865, 32
      %v3230 = vpop.permute.xlu0 %3229
      %3231 = vrot.lane.b32.xlu0 %v1870, 32
      %v3232 = vpop.permute.xlu0 %3231
      %3233 = vrot.lane.b32.xlu0 %v1875, 32
      %v3234 = vpop.permute.xlu0 %3233
      %3235 = vrot.lane.b32.xlu0 %v1880, 32
      %v3236 = vpop.permute.xlu0 %3235
      %3237 = vrot.lane.b32.xlu0 %v1885, 32
      %v3238 = vpop.permute.xlu0 %3237
      %3239 = vrot.lane.b32.xlu0 %v1890, 32
      %v3240 = vpop.permute.xlu0 %3239
      %3241 = vrot.lane.b32.xlu0 %v1895, 32
      %v3242 = vpop.permute.xlu0 %3241
      %3243 = vrot.lane.b32.xlu0 %v1900, 32
      %v3244 = vpop.permute.xlu0 %3243
      %3245 = vrot.lane.b32.xlu0 %v1905, 32
      %v3246 = vpop.permute.xlu0 %3245
      %3247 = vrot.lane.b32.xlu0 %v1910, 32
      %v3248 = vpop.permute.xlu0 %3247
      %3249 = vrot.lane.b32.xlu0 %v1918, 32
      %v3250 = vpop.permute.xlu0 %3249
      %3251 = vrot.lane.b32.xlu0 %v2529, 32
      %v3252 = vpop.permute.xlu0 %3251
      %3253 = vrot.lane.b32.xlu0 %v2534, 32
      %v3254 = vpop.permute.xlu0 %3253
      %3255 = vrot.lane.b32.xlu0 %v2542, 32
      %v3256 = vpop.permute.xlu0 %3255
      %3257 = vrot.lane.b32.xlu0 %v3153, 32
      %v3258 = vpop.permute.xlu0 %3257
      %3259 = vrot.lane.b32.xlu0 %v3158, 32
      %v3260 = vpop.permute.xlu0 %3259
      %3261 = vrot.lane.b32.xlu0 %v3166, 32
      %v3262 = vpop.permute.xlu0 %3261
      %vm3311 = vcmask 290048
      %3312 = vst.msk [vmem:[#allocation3] sm:$0xf] %vm3311, %v3168
      %3313 = vst.msk [vmem:[#allocation3 + $0x4] sm:$0xf] %vm3311, %v3170
      %3314 = vst.msk [vmem:[#allocation3 + $0x8] sm:$0xf] %vm3311, %v3172
      %3315 = vst.msk [vmem:[#allocation3 + $0xc] sm:$0xf] %vm3311, %v3174
      %3316 = vst.msk [vmem:[#allocation3 + $0x10] sm:$0xf] %vm3311, %v3176
      %3317 = vst.msk [vmem:[#allocation3 + $0x14] sm:$0xf] %vm3311, %v3178
      %3318 = vst.msk [vmem:[#allocation3 + $0x18] sm:$0xf] %vm3311, %v3180
      %3319 = vst.msk [vmem:[#allocation3 + $0x1c] sm:$0xf] %vm3311, %v3182
      %3320 = vst.msk [vmem:[#allocation3 + $0x20] sm:$0xf] %vm3311, %v3184
      %3321 = vst.msk [vmem:[#allocation3 + $0x24] sm:$0xf] %vm3311, %v3186
      %3322 = vst.msk [vmem:[#allocation3 + $0x28] sm:$0xf] %vm3311, %v3188
      %3323 = vst.msk [vmem:[#allocation3 + $0x2c] sm:$0xf] %vm3311, %v3190
      %3324 = vst.msk [vmem:[#allocation3 + $0x30] sm:$0xf] %vm3311, %v3192
      %3325 = vst.msk [vmem:[#allocation3 + $0x34] sm:$0xf] %vm3311, %v3194
      %3326 = vst.msk [vmem:[#allocation3 + $0x38] sm:$0xf] %vm3311, %v3196
      %3327 = vst.msk [vmem:[#allocation3 + $0x3c] sm:$0xf] %vm3311, %v3198
      %3328 = vst.msk [vmem:[#allocation3 + $0x40] sm:$0xf] %vm3311, %v3200
      %3329 = vst.msk [vmem:[#allocation3 + $0x44] sm:$0xf] %vm3311, %v3202
      %3330 = vst.msk [vmem:[#allocation3 + $0x48] sm:$0xf] %vm3311, %v3204
      %3331 = vst.msk [vmem:[#allocation3 + $0x4c] sm:$0xf] %vm3311, %v3206
      %3332 = vst.msk [vmem:[#allocation3 + $0x50] sm:$0xf] %vm3311, %v3208
      %3333 = vst.msk [vmem:[#allocation3 + $0x54] sm:$0xf] %vm3311, %v3210
      %3334 = vst.msk [vmem:[#allocation3 + $0x58] sm:$0xf] %vm3311, %v3212
      %3335 = vst.msk [vmem:[#allocation3 + $0x5c] sm:$0xf] %vm3311, %v3214
      %3336 = vst.msk [vmem:[#allocation3 + $0x60] sm:$0xf] %vm3311, %v3216
      %3337 = vst.msk [vmem:[#allocation3 + $0x64] sm:$0xf] %vm3311, %v3218
      %3338 = vst.msk [vmem:[#allocation3 + $0x68] sm:$0xf] %vm3311, %v3220
      %3339 = vst.msk [vmem:[#allocation3 + $0x6c] sm:$0xf] %vm3311, %v3222
      %3340 = vst.msk [vmem:[#allocation3 + $0x70] sm:$0xf] %vm3311, %v3224
      %3341 = vst.msk [vmem:[#allocation3 + $0x74] sm:$0xf] %vm3311, %v3226
      %3342 = vst.msk [vmem:[#allocation3 + $0x78] sm:$0xf] %vm3311, %v3228
      %3343 = vst.msk [vmem:[#allocation3 + $0x7c] sm:$0xf] %vm3311, %v3230
      %3344 = vst.msk [vmem:[#allocation3 + $0x80] sm:$0xf] %vm3311, %v3232
      %3345 = vst.msk [vmem:[#allocation3 + $0x84] sm:$0xf] %vm3311, %v3234
      %3346 = vst.msk [vmem:[#allocation3 + $0x88] sm:$0xf] %vm3311, %v3236
      %3347 = vst.msk [vmem:[#allocation3 + $0x8c] sm:$0xf] %vm3311, %v3238
      %3348 = vst.msk [vmem:[#allocation3 + $0x90] sm:$0xf] %vm3311, %v3240
      %3349 = vst.msk [vmem:[#allocation3 + $0x94] sm:$0xf] %vm3311, %v3242
      %3350 = vst.msk [vmem:[#allocation3 + $0x98] sm:$0xf] %vm3311, %v3244
      %3351 = vst.msk [vmem:[#allocation3 + $0x9c] sm:$0xf] %vm3311, %v3246
      %3352 = vst.msk [vmem:[#allocation3 + $0xa0] sm:$0xf] %vm3311, %v3248
      %3353 = vst.msk [vmem:[#allocation3 + $0xa4] sm:$0xf] %vm3311, %v3250
      %3354 = vst.msk [vmem:[#allocation3 + $0xa8] sm:$0xf] %vm3311, %v3252
      %3355 = vst.msk [vmem:[#allocation3 + $0xac] sm:$0xf] %vm3311, %v3254
      %3356 = vst.msk [vmem:[#allocation3 + $0xb0] sm:$0xf] %vm3311, %v3256
      %3357 = vst.msk [vmem:[#allocation3 + $0xb4] sm:$0xf] %vm3311, %v3258
      %3358 = vst.msk [vmem:[#allocation3 + $0xb8] sm:$0xf] %vm3311, %v3260
      %3359 = vst.msk [vmem:[#allocation3 + $0xbc] sm:$0xf] %vm3311, %v3262
      %v3360 = vld [vmem:[#allocation3] sm:$0xf]
      %v3361 = vld [vmem:[#allocation3 + $0x4] sm:$0xf]
      %v3362 = vld [vmem:[#allocation3 + $0x8] sm:$0xf]
      %v3363 = vld [vmem:[#allocation3 + $0xc] sm:$0xf]
      %v3364 = vld [vmem:[#allocation3 + $0x10] sm:$0xf]
      %v3365 = vld [vmem:[#allocation3 + $0x14] sm:$0xf]
      %v3366 = vld [vmem:[#allocation3 + $0x18] sm:$0xf]
      %v3367 = vld [vmem:[#allocation3 + $0x1c] sm:$0xf]
      %v3368 = vld [vmem:[#allocation3 + $0x20] sm:$0xf]
      %v3369 = vld [vmem:[#allocation3 + $0x24] sm:$0xf]
      %v3370 = vld [vmem:[#allocation3 + $0x28] sm:$0xf]
      %v3371 = vld [vmem:[#allocation3 + $0x2c] sm:$0xf]
      %v3372 = vld [vmem:[#allocation3 + $0x30] sm:$0xf]
      %v3373 = vld [vmem:[#allocation3 + $0x34] sm:$0xf]
      %v3374 = vld [vmem:[#allocation3 + $0x38] sm:$0xf]
      %v3375 = vld [vmem:[#allocation3 + $0x3c] sm:$0xf]
      %v3376 = vld [vmem:[#allocation3 + $0x40] sm:$0xf]
      %v3377 = vld [vmem:[#allocation3 + $0x44] sm:$0xf]
      %v3378 = vld [vmem:[#allocation3 + $0x48] sm:$0xf]
      %v3379 = vld [vmem:[#allocation3 + $0x4c] sm:$0xf]
      %v3380 = vld [vmem:[#allocation3 + $0x50] sm:$0xf]
      %v3381 = vld [vmem:[#allocation3 + $0x54] sm:$0xf]
      %v3382 = vld [vmem:[#allocation3 + $0x58] sm:$0xf]
      %v3383 = vld [vmem:[#allocation3 + $0x5c] sm:$0xf]
      %v3384 = vld [vmem:[#allocation3 + $0x60] sm:$0xf]
      %v3385 = vld [vmem:[#allocation3 + $0x64] sm:$0xf]
      %v3386 = vld [vmem:[#allocation3 + $0x68] sm:$0xf]
      %v3387 = vld [vmem:[#allocation3 + $0x6c] sm:$0xf]
      %v3388 = vld [vmem:[#allocation3 + $0x70] sm:$0xf]
      %v3389 = vld [vmem:[#allocation3 + $0x74] sm:$0xf]
      %v3390 = vld [vmem:[#allocation3 + $0x78] sm:$0xf]
      %v3391 = vld [vmem:[#allocation3 + $0x7c] sm:$0xf]
      %v3392 = vld [vmem:[#allocation3 + $0x80] sm:$0xf]
      %v3393 = vld [vmem:[#allocation3 + $0x84] sm:$0xf]
      %v3394 = vld [vmem:[#allocation3 + $0x88] sm:$0xf]
      %v3395 = vld [vmem:[#allocation3 + $0x8c] sm:$0xf]
      %v3396 = vld [vmem:[#allocation3 + $0x90] sm:$0xf]
      %v3397 = vld [vmem:[#allocation3 + $0x94] sm:$0xf]
      %v3398 = vld [vmem:[#allocation3 + $0x98] sm:$0xf]
      %v3399 = vld [vmem:[#allocation3 + $0x9c] sm:$0xf]
      %v3400 = vld [vmem:[#allocation3 + $0xa0] sm:$0xf]
      %v3401 = vld [vmem:[#allocation3 + $0xa4] sm:$0xf]
      %v3402 = vld [vmem:[#allocation3 + $0xa8] sm:$0xf]
      %v3403 = vld [vmem:[#allocation3 + $0xac] sm:$0xf]
      %v3404 = vld [vmem:[#allocation3 + $0xb0] sm:$0xf]
      %v3405 = vld [vmem:[#allocation3 + $0xb4] sm:$0xf]
      %v3406 = vld [vmem:[#allocation3 + $0xb8] sm:$0xf]
      %v3407 = vld [vmem:[#allocation3 + $0xbc] sm:$0xf]
      %v3408 = vld [vmem:[%s2] sm:$0xf]
      %v3409 = vld [vmem:[%s2 + $0x4] sm:$0xf]
      %v3410 = vld [vmem:[%s2 + $0x8] sm:$0xf]
      %v3411 = vld [vmem:[%s2 + $0xc] sm:$0xf]
      %v3412 = vld [vmem:[%s2 + $0x10] sm:$0x3]
      %v3413 = vld [vmem:[%s5] sm:$0x1]
      %v3415 = vlaneseq
      %v3416 = vshrl.u32 %v3415, 7
      %v3417 = vsub.s32 0, %v3416
      %v3418 = vrot.slane %v3413, %v3417
      %v3468 = vunpack.c.l.b16 %v3360
      %v3469 = vunpack.c.l.b16 %v3361
      %v3470 = vunpack.c.l.b16 %v3362
      %v3471 = vunpack.c.l.b16 %v3363
      %v3472 = vunpack.c.l.b16 %v3364
      %v3473 = vunpack.c.l.b16 %v3365
      %v3474 = vunpack.c.l.b16 %v3366
      %v3475 = vunpack.c.l.b16 %v3367
      %v3476 = vunpack.c.l.b16 %v3368
      %v3477 = vunpack.c.l.b16 %v3369
      %v3478 = vunpack.c.l.b16 %v3370
      %v3479 = vunpack.c.l.b16 %v3371
      %v3480 = vunpack.c.l.b16 %v3372
      %v3481 = vunpack.c.l.b16 %v3373
      %v3482 = vunpack.c.l.b16 %v3374
      %v3483 = vunpack.c.l.b16 %v3375
      %v3484 = vunpack.c.l.b16 %v3376
      %v3485 = vunpack.c.l.b16 %v3377
      %v3486 = vunpack.c.l.b16 %v3378
      %v3487 = vunpack.c.l.b16 %v3379
      %v3488 = vunpack.c.l.b16 %v3380
      %v3489 = vunpack.c.l.b16 %v3381
      %v3490 = vunpack.c.l.b16 %v3382
      %v3491 = vunpack.c.l.b16 %v3383
      %v3492 = vunpack.c.l.b16 %v3384
      %v3493 = vunpack.c.l.b16 %v3385
      %v3494 = vunpack.c.l.b16 %v3386
      %v3495 = vunpack.c.l.b16 %v3387
      %v3496 = vunpack.c.l.b16 %v3388
      %v3497 = vunpack.c.l.b16 %v3389
      %v3498 = vunpack.c.l.b16 %v3390
      %v3499 = vunpack.c.l.b16 %v3391
      %v3500 = vunpack.c.l.b16 %v3392
      %v3501 = vunpack.c.l.b16 %v3393
      %v3502 = vunpack.c.l.b16 %v3394
      %v3503 = vunpack.c.l.b16 %v3395
      %v3504 = vunpack.c.l.b16 %v3396
      %v3505 = vunpack.c.l.b16 %v3397
      %v3506 = vunpack.c.l.b16 %v3398
      %v3507 = vunpack.c.l.b16 %v3399
      %v3508 = vunpack.c.l.b16 %v3400
      %v3509 = vunpack.c.l.b16 %v3401
      %v3510 = vunpack.c.l.b16 %v3402
      %v3511 = vunpack.c.l.b16 %v3403
      %v3512 = vunpack.c.l.b16 %v3404
      %v3513 = vunpack.c.l.b16 %v3405
      %v3514 = vunpack.c.l.b16 %v3406
      %v3515 = vunpack.c.l.b16 %v3407
      %v3516 = vpack.c.b16 %v3469, %v3468
      %v3517 = vpack.c.b16 %v3471, %v3470
      %v3518 = vpack.c.b16 %v3473, %v3472
      %v3519 = vpack.c.b16 %v3475, %v3474
      %v3520 = vpack.c.b16 %v3477, %v3476
      %v3521 = vpack.c.b16 %v3479, %v3478
      %v3522 = vpack.c.b16 %v3481, %v3480
      %v3523 = vpack.c.b16 %v3483, %v3482
      %v3524 = vpack.c.b16 %v3485, %v3484
      %v3525 = vpack.c.b16 %v3487, %v3486
      %v3526 = vpack.c.b16 %v3489, %v3488
      %v3527 = vpack.c.b16 %v3491, %v3490
      %v3528 = vpack.c.b16 %v3493, %v3492
      %v3529 = vpack.c.b16 %v3495, %v3494
      %v3530 = vpack.c.b16 %v3497, %v3496
      %v3531 = vpack.c.b16 %v3499, %v3498
      %v3532 = vpack.c.b16 %v3501, %v3500
      %v3533 = vpack.c.b16 %v3503, %v3502
      %v3534 = vpack.c.b16 %v3505, %v3504
      %v3535 = vpack.c.b16 %v3507, %v3506
      %v3536 = vpack.c.b16 %v3509, %v3508
      %v3537 = vpack.c.b16 %v3511, %v3510
      %v3538 = vpack.c.b16 %v3513, %v3512
      %v3539 = vpack.c.b16 %v3515, %v3514
      %v3545 = vunpack.c.l.b16 %v3408
      %v3546 = vunpack.c.l.b16 %v3409
      %v3547 = vunpack.c.l.b16 %v3410
      %v3548 = vunpack.c.l.b16 %v3411
      %v3549 = vunpack.c.l.b16 %v3412
      %v3550 = vpack.c.b16 %v3546, %v3545
      %v3551 = vpack.c.b16 %v3548, %v3547
      %v3552 = vpack.c.b16 %v3549, %v3549
      %vm3555 = vcmask 293888
      %v3557 = vsel %vm3555, %v3516, 0
      %v3560 = vsel %vm3555, %v3517, 0
      %v3563 = vsel %vm3555, %v3518, 0
      %v3566 = vsel %vm3555, %v3519, 0
      %v3569 = vsel %vm3555, %v3520, 0
      %v3572 = vsel %vm3555, %v3521, 0
      %v3575 = vsel %vm3555, %v3522, 0
      %v3578 = vsel %vm3555, %v3523, 0
      %v3581 = vsel %vm3555, %v3524, 0
      %v3584 = vsel %vm3555, %v3525, 0
      %v3587 = vsel %vm3555, %v3526, 0
      %v3590 = vsel %vm3555, %v3527, 0
      %v3593 = vsel %vm3555, %v3528, 0
      %v3596 = vsel %vm3555, %v3529, 0
      %v3599 = vsel %vm3555, %v3530, 0
      %v3602 = vsel %vm3555, %v3531, 0
      %v3605 = vsel %vm3555, %v3532, 0
      %v3608 = vsel %vm3555, %v3533, 0
      %v3611 = vsel %vm3555, %v3534, 0
      %v3614 = vsel %vm3555, %v3535, 0
      %v3617 = vsel %vm3555, %v3536, 0
      %v3620 = vsel %vm3555, %v3537, 0
      %v3623 = vsel %vm3555, %v3538, 0
      %v3626 = vsel %vm3555, %v3539, 0
      %vm3628 = vcmask 1041408
      %v3630 = vsel %vm3628, %v3552, 0
      %3632 = vmatprep.subr.bf16.mxu0 0
      %3633 = vmatpush1.bf16.msra.mxu0 0
      %3634 = vmatprep.subr.bf16.mxu0 0
      %3635 = vmatpush1.bf16.msra.mxu0 0
      %3636 = vmatprep.subr.bf16.mxu0 0
      %3637 = vmatpush1.bf16.msra.mxu0 0
      %3638 = vmatprep.subr.bf16.mxu0 0
      %3639 = vmatpush1.bf16.msra.mxu0 0
      %3640 = vmatprep.subr.bf16.mxu0 0
      %3641 = vmatpush1.bf16.msra.mxu0 0
      %3642 = vmatprep.subr.bf16.mxu0 0
      %3643 = vmatpush1.bf16.msra.mxu0 %v3630
      %3644 = vmatprep.subr.bf16.mxu0 0
      %3645 = vmatpush1.bf16.msra.mxu0 %v3551
      %3646 = vmatprep.subr.bf16.mxu0 0
      %3647 = vmatpush1.bf16.msra.mxu0 %v3550
      %3648 = vmatprep.subr.bf16.mxu0 0
      %3649 = vmatpush2.bf16.msra.mxu0 0
      %3650 = vmatprep.subr.bf16.mxu0 0
      %3651 = vmatpush2.bf16.msra.mxu0 0
      %3652 = vmatprep.subr.bf16.mxu0 0
      %3653 = vmatpush2.bf16.msra.mxu0 0
      %3654 = vmatprep.subr.bf16.mxu0 0
      %3655 = vmatpush2.bf16.msra.mxu0 0
      %3656 = vmatprep.subr.bf16.mxu0 0
      %3657 = vmatpush2.bf16.msra.mxu0 0
      %3658 = vmatprep.subr.bf16.mxu0 0
      %3659 = vmatpush2.bf16.msra.mxu0 0
      %3660 = vmatprep.subr.bf16.mxu0 0
      %3661 = vmatpush2.bf16.msra.mxu0 0
      %3662 = vmatprep.subr.bf16.mxu0 0
      %3663 = vmatpush2.bf16.msra.mxu0 0
      %3664 = vmatprep.mubr.bf16.mxu0 0
      %3665 = vmatmul.mubr.bf16.gmra.mxu0 %v3557
      %v3666 = vpop.f32.mrf.mxu0
      %v3667 = vadd.f32 %v3418, %v3666
      %v3668 = vpop.f32.mrf.mxu0
      %v3669 = vpop.f32.mrf.mxu0
      %v3670 = vadd.f32 %v3418, %v3669
      %v3671 = vpop.f32.mrf.mxu0
      %3672 = vmatprep.mubr.bf16.mxu0 0
      %3673 = vmatmul.mubr.bf16.gmra.mxu0 %v3560
      %v3674 = vpop.f32.mrf.mxu0
      %v3675 = vadd.f32 %v3418, %v3674
      %v3676 = vpop.f32.mrf.mxu0
      %v3677 = vpop.f32.mrf.mxu0
      %v3678 = vadd.f32 %v3418, %v3677
      %v3679 = vpop.f32.mrf.mxu0
      %3680 = vmatprep.mubr.bf16.mxu0 0
      %3681 = vmatmul.mubr.bf16.gmra.mxu0 %v3563
      %v3682 = vpop.f32.mrf.mxu0
      %v3683 = vadd.f32 %v3418, %v3682
      %v3684 = vpop.f32.mrf.mxu0
      %v3685 = vpop.f32.mrf.mxu0
      %v3686 = vadd.f32 %v3418, %v3685
      %v3687 = vpop.f32.mrf.mxu0
      %3688 = vmatprep.mubr.bf16.mxu0 0
      %3689 = vmatmul.mubr.bf16.gmra.mxu0 %v3566
      %v3690 = vpop.f32.mrf.mxu0
      %v3691 = vadd.f32 %v3418, %v3690
      %v3692 = vpop.f32.mrf.mxu0
      %v3693 = vpop.f32.mrf.mxu0
      %v3694 = vadd.f32 %v3418, %v3693
      %v3695 = vpop.f32.mrf.mxu0
      %3696 = vmatprep.mubr.bf16.mxu0 0
      %3697 = vmatmul.mubr.bf16.gmra.mxu0 %v3569
      %v3698 = vpop.f32.mrf.mxu0
      %v3699 = vadd.f32 %v3418, %v3698
      %v3700 = vpop.f32.mrf.mxu0
      %v3701 = vpop.f32.mrf.mxu0
      %v3702 = vadd.f32 %v3418, %v3701
      %v3703 = vpop.f32.mrf.mxu0
      %3704 = vmatprep.mubr.bf16.mxu0 0
      %3705 = vmatmul.mubr.bf16.gmra.mxu0 %v3572
      %v3706 = vpop.f32.mrf.mxu0
      %v3707 = vadd.f32 %v3418, %v3706
      %v3708 = vpop.f32.mrf.mxu0
      %v3709 = vpop.f32.mrf.mxu0
      %v3710 = vadd.f32 %v3418, %v3709
      %v3711 = vpop.f32.mrf.mxu0
      %3712 = vmatprep.mubr.bf16.mxu0 0
      %3713 = vmatmul.mubr.bf16.gmra.mxu0 %v3575
      %v3714 = vpop.f32.mrf.mxu0
      %v3715 = vadd.f32 %v3418, %v3714
      %v3716 = vpop.f32.mrf.mxu0
      %v3717 = vpop.f32.mrf.mxu0
      %v3718 = vadd.f32 %v3418, %v3717
      %v3719 = vpop.f32.mrf.mxu0
      %3720 = vmatprep.mubr.bf16.mxu0 0
      %3721 = vmatmul.mubr.bf16.gmra.mxu0 %v3578
      %v3722 = vpop.f32.mrf.mxu0
      %v3723 = vadd.f32 %v3418, %v3722
      %v3724 = vpop.f32.mrf.mxu0
      %v3725 = vpop.f32.mrf.mxu0
      %v3726 = vadd.f32 %v3418, %v3725
      %v3727 = vpop.f32.mrf.mxu0
      %3728 = vmatprep.mubr.bf16.mxu0 0
      %3729 = vmatmul.mubr.bf16.gmra.mxu0 %v3581
      %v3730 = vpop.f32.mrf.mxu0
      %v3731 = vadd.f32 %v3418, %v3730
      %v3732 = vpop.f32.mrf.mxu0
      %v3733 = vpop.f32.mrf.mxu0
      %v3734 = vadd.f32 %v3418, %v3733
      %v3735 = vpop.f32.mrf.mxu0
      %3736 = vmatprep.mubr.bf16.mxu0 0
      %3737 = vmatmul.mubr.bf16.gmra.mxu0 %v3584
      %v3738 = vpop.f32.mrf.mxu0
      %v3739 = vadd.f32 %v3418, %v3738
      %v3740 = vpop.f32.mrf.mxu0
      %v3741 = vpop.f32.mrf.mxu0
      %v3742 = vadd.f32 %v3418, %v3741
      %v3743 = vpop.f32.mrf.mxu0
      %3744 = vmatprep.mubr.bf16.mxu0 0
      %3745 = vmatmul.mubr.bf16.gmra.mxu0 %v3587
      %v3746 = vpop.f32.mrf.mxu0
      %v3747 = vadd.f32 %v3418, %v3746
      %v3748 = vpop.f32.mrf.mxu0
      %v3749 = vpop.f32.mrf.mxu0
      %v3750 = vadd.f32 %v3418, %v3749
      %v3751 = vpop.f32.mrf.mxu0
      %3752 = vmatprep.mubr.bf16.mxu0 0
      %3753 = vmatmul.mubr.bf16.gmra.mxu0 %v3590
      %v3754 = vpop.f32.mrf.mxu0
      %v3755 = vadd.f32 %v3418, %v3754
      %v3756 = vpop.f32.mrf.mxu0
      %v3757 = vpop.f32.mrf.mxu0
      %v3758 = vadd.f32 %v3418, %v3757
      %v3759 = vpop.f32.mrf.mxu0
      %3760 = vmatprep.mubr.bf16.mxu0 0
      %3761 = vmatmul.mubr.bf16.gmra.mxu0 %v3593
      %v3762 = vpop.f32.mrf.mxu0
      %v3763 = vadd.f32 %v3418, %v3762
      %v3764 = vpop.f32.mrf.mxu0
      %v3765 = vpop.f32.mrf.mxu0
      %v3766 = vadd.f32 %v3418, %v3765
      %v3767 = vpop.f32.mrf.mxu0
      %3768 = vmatprep.mubr.bf16.mxu0 0
      %3769 = vmatmul.mubr.bf16.gmra.mxu0 %v3596
      %v3770 = vpop.f32.mrf.mxu0
      %v3771 = vadd.f32 %v3418, %v3770
      %v3772 = vpop.f32.mrf.mxu0
      %v3773 = vpop.f32.mrf.mxu0
      %v3774 = vadd.f32 %v3418, %v3773
      %v3775 = vpop.f32.mrf.mxu0
      %3776 = vmatprep.mubr.bf16.mxu0 0
      %3777 = vmatmul.mubr.bf16.gmra.mxu0 %v3599
      %v3778 = vpop.f32.mrf.mxu0
      %v3779 = vadd.f32 %v3418, %v3778
      %v3780 = vpop.f32.mrf.mxu0
      %v3781 = vpop.f32.mrf.mxu0
      %v3782 = vadd.f32 %v3418, %v3781
      %v3783 = vpop.f32.mrf.mxu0
      %3784 = vmatprep.mubr.bf16.mxu0 0
      %3785 = vmatmul.mubr.bf16.gmra.mxu0 %v3602
      %v3786 = vpop.f32.mrf.mxu0
      %v3787 = vadd.f32 %v3418, %v3786
      %v3788 = vpop.f32.mrf.mxu0
      %v3789 = vpop.f32.mrf.mxu0
      %v3790 = vadd.f32 %v3418, %v3789
      %v3791 = vpop.f32.mrf.mxu0
      %3792 = vmatprep.mubr.bf16.mxu0 0
      %3793 = vmatmul.mubr.bf16.gmra.mxu0 %v3605
      %v3794 = vpop.f32.mrf.mxu0
      %v3795 = vadd.f32 %v3418, %v3794
      %v3796 = vpop.f32.mrf.mxu0
      %v3797 = vpop.f32.mrf.mxu0
      %v3798 = vadd.f32 %v3418, %v3797
      %v3799 = vpop.f32.mrf.mxu0
      %3800 = vmatprep.mubr.bf16.mxu0 0
      %3801 = vmatmul.mubr.bf16.gmra.mxu0 %v3608
      %v3802 = vpop.f32.mrf.mxu0
      %v3803 = vadd.f32 %v3418, %v3802
      %v3804 = vpop.f32.mrf.mxu0
      %v3805 = vpop.f32.mrf.mxu0
      %v3806 = vadd.f32 %v3418, %v3805
      %v3807 = vpop.f32.mrf.mxu0
      %3808 = vmatprep.mubr.bf16.mxu0 0
      %3809 = vmatmul.mubr.bf16.gmra.mxu0 %v3611
      %v3810 = vpop.f32.mrf.mxu0
      %v3811 = vadd.f32 %v3418, %v3810
      %v3812 = vpop.f32.mrf.mxu0
      %v3813 = vpop.f32.mrf.mxu0
      %v3814 = vadd.f32 %v3418, %v3813
      %v3815 = vpop.f32.mrf.mxu0
      %3816 = vmatprep.mubr.bf16.mxu0 0
      %3817 = vmatmul.mubr.bf16.gmra.mxu0 %v3614
      %v3818 = vpop.f32.mrf.mxu0
      %v3819 = vadd.f32 %v3418, %v3818
      %v3820 = vpop.f32.mrf.mxu0
      %v3821 = vpop.f32.mrf.mxu0
      %v3822 = vadd.f32 %v3418, %v3821
      %v3823 = vpop.f32.mrf.mxu0
      %3824 = vmatprep.mubr.bf16.mxu0 0
      %3825 = vmatmul.mubr.bf16.gmra.mxu0 %v3617
      %v3826 = vpop.f32.mrf.mxu0
      %v3827 = vadd.f32 %v3418, %v3826
      %v3828 = vpop.f32.mrf.mxu0
      %v3829 = vpop.f32.mrf.mxu0
      %v3830 = vadd.f32 %v3418, %v3829
      %v3831 = vpop.f32.mrf.mxu0
      %3832 = vmatprep.mubr.bf16.mxu0 0
      %3833 = vmatmul.mubr.bf16.gmra.mxu0 %v3620
      %v3834 = vpop.f32.mrf.mxu0
      %v3835 = vadd.f32 %v3418, %v3834
      %v3836 = vpop.f32.mrf.mxu0
      %v3837 = vpop.f32.mrf.mxu0
      %v3838 = vadd.f32 %v3418, %v3837
      %v3839 = vpop.f32.mrf.mxu0
      %3840 = vmatprep.mubr.bf16.mxu0 0
      %3841 = vmatmul.mubr.bf16.gmra.mxu0 %v3623
      %v3842 = vpop.f32.mrf.mxu0
      %v3843 = vadd.f32 %v3418, %v3842
      %v3844 = vpop.f32.mrf.mxu0
      %v3845 = vpop.f32.mrf.mxu0
      %v3846 = vadd.f32 %v3418, %v3845
      %v3847 = vpop.f32.mrf.mxu0
      %3848 = vmatprep.mubr.bf16.mxu0 0
      %3849 = vmatmul.mubr.bf16.gmra.mxu0 %v3626
      %v3850 = vpop.f32.mrf.mxu0
      %v3851 = vadd.f32 %v3418, %v3850
      %v3852 = vpop.f32.mrf.mxu0
      %v3853 = vpop.f32.mrf.mxu0
      %v3854 = vadd.f32 %v3418, %v3853
      %v3855 = vpop.f32.mrf.mxu0
      %3856 = vdwg.mxu0
      %v3857 = vmax.f32 %v3667, 0.0
      %v3858 = vmax.f32 %v3670, 0.0
      %v3859 = vmax.f32 %v3675, 0.0
      %v3860 = vmax.f32 %v3678, 0.0
      %v3861 = vmax.f32 %v3683, 0.0
      %v3862 = vmax.f32 %v3686, 0.0
      %v3863 = vmax.f32 %v3691, 0.0
      %v3864 = vmax.f32 %v3694, 0.0
      %v3865 = vmax.f32 %v3699, 0.0
      %v3866 = vmax.f32 %v3702, 0.0
      %v3867 = vmax.f32 %v3707, 0.0
      %v3868 = vmax.f32 %v3710, 0.0
      %v3869 = vmax.f32 %v3715, 0.0
      %v3870 = vmax.f32 %v3718, 0.0
      %v3871 = vmax.f32 %v3723, 0.0
      %v3872 = vmax.f32 %v3726, 0.0
      %v3873 = vmax.f32 %v3731, 0.0
      %v3874 = vmax.f32 %v3734, 0.0
      %v3875 = vmax.f32 %v3739, 0.0
      %v3876 = vmax.f32 %v3742, 0.0
      %v3877 = vmax.f32 %v3747, 0.0
      %v3878 = vmax.f32 %v3750, 0.0
      %v3879 = vmax.f32 %v3755, 0.0
      %v3880 = vmax.f32 %v3758, 0.0
      %v3881 = vmax.f32 %v3763, 0.0
      %v3882 = vmax.f32 %v3766, 0.0
      %v3883 = vmax.f32 %v3771, 0.0
      %v3884 = vmax.f32 %v3774, 0.0
      %v3885 = vmax.f32 %v3779, 0.0
      %v3886 = vmax.f32 %v3782, 0.0
      %v3887 = vmax.f32 %v3787, 0.0
      %v3888 = vmax.f32 %v3790, 0.0
      %v3889 = vmax.f32 %v3795, 0.0
      %v3890 = vmax.f32 %v3798, 0.0
      %v3891 = vmax.f32 %v3803, 0.0
      %v3892 = vmax.f32 %v3806, 0.0
      %v3893 = vmax.f32 %v3811, 0.0
      %v3894 = vmax.f32 %v3814, 0.0
      %v3895 = vmax.f32 %v3819, 0.0
      %v3896 = vmax.f32 %v3822, 0.0
      %v3897 = vmax.f32 %v3827, 0.0
      %v3898 = vmax.f32 %v3830, 0.0
      %v3899 = vmax.f32 %v3835, 0.0
      %v3900 = vmax.f32 %v3838, 0.0
      %v3901 = vmax.f32 %v3843, 0.0
      %v3902 = vmax.f32 %v3846, 0.0
      %v3903 = vmax.f32 %v3851, 0.0
      %v3904 = vmax.f32 %v3854, 0.0
      %v3905 = vpack.c.bf16 %v3858, %v3857
      %v3906 = vpack.c.bf16 %v3860, %v3859
      %v3907 = vpack.c.bf16 %v3862, %v3861
      %v3908 = vpack.c.bf16 %v3864, %v3863
      %v3909 = vpack.c.bf16 %v3866, %v3865
      %v3910 = vpack.c.bf16 %v3868, %v3867
      %v3911 = vpack.c.bf16 %v3870, %v3869
      %v3912 = vpack.c.bf16 %v3872, %v3871
      %v3913 = vpack.c.bf16 %v3874, %v3873
      %v3914 = vpack.c.bf16 %v3876, %v3875
      %v3915 = vpack.c.bf16 %v3878, %v3877
      %v3916 = vpack.c.bf16 %v3880, %v3879
      %v3917 = vpack.c.bf16 %v3882, %v3881
      %v3918 = vpack.c.bf16 %v3884, %v3883
      %v3919 = vpack.c.bf16 %v3886, %v3885
      %v3920 = vpack.c.bf16 %v3888, %v3887
      %v3921 = vpack.c.bf16 %v3890, %v3889
      %v3922 = vpack.c.bf16 %v3892, %v3891
      %v3923 = vpack.c.bf16 %v3894, %v3893
      %v3924 = vpack.c.bf16 %v3896, %v3895
      %v3925 = vpack.c.bf16 %v3898, %v3897
      %v3926 = vpack.c.bf16 %v3900, %v3899
      %v3927 = vpack.c.bf16 %v3902, %v3901
      %v3928 = vpack.c.bf16 %v3904, %v3903
      %v3953 = vunpack.c.l.b16 %v3905
      %v3954 = vunpack.c.h.b16 %v3905
      %v3955 = vunpack.c.h.b16 %v3906
      %v3956 = vunpack.c.l.b16 %v3907
      %v3957 = vunpack.c.l.b16 %v3908
      %v3958 = vunpack.c.h.b16 %v3908
      %v3959 = vunpack.c.h.b16 %v3909
      %v3960 = vunpack.c.l.b16 %v3910
      %v3961 = vunpack.c.l.b16 %v3911
      %v3962 = vunpack.c.h.b16 %v3911
      %v3963 = vunpack.c.h.b16 %v3912
      %v3964 = vunpack.c.l.b16 %v3913
      %v3965 = vunpack.c.l.b16 %v3914
      %v3966 = vunpack.c.h.b16 %v3914
      %v3967 = vunpack.c.h.b16 %v3915
      %v3968 = vunpack.c.l.b16 %v3916
      %v3969 = vunpack.c.l.b16 %v3917
      %v3970 = vunpack.c.h.b16 %v3917
      %v3971 = vunpack.c.h.b16 %v3918
      %v3972 = vunpack.c.l.b16 %v3919
      %v3973 = vunpack.c.l.b16 %v3920
      %v3974 = vunpack.c.h.b16 %v3920
      %v3975 = vunpack.c.h.b16 %v3921
      %v3976 = vunpack.c.l.b16 %v3922
      %v3977 = vunpack.c.l.b16 %v3923
      %v3978 = vunpack.c.h.b16 %v3923
      %v3979 = vunpack.c.h.b16 %v3924
      %v3980 = vunpack.c.l.b16 %v3925
      %v3981 = vunpack.c.l.b16 %v3926
      %v3982 = vunpack.c.h.b16 %v3926
      %v3983 = vunpack.c.h.b16 %v3927
      %v3984 = vunpack.c.l.b16 %v3928
      %v3985 = vld [vmem:[%s3] sm:$0x3]
      %v3986 = vld [vmem:[%s6] sm:$0x1]
      %v3988 = vlaneseq
      %v3989 = vshrl.u32 %v3988, 7
      %v3990 = vsub.s32 0, %v3989
      %v3991 = vrot.slane %v3986, %v3990
      %v3993 = vpack.c.b16 %v3954, %v3953
      %v3994 = vpack.c.b16 %v3956, %v3955
      %v3995 = vpack.c.b16 %v3958, %v3957
      %v3996 = vpack.c.b16 %v3960, %v3959
      %v3997 = vpack.c.b16 %v3962, %v3961
      %v3998 = vpack.c.b16 %v3964, %v3963
      %v3999 = vpack.c.b16 %v3966, %v3965
      %v4000 = vpack.c.b16 %v3968, %v3967
      %v4001 = vpack.c.b16 %v3970, %v3969
      %v4002 = vpack.c.b16 %v3972, %v3971
      %v4003 = vpack.c.b16 %v3974, %v3973
      %v4004 = vpack.c.b16 %v3976, %v3975
      %v4005 = vpack.c.b16 %v3978, %v3977
      %v4006 = vpack.c.b16 %v3980, %v3979
      %v4007 = vpack.c.b16 %v3982, %v3981
      %v4008 = vpack.c.b16 %v3984, %v3983
      %vm4009 = vcmask 31744
      %v4011 = vsel %vm4009, %v3993, 0
      %v4014 = vsel %vm4009, %v3994, 0
      %v4017 = vsel %vm4009, %v3995, 0
      %v4020 = vsel %vm4009, %v3996, 0
      %v4023 = vsel %vm4009, %v3997, 0
      %v4026 = vsel %vm4009, %v3998, 0
      %v4029 = vsel %vm4009, %v3999, 0
      %v4032 = vsel %vm4009, %v4000, 0
      %v4035 = vsel %vm4009, %v4001, 0
      %v4038 = vsel %vm4009, %v4002, 0
      %v4041 = vsel %vm4009, %v4003, 0
      %v4044 = vsel %vm4009, %v4004, 0
      %v4047 = vsel %vm4009, %v4005, 0
      %v4050 = vsel %vm4009, %v4006, 0
      %v4053 = vsel %vm4009, %v4007, 0
      %v4056 = vsel %vm4009, %v4008, 0
      %v4059 = vsel %vm3628, %v3985, 0
      %4061 = vmatprep.subr.bf16.mxu0 0
      %4062 = vmatpush1.bf16.msra.mxu0 0
      %4063 = vmatprep.subr.bf16.mxu0 0
      %4064 = vmatpush1.bf16.msra.mxu0 0
      %4065 = vmatprep.subr.bf16.mxu0 0
      %4066 = vmatpush1.bf16.msra.mxu0 0
      %4067 = vmatprep.subr.bf16.mxu0 0
      %4068 = vmatpush1.bf16.msra.mxu0 0
      %4069 = vmatprep.subr.bf16.mxu0 0
      %4070 = vmatpush1.bf16.msra.mxu0 0
      %4071 = vmatprep.subr.bf16.mxu0 0
      %4072 = vmatpush1.bf16.msra.mxu0 0
      %4073 = vmatprep.subr.bf16.mxu0 0
      %4074 = vmatpush1.bf16.msra.mxu0 0
      %4075 = vmatprep.subr.bf16.mxu0 0
      %4076 = vmatpush1.bf16.msra.mxu0 %v4059
      %4077 = vmatprep.subr.bf16.mxu0 0
      %4078 = vmatpush2.bf16.msra.mxu0 0
      %4079 = vmatprep.subr.bf16.mxu0 0
      %4080 = vmatpush2.bf16.msra.mxu0 0
      %4081 = vmatprep.subr.bf16.mxu0 0
      %4082 = vmatpush2.bf16.msra.mxu0 0
      %4083 = vmatprep.subr.bf16.mxu0 0
      %4084 = vmatpush2.bf16.msra.mxu0 0
      %4085 = vmatprep.subr.bf16.mxu0 0
      %4086 = vmatpush2.bf16.msra.mxu0 0
      %4087 = vmatprep.subr.bf16.mxu0 0
      %4088 = vmatpush2.bf16.msra.mxu0 0
      %4089 = vmatprep.subr.bf16.mxu0 0
      %4090 = vmatpush2.bf16.msra.mxu0 0
      %4091 = vmatprep.subr.bf16.mxu0 0
      %4092 = vmatpush2.bf16.msra.mxu0 0
      %4093 = vmatprep.mubr.bf16.mxu0 0
      %4094 = vmatmul.mubr.bf16.gmra.mxu0 %v4011
      %v4095 = vpop.f32.mrf.mxu0
      %v4096 = vadd.f32 %v3991, %v4095
      %v4097 = vpop.f32.mrf.mxu0
      %v4098 = vpop.f32.mrf.mxu0
      %v4099 = vadd.f32 %v3991, %v4098
      %v4100 = vpop.f32.mrf.mxu0
      %4101 = vmatprep.mubr.bf16.mxu0 0
      %4102 = vmatmul.mubr.bf16.gmra.mxu0 %v4014
      %v4103 = vpop.f32.mrf.mxu0
      %v4104 = vadd.f32 %v3991, %v4103
      %v4105 = vpop.f32.mrf.mxu0
      %v4106 = vpop.f32.mrf.mxu0
      %v4107 = vadd.f32 %v3991, %v4106
      %v4108 = vpop.f32.mrf.mxu0
      %4109 = vmatprep.mubr.bf16.mxu0 0
      %4110 = vmatmul.mubr.bf16.gmra.mxu0 %v4017
      %v4111 = vpop.f32.mrf.mxu0
      %v4112 = vadd.f32 %v3991, %v4111
      %v4113 = vpop.f32.mrf.mxu0
      %v4114 = vpop.f32.mrf.mxu0
      %v4115 = vadd.f32 %v3991, %v4114
      %v4116 = vpop.f32.mrf.mxu0
      %4117 = vmatprep.mubr.bf16.mxu0 0
      %4118 = vmatmul.mubr.bf16.gmra.mxu0 %v4020
      %v4119 = vpop.f32.mrf.mxu0
      %v4120 = vadd.f32 %v3991, %v4119
      %v4121 = vpop.f32.mrf.mxu0
      %v4122 = vpop.f32.mrf.mxu0
      %v4123 = vadd.f32 %v3991, %v4122
      %v4124 = vpop.f32.mrf.mxu0
      %4125 = vmatprep.mubr.bf16.mxu0 0
      %4126 = vmatmul.mubr.bf16.gmra.mxu0 %v4023
      %v4127 = vpop.f32.mrf.mxu0
      %v4128 = vadd.f32 %v3991, %v4127
      %v4129 = vpop.f32.mrf.mxu0
      %v4130 = vpop.f32.mrf.mxu0
      %v4131 = vadd.f32 %v3991, %v4130
      %v4132 = vpop.f32.mrf.mxu0
      %4133 = vmatprep.mubr.bf16.mxu0 0
      %4134 = vmatmul.mubr.bf16.gmra.mxu0 %v4026
      %v4135 = vpop.f32.mrf.mxu0
      %v4136 = vadd.f32 %v3991, %v4135
      %v4137 = vpop.f32.mrf.mxu0
      %v4138 = vpop.f32.mrf.mxu0
      %v4139 = vadd.f32 %v3991, %v4138
      %v4140 = vpop.f32.mrf.mxu0
      %4141 = vmatprep.mubr.bf16.mxu0 0
      %4142 = vmatmul.mubr.bf16.gmra.mxu0 %v4029
      %v4143 = vpop.f32.mrf.mxu0
      %v4144 = vadd.f32 %v3991, %v4143
      %v4145 = vpop.f32.mrf.mxu0
      %v4146 = vpop.f32.mrf.mxu0
      %v4147 = vadd.f32 %v3991, %v4146
      %v4148 = vpop.f32.mrf.mxu0
      %4149 = vmatprep.mubr.bf16.mxu0 0
      %4150 = vmatmul.mubr.bf16.gmra.mxu0 %v4032
      %v4151 = vpop.f32.mrf.mxu0
      %v4152 = vadd.f32 %v3991, %v4151
      %v4153 = vpop.f32.mrf.mxu0
      %v4154 = vpop.f32.mrf.mxu0
      %v4155 = vadd.f32 %v3991, %v4154
      %v4156 = vpop.f32.mrf.mxu0
      %4157 = vmatprep.mubr.bf16.mxu0 0
      %4158 = vmatmul.mubr.bf16.gmra.mxu0 %v4035
      %v4159 = vpop.f32.mrf.mxu0
      %v4160 = vadd.f32 %v3991, %v4159
      %v4161 = vpop.f32.mrf.mxu0
      %v4162 = vpop.f32.mrf.mxu0
      %v4163 = vadd.f32 %v3991, %v4162
      %v4164 = vpop.f32.mrf.mxu0
      %4165 = vmatprep.mubr.bf16.mxu0 0
      %4166 = vmatmul.mubr.bf16.gmra.mxu0 %v4038
      %v4167 = vpop.f32.mrf.mxu0
      %v4168 = vadd.f32 %v3991, %v4167
      %v4169 = vpop.f32.mrf.mxu0
      %v4170 = vpop.f32.mrf.mxu0
      %v4171 = vadd.f32 %v3991, %v4170
      %v4172 = vpop.f32.mrf.mxu0
      %4173 = vmatprep.mubr.bf16.mxu0 0
      %4174 = vmatmul.mubr.bf16.gmra.mxu0 %v4041
      %v4175 = vpop.f32.mrf.mxu0
      %v4176 = vadd.f32 %v3991, %v4175
      %v4177 = vpop.f32.mrf.mxu0
      %v4178 = vpop.f32.mrf.mxu0
      %v4179 = vadd.f32 %v3991, %v4178
      %v4180 = vpop.f32.mrf.mxu0
      %4181 = vmatprep.mubr.bf16.mxu0 0
      %4182 = vmatmul.mubr.bf16.gmra.mxu0 %v4044
      %v4183 = vpop.f32.mrf.mxu0
      %v4184 = vadd.f32 %v3991, %v4183
      %v4185 = vpop.f32.mrf.mxu0
      %v4186 = vpop.f32.mrf.mxu0
      %v4187 = vadd.f32 %v3991, %v4186
      %v4188 = vpop.f32.mrf.mxu0
      %4189 = vmatprep.mubr.bf16.mxu0 0
      %4190 = vmatmul.mubr.bf16.gmra.mxu0 %v4047
      %v4191 = vpop.f32.mrf.mxu0
      %v4192 = vadd.f32 %v3991, %v4191
      %v4193 = vpop.f32.mrf.mxu0
      %v4194 = vpop.f32.mrf.mxu0
      %v4195 = vadd.f32 %v3991, %v4194
      %v4196 = vpop.f32.mrf.mxu0
      %4197 = vmatprep.mubr.bf16.mxu0 0
      %4198 = vmatmul.mubr.bf16.gmra.mxu0 %v4050
      %v4199 = vpop.f32.mrf.mxu0
      %v4200 = vadd.f32 %v3991, %v4199
      %v4201 = vpop.f32.mrf.mxu0
      %v4202 = vpop.f32.mrf.mxu0
      %v4203 = vadd.f32 %v3991, %v4202
      %v4204 = vpop.f32.mrf.mxu0
      %4205 = vmatprep.mubr.bf16.mxu0 0
      %4206 = vmatmul.mubr.bf16.gmra.mxu0 %v4053
      %v4207 = vpop.f32.mrf.mxu0
      %v4208 = vadd.f32 %v3991, %v4207
      %v4209 = vpop.f32.mrf.mxu0
      %v4210 = vpop.f32.mrf.mxu0
      %v4211 = vadd.f32 %v3991, %v4210
      %v4212 = vpop.f32.mrf.mxu0
      %4213 = vmatprep.mubr.bf16.mxu0 0
      %4214 = vmatmul.mubr.bf16.gmra.mxu0 %v4056
      %v4215 = vpop.f32.mrf.mxu0
      %v4216 = vadd.f32 %v3991, %v4215
      %v4217 = vpop.f32.mrf.mxu0
      %v4218 = vpop.f32.mrf.mxu0
      %v4219 = vadd.f32 %v3991, %v4218
      %v4220 = vpop.f32.mrf.mxu0
      %4221 = vdwg.mxu0
      %v4222 = vunpack.c.l.bf16 %v280
      %v4223 = vunpack.c.l.bf16 %v281
      %v4224 = vunpack.c.l.bf16 %v282
      %v4225 = vunpack.c.l.bf16 %v283
      %v4226 = vunpack.c.l.bf16 %v284
      %v4227 = vunpack.c.l.bf16 %v285
      %v4228 = vunpack.c.l.bf16 %v286
      %v4229 = vunpack.c.l.bf16 %v287
      %v4230 = vunpack.c.l.bf16 %v288
      %v4231 = vunpack.c.l.bf16 %v289
      %v4232 = vunpack.c.l.bf16 %v290
      %v4233 = vunpack.c.l.bf16 %v291
      %v4234 = vunpack.c.l.bf16 %v292
      %v4235 = vunpack.c.l.bf16 %v293
      %v4236 = vunpack.c.l.bf16 %v294
      %v4237 = vunpack.c.l.bf16 %v295
      %v4238 = vunpack.c.l.bf16 %v296
      %v4239 = vunpack.c.l.bf16 %v297
      %v4240 = vunpack.c.l.bf16 %v298
      %v4241 = vunpack.c.l.bf16 %v299
      %v4242 = vunpack.c.l.bf16 %v300
      %v4243 = vunpack.c.l.bf16 %v301
      %v4244 = vunpack.c.l.bf16 %v302
      %v4245 = vunpack.c.l.bf16 %v303
      %v4246 = vunpack.c.l.bf16 %v304
      %v4247 = vunpack.c.l.bf16 %v305
      %v4248 = vunpack.c.l.bf16 %v306
      %v4249 = vunpack.c.l.bf16 %v307
      %v4250 = vunpack.c.l.bf16 %v308
      %v4251 = vunpack.c.l.bf16 %v309
      %v4252 = vunpack.c.l.bf16 %v310
      %v4253 = vunpack.c.l.bf16 %v311
      %v4254 = vadd.f32 %v4096, %v4222
      %v4255 = vadd.f32 %v4099, %v4223
      %v4256 = vadd.f32 %v4104, %v4224
      %v4257 = vadd.f32 %v4107, %v4225
      %v4258 = vadd.f32 %v4112, %v4226
      %v4259 = vadd.f32 %v4115, %v4227
      %v4260 = vadd.f32 %v4120, %v4228
      %v4261 = vadd.f32 %v4123, %v4229
      %v4262 = vadd.f32 %v4128, %v4230
      %v4263 = vadd.f32 %v4131, %v4231
      %v4264 = vadd.f32 %v4136, %v4232
      %v4265 = vadd.f32 %v4139, %v4233
      %v4266 = vadd.f32 %v4144, %v4234
      %v4267 = vadd.f32 %v4147, %v4235
      %v4268 = vadd.f32 %v4152, %v4236
      %v4269 = vadd.f32 %v4155, %v4237
      %v4270 = vadd.f32 %v4160, %v4238
      %v4271 = vadd.f32 %v4163, %v4239
      %v4272 = vadd.f32 %v4168, %v4240
      %v4273 = vadd.f32 %v4171, %v4241
      %v4274 = vadd.f32 %v4176, %v4242
      %v4275 = vadd.f32 %v4179, %v4243
      %v4276 = vadd.f32 %v4184, %v4244
      %v4277 = vadd.f32 %v4187, %v4245
      %v4278 = vadd.f32 %v4192, %v4246
      %v4279 = vadd.f32 %v4195, %v4247
      %v4280 = vadd.f32 %v4200, %v4248
      %v4281 = vadd.f32 %v4203, %v4249
      %v4282 = vadd.f32 %v4208, %v4250
      %v4283 = vadd.f32 %v4211, %v4251
      %v4284 = vadd.f32 %v4216, %v4252
      %v4285 = vadd.f32 %v4219, %v4253
      %v4286 = vmax.f32 %v4254, 0.0
      %v4287 = vmax.f32 %v4255, 0.0
      %v4288 = vmax.f32 %v4256, 0.0
      %v4289 = vmax.f32 %v4257, 0.0
      %v4290 = vmax.f32 %v4258, 0.0
      %v4291 = vmax.f32 %v4259, 0.0
      %v4292 = vmax.f32 %v4260, 0.0
      %v4293 = vmax.f32 %v4261, 0.0
      %v4294 = vmax.f32 %v4262, 0.0
      %v4295 = vmax.f32 %v4263, 0.0
      %v4296 = vmax.f32 %v4264, 0.0
      %v4297 = vmax.f32 %v4265, 0.0
      %v4298 = vmax.f32 %v4266, 0.0
      %v4299 = vmax.f32 %v4267, 0.0
      %v4300 = vmax.f32 %v4268, 0.0
      %v4301 = vmax.f32 %v4269, 0.0
      %v4302 = vmax.f32 %v4270, 0.0
      %v4303 = vmax.f32 %v4271, 0.0
      %v4304 = vmax.f32 %v4272, 0.0
      %v4305 = vmax.f32 %v4273, 0.0
      %v4306 = vmax.f32 %v4274, 0.0
      %v4307 = vmax.f32 %v4275, 0.0
      %v4308 = vmax.f32 %v4276, 0.0
      %v4309 = vmax.f32 %v4277, 0.0
      %v4310 = vmax.f32 %v4278, 0.0
      %v4311 = vmax.f32 %v4279, 0.0
      %v4312 = vmax.f32 %v4280, 0.0
      %v4313 = vmax.f32 %v4281, 0.0
      %v4314 = vmax.f32 %v4282, 0.0
      %v4315 = vmax.f32 %v4283, 0.0
      %v4316 = vmax.f32 %v4284, 0.0
      %v4317 = vmax.f32 %v4285, 0.0
      %v4318 = vpack.c.bf16 %v4287, %v4286
      %v4319 = vpack.c.bf16 %v4289, %v4288
      %v4320 = vpack.c.bf16 %v4291, %v4290
      %v4321 = vpack.c.bf16 %v4293, %v4292
      %v4322 = vpack.c.bf16 %v4295, %v4294
      %v4323 = vpack.c.bf16 %v4297, %v4296
      %v4324 = vpack.c.bf16 %v4299, %v4298
      %v4325 = vpack.c.bf16 %v4301, %v4300
      %v4326 = vpack.c.bf16 %v4303, %v4302
      %v4327 = vpack.c.bf16 %v4305, %v4304
      %v4328 = vpack.c.bf16 %v4307, %v4306
      %v4329 = vpack.c.bf16 %v4309, %v4308
      %v4330 = vpack.c.bf16 %v4311, %v4310
      %v4331 = vpack.c.bf16 %v4313, %v4312
      %v4332 = vpack.c.bf16 %v4315, %v4314
      %v4333 = vpack.c.bf16 %v4317, %v4316
      %v4350 = vunpack.c.l.b16 %v4318
      %v4351 = vunpack.c.h.b16 %v4318
      %v4352 = vunpack.c.l.b16 %v4319
      %v4353 = vunpack.c.h.b16 %v4319
      %v4354 = vunpack.c.l.b16 %v4320
      %v4355 = vunpack.c.h.b16 %v4320
      %v4356 = vunpack.c.l.b16 %v4321
      %v4357 = vunpack.c.h.b16 %v4321
      %v4358 = vunpack.c.l.b16 %v4322
      %v4359 = vunpack.c.h.b16 %v4322
      %v4360 = vunpack.c.l.b16 %v4323
      %v4361 = vunpack.c.h.b16 %v4323
      %v4362 = vunpack.c.l.b16 %v4324
      %v4363 = vunpack.c.h.b16 %v4324
      %v4364 = vunpack.c.l.b16 %v4325
      %v4365 = vunpack.c.h.b16 %v4325
      %v4366 = vunpack.c.l.b16 %v4326
      %v4367 = vunpack.c.h.b16 %v4326
      %v4368 = vunpack.c.l.b16 %v4327
      %v4369 = vunpack.c.h.b16 %v4327
      %v4370 = vunpack.c.l.b16 %v4328
      %v4371 = vunpack.c.h.b16 %v4328
      %v4372 = vunpack.c.l.b16 %v4329
      %v4373 = vunpack.c.h.b16 %v4329
      %v4374 = vunpack.c.l.b16 %v4330
      %v4375 = vunpack.c.h.b16 %v4330
      %v4376 = vunpack.c.l.b16 %v4331
      %v4377 = vunpack.c.h.b16 %v4331
      %v4378 = vunpack.c.l.b16 %v4332
      %v4379 = vunpack.c.h.b16 %v4332
      %v4380 = vunpack.c.l.b16 %v4333
      %v4381 = vunpack.c.h.b16 %v4333
      %v4382 = vpack.c.b16 %v4350, %v4350
      %v4383 = vpack.c.b16 %v4351, %v4351
      %v4384 = vpack.c.b16 %v4352, %v4352
      %v4385 = vpack.c.b16 %v4353, %v4353
      %v4386 = vpack.c.b16 %v4354, %v4354
      %v4387 = vpack.c.b16 %v4355, %v4355
      %v4388 = vpack.c.b16 %v4356, %v4356
      %v4389 = vpack.c.b16 %v4357, %v4357
      %v4390 = vpack.c.b16 %v4358, %v4358
      %v4391 = vpack.c.b16 %v4359, %v4359
      %v4392 = vpack.c.b16 %v4360, %v4360
      %v4393 = vpack.c.b16 %v4361, %v4361
      %v4394 = vpack.c.b16 %v4362, %v4362
      %v4395 = vpack.c.b16 %v4363, %v4363
      %v4396 = vpack.c.b16 %v4364, %v4364
      %v4397 = vpack.c.b16 %v4365, %v4365
      %v4398 = vpack.c.b16 %v4366, %v4366
      %v4399 = vpack.c.b16 %v4367, %v4367
      %v4400 = vpack.c.b16 %v4368, %v4368
      %v4401 = vpack.c.b16 %v4369, %v4369
      %v4402 = vpack.c.b16 %v4370, %v4370
      %v4403 = vpack.c.b16 %v4371, %v4371
      %v4404 = vpack.c.b16 %v4372, %v4372
      %v4405 = vpack.c.b16 %v4373, %v4373
      %v4406 = vpack.c.b16 %v4374, %v4374
      %v4407 = vpack.c.b16 %v4375, %v4375
      %v4408 = vpack.c.b16 %v4376, %v4376
      %v4409 = vpack.c.b16 %v4377, %v4377
      %v4410 = vpack.c.b16 %v4378, %v4378
      %v4411 = vpack.c.b16 %v4379, %v4379
      %v4412 = vpack.c.b16 %v4380, %v4380
      %v4413 = vpack.c.b16 %v4381, %v4381
      %vm4446 = vcmask 125952
      %4447 = vst.msk [vmem:[%s278] sm:$0xf] %vm4446, %v4382
      %4448 = vst.msk [vmem:[%s278 + $0x4] sm:$0xf] %vm4446, %v4383
      %4449 = vst.msk [vmem:[%s278 + $0x8] sm:$0xf] %vm4446, %v4384
      %4450 = vst.msk [vmem:[%s278 + $0xc] sm:$0xf] %vm4446, %v4385
      %4451 = vst.msk [vmem:[%s278 + $0x10] sm:$0xf] %vm4446, %v4386
      %4452 = vst.msk [vmem:[%s278 + $0x14] sm:$0xf] %vm4446, %v4387
      %4453 = vst.msk [vmem:[%s278 + $0x18] sm:$0xf] %vm4446, %v4388
      %4454 = vst.msk [vmem:[%s278 + $0x1c] sm:$0xf] %vm4446, %v4389
      %4455 = vst.msk [vmem:[%s278 + $0x20] sm:$0xf] %vm4446, %v4390
      %4456 = vst.msk [vmem:[%s278 + $0x24] sm:$0xf] %vm4446, %v4391
      %4457 = vst.msk [vmem:[%s278 + $0x28] sm:$0xf] %vm4446, %v4392
      %4458 = vst.msk [vmem:[%s278 + $0x2c] sm:$0xf] %vm4446, %v4393
      %4459 = vst.msk [vmem:[%s278 + $0x30] sm:$0xf] %vm4446, %v4394
      %4460 = vst.msk [vmem:[%s278 + $0x34] sm:$0xf] %vm4446, %v4395
      %4461 = vst.msk [vmem:[%s278 + $0x38] sm:$0xf] %vm4446, %v4396
      %4462 = vst.msk [vmem:[%s278 + $0x3c] sm:$0xf] %vm4446, %v4397
      %4463 = vst.msk [vmem:[%s278 + $0x40] sm:$0xf] %vm4446, %v4398
      %4464 = vst.msk [vmem:[%s278 + $0x44] sm:$0xf] %vm4446, %v4399
      %4465 = vst.msk [vmem:[%s278 + $0x48] sm:$0xf] %vm4446, %v4400
      %4466 = vst.msk [vmem:[%s278 + $0x4c] sm:$0xf] %vm4446, %v4401
      %4467 = vst.msk [vmem:[%s278 + $0x50] sm:$0xf] %vm4446, %v4402
      %4468 = vst.msk [vmem:[%s278 + $0x54] sm:$0xf] %vm4446, %v4403
      %4469 = vst.msk [vmem:[%s278 + $0x58] sm:$0xf] %vm4446, %v4404
      %4470 = vst.msk [vmem:[%s278 + $0x5c] sm:$0xf] %vm4446, %v4405
      %4471 = vst.msk [vmem:[%s278 + $0x60] sm:$0xf] %vm4446, %v4406
      %4472 = vst.msk [vmem:[%s278 + $0x64] sm:$0xf] %vm4446, %v4407
      %4473 = vst.msk [vmem:[%s278 + $0x68] sm:$0xf] %vm4446, %v4408
      %4474 = vst.msk [vmem:[%s278 + $0x6c] sm:$0xf] %vm4446, %v4409
      %4475 = vst.msk [vmem:[%s278 + $0x70] sm:$0xf] %vm4446, %v4410
      %4476 = vst.msk [vmem:[%s278 + $0x74] sm:$0xf] %vm4446, %v4411
      %4477 = vst.msk [vmem:[%s278 + $0x78] sm:$0xf] %vm4446, %v4412
      %4478 = vst.msk [vmem:[%s278 + $0x7c] sm:$0xf] %vm4446, %v4413
      %p4479 = scmp.lt.s32.totalorder %s18, 1
      %s4480 = scalar_select %p4479, %s18, 1
      %s4481 = smul.addr %s4480, 32
      %s4482 = smul.addr %s4481, 4
      %s4483 = scalar_lea.vmem %s7, %s4482
      // Predicated region
      $region49: #{qsam_bottleneck_forward.1} parent=47 // pred_check
        %p4484 = pneg %p188
      $region50: #{qsam_bottleneck_forward.1} parent=47 // pred_check_branch
        %4486 = sbr.rel (%p4484) target = $region52
      $region51: #{qsam_bottleneck_forward.1} parent=47 // pred_region
        _
      $region52: #{qsam_bottleneck_forward.1} parent=47 // pred_fallthru
        _
    $region48: #{qsam_bottleneck_forward.1} parent=5 // pred_fallthru
      _
    %p4487 = scmp.le.s32.totalorder 2, %s13
    // Predicated region
    $region53: #{qsam_bottleneck_forward.1} parent=5 // pred_check
      %p4488 = pneg %p4487
    $region54: #{qsam_bottleneck_forward.1} parent=5 // pred_check_branch
      %4490 = sbr.rel (%p4488) target = $region56
    $region55: #{qsam_bottleneck_forward.1} parent=5 // pred_region
      %s4491 = ssub.s32 %s13, 2
      // Predicated region
      $region57: #{qsam_bottleneck_forward.1} parent=55 // pred_check
        %p4492 = pneg %p194
      $region58: #{qsam_bottleneck_forward.1} parent=55 // pred_check_branch
        %4494 = sbr.rel (%p4492) target = $region60
      $region59: #{qsam_bottleneck_forward.1} parent=55 // pred_region
        %p4495 = scmp.lt.s32.totalorder %s19, 1
        %s4496 = scalar_select %p4495, %s19, 1
        %s4497 = smul.addr %s4496, 32
        %s4498 = smul.addr %s4497, 4
        %s4499 = scalar_lea.vmem %s7, %s4498
      $region60: #{qsam_bottleneck_forward.1} parent=55 // pred_fallthru
        _
    $region56: #{qsam_bottleneck_forward.1} parent=5 // pred_fallthru
      _
  $region6: #{qsam_bottleneck_forward.1} parent=0 // loop_footer
    %s17 = sadd.s32 1, %s13
  $region7: #{qsam_bottleneck_forward.1} parent=0 // loop_footer_branch
    %12 = sbr.rel target = $region3
  $region8: #{qsam_bottleneck_forward.1} parent=0 // loop_exit
    _

</llo_original>
